<compile_context>
chip_gen: v7x
topology: tpu7x:2x2x1
jax: 0.10.0
libtpu: 0.0.40
codegen_flags: <defaults>
</compile_context>

<pallas_src>
import functools

import jax
import jax.numpy as jnp
from jax import lax
from jax.experimental import pallas as pl
from jax.experimental.pallas import tpu as pltpu

INPUT_SIZE = 1
HIDDEN_SIZE = 50
OUTPUT_SIZE = 1

HP = 128                    # hidden padded to one full lane tile per gate
G = 4 * HP                  # fused gate width, kernel gate order: i, f, o, g
_GATE_PERM = (0, 1, 3, 2)   # kernel gate block -> PyTorch gate index (i, f, g, o)


def _lstm_fc_kernel(x_ref, h0_ref, c0_ref, wih_ref, whh_ref, b_ref,
                    wfc_ref, bfc_ref, out_ref, hn_ref, cn_ref,
                    gx_scr, h_all_scr):
    """Whole-sequence LSTM recurrence + deferred Linear + tanh, fully in VMEM."""
    T = x_ref.shape[0]

    # (1) Hoisted input projection: I == 1, so x_t @ W_ih is a broadcast
    #     multiply (pure VPU). Compute all T steps + combined bias once,
    #     off the serial recurrence.
    gx_scr[...] = x_ref[...] * wih_ref[...] + b_ref[...]          # (T, B, G)

    # (2) Running state lives directly in the output refs.
    hn_ref[...] = h0_ref[...]
    cn_ref[...] = c0_ref[...]

    def step(t, carry):
        h = hn_ref[...]                                           # (B, HP)
        c = cn_ref[...]                                           # (B, HP)
        # (3) One fused MXU matmul for all four gates; gate blocks sit at
        #     lane offsets 0/128/256/384 so the slices below are aligned.
        gates = gx_scr[t] + jnp.dot(h, whh_ref[...],
                                    preferred_element_type=jnp.float32)
        # (4) Two EUP pushes per step: sigmoid on the contiguous (i,f,o)
        #     slab, tanh on g.
        ifo = jax.nn.sigmoid(gates[:, :3 * HP])
        g_g = jnp.tanh(gates[:, 3 * HP:])
        i_g = ifo[:, :HP]
        f_g = ifo[:, HP:2 * HP]
        o_g = ifo[:, 2 * HP:]
        c_new = f_g * c + i_g * g_g
        h_new = o_g * jnp.tanh(c_new)
        cn_ref[...] = c_new
        hn_ref[...] = h_new
        h_all_scr[t] = h_new         # FC is deferred out of the recurrence
        return carry

    # (5) Short static trip count: fully unroll for cross-step scheduling.
    lax.fori_loop(0, T, step, 0, unroll=True)

    # (6) Deferred Linear + tanh over the whole sequence at once. O == 1, so
    #     use a VPU multiply + lane reduce instead of an N=1 MXU matmul.
    out_ref[...] = jnp.tanh(
        jnp.sum(h_all_scr[...] * wfc_ref[...], axis=-1, keepdims=True)
        + bfc_ref[...]
    ).astype(out_ref.dtype)


def pack_params(params):
    """One-time repack of PyTorch-layout LSTM/FC parameters into the kernel
    layout (kept outside the jitted forward)."""
    w_ih, w_hh, b_ih, b_hh, w_fc, b_fc = params
    H = w_hh.shape[1]
    I = w_ih.shape[1]
    O = w_fc.shape[0]
    # TODO(synk): kernel assumes input_size == 1 (VPU input projection) and
    # output_size == 1 (lane-reduce FC), matching the module spec.
    assert I == 1 and O == 1 and H <= HP

    b_sum = b_ih + b_hh
    wih_p = jnp.zeros((G,), jnp.float32)
    b_p = jnp.zeros((G,), jnp.float32)
    whh_p = jnp.zeros((HP, G), jnp.float32)
    for nk, pk in enumerate(_GATE_PERM):
        rows = slice(pk * H, (pk + 1) * H)
        col0 = nk * HP
        wih_p = wih_p.at[col0:col0 + H].set(w_ih[rows, 0])
        b_p = b_p.at[col0:col0 + H].set(b_sum[rows])
        whh_p = whh_p.at[:H, col0:col0 + H].set(w_hh[rows, :].T)
    wfc_p = jnp.zeros((HP,), jnp.float32).at[:H].set(w_fc[0, :])

    return {
        "wih": wih_p.reshape(1, 1, G),     # (1, 1, 4*HP), zero-padded per gate
        "whh": whh_p,                      # (HP, 4*HP), zero-padded rows/cols
        "b":   b_p.reshape(1, 1, G),       # combined b_ih + b_hh, zero-padded
        "wfc": wfc_p.reshape(1, 1, HP),    # FC row vector, zero-padded
        "bfc": b_fc.reshape(1, 1, O),
    }


def simple_rnn_forward(x, hidden, packed):
    """x: (B, T, I) float32 (batch_first). hidden = (h0, c0), each (1, B, H).
    packed = pack_params(pytorch_params).
    Returns (out (B, T, O), (h_n (1,B,H), c_n (1,B,H)))."""
    B, T, _ = x.shape
    H = hidden[0].shape[-1]
    O = packed["bfc"].shape[-1]

    x_tbi = jnp.transpose(x, (1, 0, 2))                      # (T, B, I)
    h0 = jnp.pad(hidden[0][0], ((0, 0), (0, HP - H)))        # (B, HP), zero pad
    c0 = jnp.pad(hidden[1][0], ((0, 0), (0, HP - H)))        # (B, HP)

    vmem = functools.partial(pl.BlockSpec, memory_space=pltpu.MemorySpace.VMEM)

    out_tbo, hn_p, cn_p = pl.pallas_call(
        _lstm_fc_kernel,
        out_shape=(
            jax.ShapeDtypeStruct((T, B, O), jnp.float32),
            jax.ShapeDtypeStruct((B, HP), jnp.float32),
            jax.ShapeDtypeStruct((B, HP), jnp.float32),
        ),
        in_specs=[vmem()] * 8,
        out_specs=(vmem(), vmem(), vmem()),
        scratch_shapes=[pltpu.VMEM((T, B, G), jnp.float32),    # gates_x
                        pltpu.VMEM((T, B, HP), jnp.float32)],  # all h_t
    )(x_tbi, h0, c0, packed["wih"], packed["whh"], packed["b"],
      packed["wfc"], packed["bfc"])

    out = jnp.transpose(out_tbo, (1, 0, 2))                  # (B, T, O)
    return out, (hn_p[:, :H][None], cn_p[:, :H][None])


def _ref_forward(x, hidden, params):
    """Pure-JAX reference mirroring torch.nn.LSTM + Linear + tanh."""
    w_ih, w_hh, b_ih, b_hh, w_fc, b_fc = params
    h, c = hidden[0][0], hidden[1][0]
    H = h.shape[1]
    outs = []
    for t in range(x.shape[1]):
        gates = x[:, t, :] @ w_ih.T + h @ w_hh.T + b_ih + b_hh
        i = jax.nn.sigmoid(gates[:, 0:H])
        f = jax.nn.sigmoid(gates[:, H:2 * H])
        g = jnp.tanh(gates[:, 2 * H:3 * H])
        o = jax.nn.sigmoid(gates[:, 3 * H:4 * H])
        c = f * c + i * g
        h = o * jnp.tanh(c)
        outs.append(jnp.tanh(h @ w_fc.T + b_fc))
    return jnp.stack(outs, axis=1), (h[None], c[None])


def _init_params(key, input_size, hidden_size, output_size):
    """Deterministic init matching PyTorch parameter shapes (uniform ±1/sqrt(H))."""
    ks = jax.random.split(key, 6)
    s = 1.0 / jnp.sqrt(hidden_size)
    w_ih = jax.random.uniform(ks[0], (4 * hidden_size, input_size), jnp.float32, -s, s)
    w_hh = jax.random.uniform(ks[1], (4 * hidden_size, hidden_size), jnp.float32, -s, s)
    b_ih = jax.random.uniform(ks[2], (4 * hidden_size,), jnp.float32, -s, s)
    b_hh = jax.random.uniform(ks[3], (4 * hidden_size,), jnp.float32, -s, s)
    w_fc = jax.random.uniform(ks[4], (output_size, hidden_size), jnp.float32, -s, s)
    b_fc = jax.random.uniform(ks[5], (output_size,), jnp.float32, -s, s)
    return (w_ih, w_hh, b_ih, b_hh, w_fc, b_fc)


if __name__ == "__main__":
    B, T = 16, 8
    key = jax.random.PRNGKey(0)
    k_p, k_x, k_h, k_c = jax.random.split(key, 4)

    params = _init_params(k_p, INPUT_SIZE, HIDDEN_SIZE, OUTPUT_SIZE)
    packed = pack_params(params)        # one-time weight repack, outside jit
    x = jax.random.normal(k_x, (B, T, INPUT_SIZE), jnp.float32)
    h0 = jax.random.normal(k_h, (1, B, HIDDEN_SIZE), jnp.float32)
    c0 = jax.random.normal(k_c, (1, B, HIDDEN_SIZE), jnp.float32)

    fwd = jax.jit(simple_rnn_forward)
    out, (h_n, c_n) = fwd(x, (h0, c0), packed)
    jax.block_until_ready((out, h_n, c_n))

    out_r, (h_r, c_r) = _ref_forward(x, (h0, c0), params)
    assert out.shape == (B, T, OUTPUT_SIZE)
    assert h_n.shape == (1, B, HIDDEN_SIZE) and c_n.shape == (1, B, HIDDEN_SIZE)
    assert jnp.allclose(out, out_r, atol=1e-5, rtol=1e-4)
    assert jnp.allclose(h_n, h_r, atol=1e-5, rtol=1e-4)
    assert jnp.allclose(c_n, c_r, atol=1e-5, rtol=1e-4)

    print("KERNEL_OK")
</pallas_src>

<mosaic_0001>
module attributes {stable_mosaic.version = 11 : i64} {
  func.func @_lstm_fc_kernel(%arg0: memref<8x16x1xf32, #tpu.memory_space<vmem>>, %arg1: memref<16x128xf32, #tpu.memory_space<vmem>>, %arg2: memref<16x128xf32, #tpu.memory_space<vmem>>, %arg3: memref<1x1x512xf32, #tpu.memory_space<vmem>>, %arg4: memref<128x512xf32, #tpu.memory_space<vmem>>, %arg5: memref<1x1x512xf32, #tpu.memory_space<vmem>>, %arg6: memref<1x1x128xf32, #tpu.memory_space<vmem>>, %arg7: memref<1x1x1xf32, #tpu.memory_space<vmem>>, %arg8: memref<8x16x1xf32, #tpu.memory_space<vmem>>, %arg9: memref<16x128xf32, #tpu.memory_space<vmem>>, %arg10: memref<16x128xf32, #tpu.memory_space<vmem>>, %arg11: memref<8x16x512xf32, #tpu.memory_space<vmem>>, %arg12: memref<8x16x128xf32, #tpu.memory_space<vmem>>) attributes {dimension_semantics = [], scalar_prefetch = 0 : i64, scratch_operands = 2 : i64, tpu.core_type = #tpu.core_type<tc>} {
    %c0 = arith.constant 0 : index
    %c0_0 = arith.constant 0 : index
    %c0_1 = arith.constant 0 : index
    %0 = vector.load %arg0[%c0, %c0_0, %c0_1] : memref<8x16x1xf32, #tpu.memory_space<vmem>>, vector<8x16x1xf32>
    %c0_2 = arith.constant 0 : index
    %c0_3 = arith.constant 0 : index
    %c0_4 = arith.constant 0 : index
    %1 = vector.load %arg3[%c0_2, %c0_3, %c0_4] : memref<1x1x512xf32, #tpu.memory_space<vmem>>, vector<1x1x512xf32>
    %2 = vector.broadcast %0 : vector<8x16x1xf32> to vector<8x16x512xf32>
    %3 = vector.broadcast %1 : vector<1x1x512xf32> to vector<8x16x512xf32>
    %4 = arith.mulf %2, %3 : vector<8x16x512xf32>
    %c0_5 = arith.constant 0 : index
    %c0_6 = arith.constant 0 : index
    %c0_7 = arith.constant 0 : index
    %5 = vector.load %arg5[%c0_5, %c0_6, %c0_7] : memref<1x1x512xf32, #tpu.memory_space<vmem>>, vector<1x1x512xf32>
    %6 = vector.broadcast %5 : vector<1x1x512xf32> to vector<8x16x512xf32>
    %7 = arith.addf %4, %6 : vector<8x16x512xf32>
    %c0_8 = arith.constant 0 : index
    %c0_9 = arith.constant 0 : index
    %c0_10 = arith.constant 0 : index
    %8 = vector.load %arg11[%c0_8, %c0_9, %c0_10] : memref<8x16x512xf32, #tpu.memory_space<vmem>>, vector<8x16x512xf32>
    tpu.vector_store %arg11[%c0_8, %c0_9, %c0_10], %7 {strides = array<i32>} : memref<8x16x512xf32, #tpu.memory_space<vmem>>, vector<8x16x512xf32>,
    %c0_11 = arith.constant 0 : index
    %c0_12 = arith.constant 0 : index
    %9 = vector.load %arg1[%c0_11, %c0_12] : memref<16x128xf32, #tpu.memory_space<vmem>>, vector<16x128xf32>
    %c0_13 = arith.constant 0 : index
    %c0_14 = arith.constant 0 : index
    %10 = vector.load %arg9[%c0_13, %c0_14] : memref<16x128xf32, #tpu.memory_space<vmem>>, vector<16x128xf32>
    tpu.vector_store %arg9[%c0_13, %c0_14], %9 {strides = array<i32>} : memref<16x128xf32, #tpu.memory_space<vmem>>, vector<16x128xf32>,
    %c0_15 = arith.constant 0 : index
    %c0_16 = arith.constant 0 : index
    %11 = vector.load %arg2[%c0_15, %c0_16] : memref<16x128xf32, #tpu.memory_space<vmem>>, vector<16x128xf32>
    %c0_17 = arith.constant 0 : index
    %c0_18 = arith.constant 0 : index
    %12 = vector.load %arg10[%c0_17, %c0_18] : memref<16x128xf32, #tpu.memory_space<vmem>>, vector<16x128xf32>
    tpu.vector_store %arg10[%c0_17, %c0_18], %11 {strides = array<i32>} : memref<16x128xf32, #tpu.memory_space<vmem>>, vector<16x128xf32>,
    %c0_i32 = arith.constant 0 : i32
    %c0_19 = arith.constant 0 : index
    %c0_20 = arith.constant 0 : index
    %13 = vector.load %arg9[%c0_19, %c0_20] : memref<16x128xf32, #tpu.memory_space<vmem>>, vector<16x128xf32>
    %c0_21 = arith.constant 0 : index
    %c0_22 = arith.constant 0 : index
    %14 = vector.load %arg10[%c0_21, %c0_22] : memref<16x128xf32, #tpu.memory_space<vmem>>, vector<16x128xf32>
    %15 = arith.index_cast %c0_i32 : i32 to index
    %c0_23 = arith.constant 0 : index
    %c0_24 = arith.constant 0 : index
    %16 = vector.load %arg11[%15, %c0_23, %c0_24] : memref<8x16x512xf32, #tpu.memory_space<vmem>>, vector<1x16x512xf32>
    %17 = vector.shape_cast %16 : vector<1x16x512xf32> to vector<16x512xf32>
    %c0_25 = arith.constant 0 : index
    %c0_26 = arith.constant 0 : index
    %18 = vector.load %arg4[%c0_25, %c0_26] : memref<128x512xf32, #tpu.memory_space<vmem>>, vector<128x512xf32>
    %cst = arith.constant dense<0.000000e+00> : vector<16x512xf32>
    %19 = tpu.matmul %13, %18, %cst {dimension_numbers = #tpu.dot_dimension_numbers<[1], [0], [0], [1], [0, 0, 1, 1], [], []>} : vector<16x128xf32>, vector<128x512xf32>, vector<16x512xf32> -> vector<16x512xf32>
    %20 = arith.addf %17, %19 : vector<16x512xf32>
    %21 = vector.extract_strided_slice %20 {offsets = [0, 0], sizes = [16, 384], strides = [1, 1]} : vector<16x512xf32> to vector<16x384xf32>
    %22 = arith.negf %21 : vector<16x384xf32>
    %23 = math.exp %22 : vector<16x384xf32>
    %cst_27 = arith.constant 1.000000e+00 : f32
    %24 = vector.broadcast %cst_27 : f32 to vector<16x384xf32>
    %25 = arith.addf %24, %23 : vector<16x384xf32>
    %26 = arith.divf %24, %25 : vector<16x384xf32>
    %27 = vector.extract_strided_slice %20 {offsets = [0, 384], sizes = [16, 128], strides = [1, 1]} : vector<16x512xf32> to vector<16x128xf32>
    %28 = math.tanh %27 : vector<16x128xf32>
    %29 = vector.extract_strided_slice %26 {offsets = [0, 0], sizes = [16, 128], strides = [1, 1]} : vector<16x384xf32> to vector<16x128xf32>
    %30 = vector.extract_strided_slice %26 {offsets = [0, 128], sizes = [16, 128], strides = [1, 1]} : vector<16x384xf32> to vector<16x128xf32>
    %31 = vector.extract_strided_slice %26 {offsets = [0, 256], sizes = [16, 128], strides = [1, 1]} : vector<16x384xf32> to vector<16x128xf32>
    %32 = arith.mulf %30, %14 : vector<16x128xf32>
    %33 = arith.mulf %29, %28 : vector<16x128xf32>
    %34 = arith.addf %32, %33 : vector<16x128xf32>
    %35 = math.tanh %34 : vector<16x128xf32>
    %36 = arith.mulf %31, %35 : vector<16x128xf32>
    %c0_28 = arith.constant 0 : index
    %c0_29 = arith.constant 0 : index
    %37 = vector.load %arg10[%c0_28, %c0_29] : memref<16x128xf32, #tpu.memory_space<vmem>>, vector<16x128xf32>
    tpu.vector_store %arg10[%c0_28, %c0_29], %34 {strides = array<i32>} : memref<16x128xf32, #tpu.memory_space<vmem>>, vector<16x128xf32>,
    %c0_30 = arith.constant 0 : index
    %c0_31 = arith.constant 0 : index
    %38 = vector.load %arg9[%c0_30, %c0_31] : memref<16x128xf32, #tpu.memory_space<vmem>>, vector<16x128xf32>
    tpu.vector_store %arg9[%c0_30, %c0_31], %36 {strides = array<i32>} : memref<16x128xf32, #tpu.memory_space<vmem>>, vector<16x128xf32>,
    %39 = arith.index_cast %c0_i32 : i32 to index
    %c0_32 = arith.constant 0 : index
    %c0_33 = arith.constant 0 : index
    %40 = vector.load %arg12[%39, %c0_32, %c0_33] : memref<8x16x128xf32, #tpu.memory_space<vmem>>, vector<1x16x128xf32>
    %41 = vector.shape_cast %40 : vector<1x16x128xf32> to vector<16x128xf32>
    %42 = vector.shape_cast %36 : vector<16x128xf32> to vector<1x16x128xf32>
    tpu.vector_store %arg12[%39, %c0_32, %c0_33], %42 {strides = array<i32>} : memref<8x16x128xf32, #tpu.memory_space<vmem>>, vector<1x16x128xf32>,
    %c1_i32 = arith.constant 1 : i32
    %c0_34 = arith.constant 0 : index
    %c0_35 = arith.constant 0 : index
    %43 = vector.load %arg9[%c0_34, %c0_35] : memref<16x128xf32, #tpu.memory_space<vmem>>, vector<16x128xf32>
    %c0_36 = arith.constant 0 : index
    %c0_37 = arith.constant 0 : index
    %44 = vector.load %arg10[%c0_36, %c0_37] : memref<16x128xf32, #tpu.memory_space<vmem>>, vector<16x128xf32>
    %45 = arith.index_cast %c1_i32 : i32 to index
    %c0_38 = arith.constant 0 : index
    %c0_39 = arith.constant 0 : index
    %46 = vector.load %arg11[%45, %c0_38, %c0_39] : memref<8x16x512xf32, #tpu.memory_space<vmem>>, vector<1x16x512xf32>
    %47 = vector.shape_cast %46 : vector<1x16x512xf32> to vector<16x512xf32>
    %c0_40 = arith.constant 0 : index
    %c0_41 = arith.constant 0 : index
    %48 = vector.load %arg4[%c0_40, %c0_41] : memref<128x512xf32, #tpu.memory_space<vmem>>, vector<128x512xf32>
    %cst_42 = arith.constant dense<0.000000e+00> : vector<16x512xf32>
    %49 = tpu.matmul %43, %48, %cst_42 {dimension_numbers = #tpu.dot_dimension_numbers<[1], [0], [0], [1], [0, 0, 1, 1], [], []>} : vector<16x128xf32>, vector<128x512xf32>, vector<16x512xf32> -> vector<16x512xf32>
    %50 = arith.addf %47, %49 : vector<16x512xf32>
    %51 = vector.extract_strided_slice %50 {offsets = [0, 0], sizes = [16, 384], strides = [1, 1]} : vector<16x512xf32> to vector<16x384xf32>
    %52 = arith.negf %51 : vector<16x384xf32>
    %53 = math.exp %52 : vector<16x384xf32>
    %cst_43 = arith.constant 1.000000e+00 : f32
    %54 = vector.broadcast %cst_43 : f32 to vector<16x384xf32>
    %55 = arith.addf %54, %53 : vector<16x384xf32>
    %56 = arith.divf %54, %55 : vector<16x384xf32>
    %57 = vector.extract_strided_slice %50 {offsets = [0, 384], sizes = [16, 128], strides = [1, 1]} : vector<16x512xf32> to vector<16x128xf32>
    %58 = math.tanh %57 : vector<16x128xf32>
    %59 = vector.extract_strided_slice %56 {offsets = [0, 0], sizes = [16, 128], strides = [1, 1]} : vector<16x384xf32> to vector<16x128xf32>
    %60 = vector.extract_strided_slice %56 {offsets = [0, 128], sizes = [16, 128], strides = [1, 1]} : vector<16x384xf32> to vector<16x128xf32>
    %61 = vector.extract_strided_slice %56 {offsets = [0, 256], sizes = [16, 128], strides = [1, 1]} : vector<16x384xf32> to vector<16x128xf32>
    %62 = arith.mulf %60, %44 : vector<16x128xf32>
    %63 = arith.mulf %59, %58 : vector<16x128xf32>
    %64 = arith.addf %62, %63 : vector<16x128xf32>
    %65 = math.tanh %64 : vector<16x128xf32>
    %66 = arith.mulf %61, %65 : vector<16x128xf32>
    %c0_44 = arith.constant 0 : index
    %c0_45 = arith.constant 0 : index
    %67 = vector.load %arg10[%c0_44, %c0_45] : memref<16x128xf32, #tpu.memory_space<vmem>>, vector<16x128xf32>
    tpu.vector_store %arg10[%c0_44, %c0_45], %64 {strides = array<i32>} : memref<16x128xf32, #tpu.memory_space<vmem>>, vector<16x128xf32>,
    %c0_46 = arith.constant 0 : index
    %c0_47 = arith.constant 0 : index
    %68 = vector.load %arg9[%c0_46, %c0_47] : memref<16x128xf32, #tpu.memory_space<vmem>>, vector<16x128xf32>
    tpu.vector_store %arg9[%c0_46, %c0_47], %66 {strides = array<i32>} : memref<16x128xf32, #tpu.memory_space<vmem>>, vector<16x128xf32>,
    %69 = arith.index_cast %c1_i32 : i32 to index
    %c0_48 = arith.constant 0 : index
    %c0_49 = arith.constant 0 : index
    %70 = vector.load %arg12[%69, %c0_48, %c0_49] : memref<8x16x128xf32, #tpu.memory_space<vmem>>, vector<1x16x128xf32>
    %71 = vector.shape_cast %70 : vector<1x16x128xf32> to vector<16x128xf32>
    %72 = vector.shape_cast %66 : vector<16x128xf32> to vector<1x16x128xf32>
    tpu.vector_store %arg12[%69, %c0_48, %c0_49], %72 {strides = array<i32>} : memref<8x16x128xf32, #tpu.memory_space<vmem>>, vector<1x16x128xf32>,
    %c2_i32 = arith.constant 2 : i32
    %c0_50 = arith.constant 0 : index
    %c0_51 = arith.constant 0 : index
    %73 = vector.load %arg9[%c0_50, %c0_51] : memref<16x128xf32, #tpu.memory_space<vmem>>, vector<16x128xf32>
    %c0_52 = arith.constant 0 : index
    %c0_53 = arith.constant 0 : index
    %74 = vector.load %arg10[%c0_52, %c0_53] : memref<16x128xf32, #tpu.memory_space<vmem>>, vector<16x128xf32>
    %75 = arith.index_cast %c2_i32 : i32 to index
    %c0_54 = arith.constant 0 : index
    %c0_55 = arith.constant 0 : index
    %76 = vector.load %arg11[%75, %c0_54, %c0_55] : memref<8x16x512xf32, #tpu.memory_space<vmem>>, vector<1x16x512xf32>
    %77 = vector.shape_cast %76 : vector<1x16x512xf32> to vector<16x512xf32>
    %c0_56 = arith.constant 0 : index
    %c0_57 = arith.constant 0 : index
    %78 = vector.load %arg4[%c0_56, %c0_57] : memref<128x512xf32, #tpu.memory_space<vmem>>, vector<128x512xf32>
    %cst_58 = arith.constant dense<0.000000e+00> : vector<16x512xf32>
    %79 = tpu.matmul %73, %78, %cst_58 {dimension_numbers = #tpu.dot_dimension_numbers<[1], [0], [0], [1], [0, 0, 1, 1], [], []>} : vector<16x128xf32>, vector<128x512xf32>, vector<16x512xf32> -> vector<16x512xf32>
    %80 = arith.addf %77, %79 : vector<16x512xf32>
    %81 = vector.extract_strided_slice %80 {offsets = [0, 0], sizes = [16, 384], strides = [1, 1]} : vector<16x512xf32> to vector<16x384xf32>
    %82 = arith.negf %81 : vector<16x384xf32>
    %83 = math.exp %82 : vector<16x384xf32>
    %cst_59 = arith.constant 1.000000e+00 : f32
    %84 = vector.broadcast %cst_59 : f32 to vector<16x384xf32>
    %85 = arith.addf %84, %83 : vector<16x384xf32>
    %86 = arith.divf %84, %85 : vector<16x384xf32>
    %87 = vector.extract_strided_slice %80 {offsets = [0, 384], sizes = [16, 128], strides = [1, 1]} : vector<16x512xf32> to vector<16x128xf32>
    %88 = math.tanh %87 : vector<16x128xf32>
    %89 = vector.extract_strided_slice %86 {offsets = [0, 0], sizes = [16, 128], strides = [1, 1]} : vector<16x384xf32> to vector<16x128xf32>
    %90 = vector.extract_strided_slice %86 {offsets = [0, 128], sizes = [16, 128], strides = [1, 1]} : vector<16x384xf32> to vector<16x128xf32>
    %91 = vector.extract_strided_slice %86 {offsets = [0, 256], sizes = [16, 128], strides = [1, 1]} : vector<16x384xf32> to vector<16x128xf32>
    %92 = arith.mulf %90, %74 : vector<16x128xf32>
    %93 = arith.mulf %89, %88 : vector<16x128xf32>
    %94 = arith.addf %92, %93 : vector<16x128xf32>
    %95 = math.tanh %94 : vector<16x128xf32>
    %96 = arith.mulf %91, %95 : vector<16x128xf32>
    %c0_60 = arith.constant 0 : index
    %c0_61 = arith.constant 0 : index
    %97 = vector.load %arg10[%c0_60, %c0_61] : memref<16x128xf32, #tpu.memory_space<vmem>>, vector<16x128xf32>
    tpu.vector_store %arg10[%c0_60, %c0_61], %94 {strides = array<i32>} : memref<16x128xf32, #tpu.memory_space<vmem>>, vector<16x128xf32>,
    %c0_62 = arith.constant 0 : index
    %c0_63 = arith.constant 0 : index
    %98 = vector.load %arg9[%c0_62, %c0_63] : memref<16x128xf32, #tpu.memory_space<vmem>>, vector<16x128xf32>
    tpu.vector_store %arg9[%c0_62, %c0_63], %96 {strides = array<i32>} : memref<16x128xf32, #tpu.memory_space<vmem>>, vector<16x128xf32>,
    %99 = arith.index_cast %c2_i32 : i32 to index
    %c0_64 = arith.constant 0 : index
    %c0_65 = arith.constant 0 : index
    %100 = vector.load %arg12[%99, %c0_64, %c0_65] : memref<8x16x128xf32, #tpu.memory_space<vmem>>, vector<1x16x128xf32>
    %101 = vector.shape_cast %100 : vector<1x16x128xf32> to vector<16x128xf32>
    %102 = vector.shape_cast %96 : vector<16x128xf32> to vector<1x16x128xf32>
    tpu.vector_store %arg12[%99, %c0_64, %c0_65], %102 {strides = array<i32>} : memref<8x16x128xf32, #tpu.memory_space<vmem>>, vector<1x16x128xf32>,
    %c3_i32 = arith.constant 3 : i32
    %c0_66 = arith.constant 0 : index
    %c0_67 = arith.constant 0 : index
    %103 = vector.load %arg9[%c0_66, %c0_67] : memref<16x128xf32, #tpu.memory_space<vmem>>, vector<16x128xf32>
    %c0_68 = arith.constant 0 : index
    %c0_69 = arith.constant 0 : index
    %104 = vector.load %arg10[%c0_68, %c0_69] : memref<16x128xf32, #tpu.memory_space<vmem>>, vector<16x128xf32>
    %105 = arith.index_cast %c3_i32 : i32 to index
    %c0_70 = arith.constant 0 : index
    %c0_71 = arith.constant 0 : index
    %106 = vector.load %arg11[%105, %c0_70, %c0_71] : memref<8x16x512xf32, #tpu.memory_space<vmem>>, vector<1x16x512xf32>
    %107 = vector.shape_cast %106 : vector<1x16x512xf32> to vector<16x512xf32>
    %c0_72 = arith.constant 0 : index
    %c0_73 = arith.constant 0 : index
    %108 = vector.load %arg4[%c0_72, %c0_73] : memref<128x512xf32, #tpu.memory_space<vmem>>, vector<128x512xf32>
    %cst_74 = arith.constant dense<0.000000e+00> : vector<16x512xf32>
    %109 = tpu.matmul %103, %108, %cst_74 {dimension_numbers = #tpu.dot_dimension_numbers<[1], [0], [0], [1], [0, 0, 1, 1], [], []>} : vector<16x128xf32>, vector<128x512xf32>, vector<16x512xf32> -> vector<16x512xf32>
    %110 = arith.addf %107, %109 : vector<16x512xf32>
    %111 = vector.extract_strided_slice %110 {offsets = [0, 0], sizes = [16, 384], strides = [1, 1]} : vector<16x512xf32> to vector<16x384xf32>
    %112 = arith.negf %111 : vector<16x384xf32>
    %113 = math.exp %112 : vector<16x384xf32>
    %cst_75 = arith.constant 1.000000e+00 : f32
    %114 = vector.broadcast %cst_75 : f32 to vector<16x384xf32>
    %115 = arith.addf %114, %113 : vector<16x384xf32>
    %116 = arith.divf %114, %115 : vector<16x384xf32>
    %117 = vector.extract_strided_slice %110 {offsets = [0, 384], sizes = [16, 128], strides = [1, 1]} : vector<16x512xf32> to vector<16x128xf32>
    %118 = math.tanh %117 : vector<16x128xf32>
    %119 = vector.extract_strided_slice %116 {offsets = [0, 0], sizes = [16, 128], strides = [1, 1]} : vector<16x384xf32> to vector<16x128xf32>
    %120 = vector.extract_strided_slice %116 {offsets = [0, 128], sizes = [16, 128], strides = [1, 1]} : vector<16x384xf32> to vector<16x128xf32>
    %121 = vector.extract_strided_slice %116 {offsets = [0, 256], sizes = [16, 128], strides = [1, 1]} : vector<16x384xf32> to vector<16x128xf32>
    %122 = arith.mulf %120, %104 : vector<16x128xf32>
    %123 = arith.mulf %119, %118 : vector<16x128xf32>
    %124 = arith.addf %122, %123 : vector<16x128xf32>
    %125 = math.tanh %124 : vector<16x128xf32>
    %126 = arith.mulf %121, %125 : vector<16x128xf32>
    %c0_76 = arith.constant 0 : index
    %c0_77 = arith.constant 0 : index
    %127 = vector.load %arg10[%c0_76, %c0_77] : memref<16x128xf32, #tpu.memory_space<vmem>>, vector<16x128xf32>
    tpu.vector_store %arg10[%c0_76, %c0_77], %124 {strides = array<i32>} : memref<16x128xf32, #tpu.memory_space<vmem>>, vector<16x128xf32>,
    %c0_78 = arith.constant 0 : index
    %c0_79 = arith.constant 0 : index
    %128 = vector.load %arg9[%c0_78, %c0_79] : memref<16x128xf32, #tpu.memory_space<vmem>>, vector<16x128xf32>
    tpu.vector_store %arg9[%c0_78, %c0_79], %126 {strides = array<i32>} : memref<16x128xf32, #tpu.memory_space<vmem>>, vector<16x128xf32>,
    %129 = arith.index_cast %c3_i32 : i32 to index
    %c0_80 = arith.constant 0 : index
    %c0_81 = arith.constant 0 : index
    %130 = vector.load %arg12[%129, %c0_80, %c0_81] : memref<8x16x128xf32, #tpu.memory_space<vmem>>, vector<1x16x128xf32>
    %131 = vector.shape_cast %130 : vector<1x16x128xf32> to vector<16x128xf32>
    %132 = vector.shape_cast %126 : vector<16x128xf32> to vector<1x16x128xf32>
    tpu.vector_store %arg12[%129, %c0_80, %c0_81], %132 {strides = array<i32>} : memref<8x16x128xf32, #tpu.memory_space<vmem>>, vector<1x16x128xf32>,
    %c4_i32 = arith.constant 4 : i32
    %c0_82 = arith.constant 0 : index
    %c0_83 = arith.constant 0 : index
    %133 = vector.load %arg9[%c0_82, %c0_83] : memref<16x128xf32, #tpu.memory_space<vmem>>, vector<16x128xf32>
    %c0_84 = arith.constant 0 : index
    %c0_85 = arith.constant 0 : index
    %134 = vector.load %arg10[%c0_84, %c0_85] : memref<16x128xf32, #tpu.memory_space<vmem>>, vector<16x128xf32>
    %135 = arith.index_cast %c4_i32 : i32 to index
    %c0_86 = arith.constant 0 : index
    %c0_87 = arith.constant 0 : index
    %136 = vector.load %arg11[%135, %c0_86, %c0_87] : memref<8x16x512xf32, #tpu.memory_space<vmem>>, vector<1x16x512xf32>
    %137 = vector.shape_cast %136 : vector<1x16x512xf32> to vector<16x512xf32>
    %c0_88 = arith.constant 0 : index
    %c0_89 = arith.constant 0 : index
    %138 = vector.load %arg4[%c0_88, %c0_89] : memref<128x512xf32, #tpu.memory_space<vmem>>, vector<128x512xf32>
    %cst_90 = arith.constant dense<0.000000e+00> : vector<16x512xf32>
    %139 = tpu.matmul %133, %138, %cst_90 {dimension_numbers = #tpu.dot_dimension_numbers<[1], [0], [0], [1], [0, 0, 1, 1], [], []>} : vector<16x128xf32>, vector<128x512xf32>, vector<16x512xf32> -> vector<16x512xf32>
    %140 = arith.addf %137, %139 : vector<16x512xf32>
    %141 = vector.extract_strided_slice %140 {offsets = [0, 0], sizes = [16, 384], strides = [1, 1]} : vector<16x512xf32> to vector<16x384xf32>
    %142 = arith.negf %141 : vector<16x384xf32>
    %143 = math.exp %142 : vector<16x384xf32>
    %cst_91 = arith.constant 1.000000e+00 : f32
    %144 = vector.broadcast %cst_91 : f32 to vector<16x384xf32>
    %145 = arith.addf %144, %143 : vector<16x384xf32>
    %146 = arith.divf %144, %145 : vector<16x384xf32>
    %147 = vector.extract_strided_slice %140 {offsets = [0, 384], sizes = [16, 128], strides = [1, 1]} : vector<16x512xf32> to vector<16x128xf32>
    %148 = math.tanh %147 : vector<16x128xf32>
    %149 = vector.extract_strided_slice %146 {offsets = [0, 0], sizes = [16, 128], strides = [1, 1]} : vector<16x384xf32> to vector<16x128xf32>
    %150 = vector.extract_strided_slice %146 {offsets = [0, 128], sizes = [16, 128], strides = [1, 1]} : vector<16x384xf32> to vector<16x128xf32>
    %151 = vector.extract_strided_slice %146 {offsets = [0, 256], sizes = [16, 128], strides = [1, 1]} : vector<16x384xf32> to vector<16x128xf32>
    %152 = arith.mulf %150, %134 : vector<16x128xf32>
    %153 = arith.mulf %149, %148 : vector<16x128xf32>
    %154 = arith.addf %152, %153 : vector<16x128xf32>
    %155 = math.tanh %154 : vector<16x128xf32>
    %156 = arith.mulf %151, %155 : vector<16x128xf32>
    %c0_92 = arith.constant 0 : index
    %c0_93 = arith.constant 0 : index
    %157 = vector.load %arg10[%c0_92, %c0_93] : memref<16x128xf32, #tpu.memory_space<vmem>>, vector<16x128xf32>
    tpu.vector_store %arg10[%c0_92, %c0_93], %154 {strides = array<i32>} : memref<16x128xf32, #tpu.memory_space<vmem>>, vector<16x128xf32>,
    %c0_94 = arith.constant 0 : index
    %c0_95 = arith.constant 0 : index
    %158 = vector.load %arg9[%c0_94, %c0_95] : memref<16x128xf32, #tpu.memory_space<vmem>>, vector<16x128xf32>
    tpu.vector_store %arg9[%c0_94, %c0_95], %156 {strides = array<i32>} : memref<16x128xf32, #tpu.memory_space<vmem>>, vector<16x128xf32>,
    %159 = arith.index_cast %c4_i32 : i32 to index
    %c0_96 = arith.constant 0 : index
    %c0_97 = arith.constant 0 : index
    %160 = vector.load %arg12[%159, %c0_96, %c0_97] : memref<8x16x128xf32, #tpu.memory_space<vmem>>, vector<1x16x128xf32>
    %161 = vector.shape_cast %160 : vector<1x16x128xf32> to vector<16x128xf32>
    %162 = vector.shape_cast %156 : vector<16x128xf32> to vector<1x16x128xf32>
    tpu.vector_store %arg12[%159, %c0_96, %c0_97], %162 {strides = array<i32>} : memref<8x16x128xf32, #tpu.memory_space<vmem>>, vector<1x16x128xf32>,
    %c5_i32 = arith.constant 5 : i32
    %c0_98 = arith.constant 0 : index
    %c0_99 = arith.constant 0 : index
    %163 = vector.load %arg9[%c0_98, %c0_99] : memref<16x128xf32, #tpu.memory_space<vmem>>, vector<16x128xf32>
    %c0_100 = arith.constant 0 : index
    %c0_101 = arith.constant 0 : index
    %164 = vector.load %arg10[%c0_100, %c0_101] : memref<16x128xf32, #tpu.memory_space<vmem>>, vector<16x128xf32>
    %165 = arith.index_cast %c5_i32 : i32 to index
    %c0_102 = arith.constant 0 : index
    %c0_103 = arith.constant 0 : index
    %166 = vector.load %arg11[%165, %c0_102, %c0_103] : memref<8x16x512xf32, #tpu.memory_space<vmem>>, vector<1x16x512xf32>
    %167 = vector.shape_cast %166 : vector<1x16x512xf32> to vector<16x512xf32>
    %c0_104 = arith.constant 0 : index
    %c0_105 = arith.constant 0 : index
    %168 = vector.load %arg4[%c0_104, %c0_105] : memref<128x512xf32, #tpu.memory_space<vmem>>, vector<128x512xf32>
    %cst_106 = arith.constant dense<0.000000e+00> : vector<16x512xf32>
    %169 = tpu.matmul %163, %168, %cst_106 {dimension_numbers = #tpu.dot_dimension_numbers<[1], [0], [0], [1], [0, 0, 1, 1], [], []>} : vector<16x128xf32>, vector<128x512xf32>, vector<16x512xf32> -> vector<16x512xf32>
    %170 = arith.addf %167, %169 : vector<16x512xf32>
    %171 = vector.extract_strided_slice %170 {offsets = [0, 0], sizes = [16, 384], strides = [1, 1]} : vector<16x512xf32> to vector<16x384xf32>
    %172 = arith.negf %171 : vector<16x384xf32>
    %173 = math.exp %172 : vector<16x384xf32>
    %cst_107 = arith.constant 1.000000e+00 : f32
    %174 = vector.broadcast %cst_107 : f32 to vector<16x384xf32>
    %175 = arith.addf %174, %173 : vector<16x384xf32>
    %176 = arith.divf %174, %175 : vector<16x384xf32>
    %177 = vector.extract_strided_slice %170 {offsets = [0, 384], sizes = [16, 128], strides = [1, 1]} : vector<16x512xf32> to vector<16x128xf32>
    %178 = math.tanh %177 : vector<16x128xf32>
    %179 = vector.extract_strided_slice %176 {offsets = [0, 0], sizes = [16, 128], strides = [1, 1]} : vector<16x384xf32> to vector<16x128xf32>
    %180 = vector.extract_strided_slice %176 {offsets = [0, 128], sizes = [16, 128], strides = [1, 1]} : vector<16x384xf32> to vector<16x128xf32>
    %181 = vector.extract_strided_slice %176 {offsets = [0, 256], sizes = [16, 128], strides = [1, 1]} : vector<16x384xf32> to vector<16x128xf32>
    %182 = arith.mulf %180, %164 : vector<16x128xf32>
    %183 = arith.mulf %179, %178 : vector<16x128xf32>
    %184 = arith.addf %182, %183 : vector<16x128xf32>
    %185 = math.tanh %184 : vector<16x128xf32>
    %186 = arith.mulf %181, %185 : vector<16x128xf32>
    %c0_108 = arith.constant 0 : index
    %c0_109 = arith.constant 0 : index
    %187 = vector.load %arg10[%c0_108, %c0_109] : memref<16x128xf32, #tpu.memory_space<vmem>>, vector<16x128xf32>
    tpu.vector_store %arg10[%c0_108, %c0_109], %184 {strides = array<i32>} : memref<16x128xf32, #tpu.memory_space<vmem>>, vector<16x128xf32>,
    %c0_110 = arith.constant 0 : index
    %c0_111 = arith.constant 0 : index
    %188 = vector.load %arg9[%c0_110, %c0_111] : memref<16x128xf32, #tpu.memory_space<vmem>>, vector<16x128xf32>
    tpu.vector_store %arg9[%c0_110, %c0_111], %186 {strides = array<i32>} : memref<16x128xf32, #tpu.memory_space<vmem>>, vector<16x128xf32>,
    %189 = arith.index_cast %c5_i32 : i32 to index
    %c0_112 = arith.constant 0 : index
    %c0_113 = arith.constant 0 : index
    %190 = vector.load %arg12[%189, %c0_112, %c0_113] : memref<8x16x128xf32, #tpu.memory_space<vmem>>, vector<1x16x128xf32>
    %191 = vector.shape_cast %190 : vector<1x16x128xf32> to vector<16x128xf32>
    %192 = vector.shape_cast %186 : vector<16x128xf32> to vector<1x16x128xf32>
    tpu.vector_store %arg12[%189, %c0_112, %c0_113], %192 {strides = array<i32>} : memref<8x16x128xf32, #tpu.memory_space<vmem>>, vector<1x16x128xf32>,
    %c6_i32 = arith.constant 6 : i32
    %c0_114 = arith.constant 0 : index
    %c0_115 = arith.constant 0 : index
    %193 = vector.load %arg9[%c0_114, %c0_115] : memref<16x128xf32, #tpu.memory_space<vmem>>, vector<16x128xf32>
    %c0_116 = arith.constant 0 : index
    %c0_117 = arith.constant 0 : index
    %194 = vector.load %arg10[%c0_116, %c0_117] : memref<16x128xf32, #tpu.memory_space<vmem>>, vector<16x128xf32>
    %195 = arith.index_cast %c6_i32 : i32 to index
    %c0_118 = arith.constant 0 : index
    %c0_119 = arith.constant 0 : index
    %196 = vector.load %arg11[%195, %c0_118, %c0_119] : memref<8x16x512xf32, #tpu.memory_space<vmem>>, vector<1x16x512xf32>
    %197 = vector.shape_cast %196 : vector<1x16x512xf32> to vector<16x512xf32>
    %c0_120 = arith.constant 0 : index
    %c0_121 = arith.constant 0 : index
    %198 = vector.load %arg4[%c0_120, %c0_121] : memref<128x512xf32, #tpu.memory_space<vmem>>, vector<128x512xf32>
    %cst_122 = arith.constant dense<0.000000e+00> : vector<16x512xf32>
    %199 = tpu.matmul %193, %198, %cst_122 {dimension_numbers = #tpu.dot_dimension_numbers<[1], [0], [0], [1], [0, 0, 1, 1], [], []>} : vector<16x128xf32>, vector<128x512xf32>, vector<16x512xf32> -> vector<16x512xf32>
    %200 = arith.addf %197, %199 : vector<16x512xf32>
    %201 = vector.extract_strided_slice %200 {offsets = [0, 0], sizes = [16, 384], strides = [1, 1]} : vector<16x512xf32> to vector<16x384xf32>
    %202 = arith.negf %201 : vector<16x384xf32>
    %203 = math.exp %202 : vector<16x384xf32>
    %cst_123 = arith.constant 1.000000e+00 : f32
    %204 = vector.broadcast %cst_123 : f32 to vector<16x384xf32>
    %205 = arith.addf %204, %203 : vector<16x384xf32>
    %206 = arith.divf %204, %205 : vector<16x384xf32>
    %207 = vector.extract_strided_slice %200 {offsets = [0, 384], sizes = [16, 128], strides = [1, 1]} : vector<16x512xf32> to vector<16x128xf32>
    %208 = math.tanh %207 : vector<16x128xf32>
    %209 = vector.extract_strided_slice %206 {offsets = [0, 0], sizes = [16, 128], strides = [1, 1]} : vector<16x384xf32> to vector<16x128xf32>
    %210 = vector.extract_strided_slice %206 {offsets = [0, 128], sizes = [16, 128], strides = [1, 1]} : vector<16x384xf32> to vector<16x128xf32>
    %211 = vector.extract_strided_slice %206 {offsets = [0, 256], sizes = [16, 128], strides = [1, 1]} : vector<16x384xf32> to vector<16x128xf32>
    %212 = arith.mulf %210, %194 : vector<16x128xf32>
    %213 = arith.mulf %209, %208 : vector<16x128xf32>
    %214 = arith.addf %212, %213 : vector<16x128xf32>
    %215 = math.tanh %214 : vector<16x128xf32>
    %216 = arith.mulf %211, %215 : vector<16x128xf32>
    %c0_124 = arith.constant 0 : index
    %c0_125 = arith.constant 0 : index
    %217 = vector.load %arg10[%c0_124, %c0_125] : memref<16x128xf32, #tpu.memory_space<vmem>>, vector<16x128xf32>
    tpu.vector_store %arg10[%c0_124, %c0_125], %214 {strides = array<i32>} : memref<16x128xf32, #tpu.memory_space<vmem>>, vector<16x128xf32>,
    %c0_126 = arith.constant 0 : index
    %c0_127 = arith.constant 0 : index
    %218 = vector.load %arg9[%c0_126, %c0_127] : memref<16x128xf32, #tpu.memory_space<vmem>>, vector<16x128xf32>
    tpu.vector_store %arg9[%c0_126, %c0_127], %216 {strides = array<i32>} : memref<16x128xf32, #tpu.memory_space<vmem>>, vector<16x128xf32>,
    %219 = arith.index_cast %c6_i32 : i32 to index
    %c0_128 = arith.constant 0 : index
    %c0_129 = arith.constant 0 : index
    %220 = vector.load %arg12[%219, %c0_128, %c0_129] : memref<8x16x128xf32, #tpu.memory_space<vmem>>, vector<1x16x128xf32>
    %221 = vector.shape_cast %220 : vector<1x16x128xf32> to vector<16x128xf32>
    %222 = vector.shape_cast %216 : vector<16x128xf32> to vector<1x16x128xf32>
    tpu.vector_store %arg12[%219, %c0_128, %c0_129], %222 {strides = array<i32>} : memref<8x16x128xf32, #tpu.memory_space<vmem>>, vector<1x16x128xf32>,
    %c7_i32 = arith.constant 7 : i32
    %c0_130 = arith.constant 0 : index
    %c0_131 = arith.constant 0 : index
    %223 = vector.load %arg9[%c0_130, %c0_131] : memref<16x128xf32, #tpu.memory_space<vmem>>, vector<16x128xf32>
    %c0_132 = arith.constant 0 : index
    %c0_133 = arith.constant 0 : index
    %224 = vector.load %arg10[%c0_132, %c0_133] : memref<16x128xf32, #tpu.memory_space<vmem>>, vector<16x128xf32>
    %225 = arith.index_cast %c7_i32 : i32 to index
    %c0_134 = arith.constant 0 : index
    %c0_135 = arith.constant 0 : index
    %226 = vector.load %arg11[%225, %c0_134, %c0_135] : memref<8x16x512xf32, #tpu.memory_space<vmem>>, vector<1x16x512xf32>
    %227 = vector.shape_cast %226 : vector<1x16x512xf32> to vector<16x512xf32>
    %c0_136 = arith.constant 0 : index
    %c0_137 = arith.constant 0 : index
    %228 = vector.load %arg4[%c0_136, %c0_137] : memref<128x512xf32, #tpu.memory_space<vmem>>, vector<128x512xf32>
    %cst_138 = arith.constant dense<0.000000e+00> : vector<16x512xf32>
    %229 = tpu.matmul %223, %228, %cst_138 {dimension_numbers = #tpu.dot_dimension_numbers<[1], [0], [0], [1], [0, 0, 1, 1], [], []>} : vector<16x128xf32>, vector<128x512xf32>, vector<16x512xf32> -> vector<16x512xf32>
    %230 = arith.addf %227, %229 : vector<16x512xf32>
    %231 = vector.extract_strided_slice %230 {offsets = [0, 0], sizes = [16, 384], strides = [1, 1]} : vector<16x512xf32> to vector<16x384xf32>
    %232 = arith.negf %231 : vector<16x384xf32>
    %233 = math.exp %232 : vector<16x384xf32>
    %cst_139 = arith.constant 1.000000e+00 : f32
    %234 = vector.broadcast %cst_139 : f32 to vector<16x384xf32>
    %235 = arith.addf %234, %233 : vector<16x384xf32>
    %236 = arith.divf %234, %235 : vector<16x384xf32>
    %237 = vector.extract_strided_slice %230 {offsets = [0, 384], sizes = [16, 128], strides = [1, 1]} : vector<16x512xf32> to vector<16x128xf32>
    %238 = math.tanh %237 : vector<16x128xf32>
    %239 = vector.extract_strided_slice %236 {offsets = [0, 0], sizes = [16, 128], strides = [1, 1]} : vector<16x384xf32> to vector<16x128xf32>
    %240 = vector.extract_strided_slice %236 {offsets = [0, 128], sizes = [16, 128], strides = [1, 1]} : vector<16x384xf32> to vector<16x128xf32>
    %241 = vector.extract_strided_slice %236 {offsets = [0, 256], sizes = [16, 128], strides = [1, 1]} : vector<16x384xf32> to vector<16x128xf32>
    %242 = arith.mulf %240, %224 : vector<16x128xf32>
    %243 = arith.mulf %239, %238 : vector<16x128xf32>
    %244 = arith.addf %242, %243 : vector<16x128xf32>
    %245 = math.tanh %244 : vector<16x128xf32>
    %246 = arith.mulf %241, %245 : vector<16x128xf32>
    %c0_140 = arith.constant 0 : index
    %c0_141 = arith.constant 0 : index
    %247 = vector.load %arg10[%c0_140, %c0_141] : memref<16x128xf32, #tpu.memory_space<vmem>>, vector<16x128xf32>
    tpu.vector_store %arg10[%c0_140, %c0_141], %244 {strides = array<i32>} : memref<16x128xf32, #tpu.memory_space<vmem>>, vector<16x128xf32>,
    %c0_142 = arith.constant 0 : index
    %c0_143 = arith.constant 0 : index
    %248 = vector.load %arg9[%c0_142, %c0_143] : memref<16x128xf32, #tpu.memory_space<vmem>>, vector<16x128xf32>
    tpu.vector_store %arg9[%c0_142, %c0_143], %246 {strides = array<i32>} : memref<16x128xf32, #tpu.memory_space<vmem>>, vector<16x128xf32>,
    %249 = arith.index_cast %c7_i32 : i32 to index
    %c0_144 = arith.constant 0 : index
    %c0_145 = arith.constant 0 : index
    %250 = vector.load %arg12[%249, %c0_144, %c0_145] : memref<8x16x128xf32, #tpu.memory_space<vmem>>, vector<1x16x128xf32>
    %251 = vector.shape_cast %250 : vector<1x16x128xf32> to vector<16x128xf32>
    %252 = vector.shape_cast %246 : vector<16x128xf32> to vector<1x16x128xf32>
    tpu.vector_store %arg12[%249, %c0_144, %c0_145], %252 {strides = array<i32>} : memref<8x16x128xf32, #tpu.memory_space<vmem>>, vector<1x16x128xf32>,
    %c8_i32 = arith.constant 8 : i32
    %c0_146 = arith.constant 0 : index
    %c0_147 = arith.constant 0 : index
    %c0_148 = arith.constant 0 : index
    %253 = vector.load %arg12[%c0_146, %c0_147, %c0_148] : memref<8x16x128xf32, #tpu.memory_space<vmem>>, vector<8x16x128xf32>
    %c0_149 = arith.constant 0 : index
    %c0_150 = arith.constant 0 : index
    %c0_151 = arith.constant 0 : index
    %254 = vector.load %arg6[%c0_149, %c0_150, %c0_151] : memref<1x1x128xf32, #tpu.memory_space<vmem>>, vector<1x1x128xf32>
    %255 = vector.broadcast %254 : vector<1x1x128xf32> to vector<8x16x128xf32>
    %256 = arith.mulf %253, %255 : vector<8x16x128xf32>
    %cst_152 = arith.constant dense<0.000000e+00> : vector<8x16xf32>
    %257 = vector.multi_reduction <add>, %256, %cst_152 [2] : vector<8x16x128xf32> to vector<8x16xf32>
    %258 = vector.shape_cast %257 : vector<8x16xf32> to vector<8x16x1xf32>
    %c0_153 = arith.constant 0 : index
    %c0_154 = arith.constant 0 : index
    %c0_155 = arith.constant 0 : index
    %259 = vector.load %arg7[%c0_153, %c0_154, %c0_155] : memref<1x1x1xf32, #tpu.memory_space<vmem>>, vector<1x1x1xf32>
    %260 = vector.broadcast %259 : vector<1x1x1xf32> to vector<8x16x1xf32>
    %261 = arith.addf %258, %260 : vector<8x16x1xf32>
    %262 = math.tanh %261 : vector<8x16x1xf32>
    %c0_156 = arith.constant 0 : index
    %c0_157 = arith.constant 0 : index
    %c0_158 = arith.constant 0 : index
    %263 = vector.load %arg8[%c0_156, %c0_157, %c0_158] : memref<8x16x1xf32, #tpu.memory_space<vmem>>, vector<8x16x1xf32>
    tpu.vector_store %arg8[%c0_156, %c0_157, %c0_158], %262 {strides = array<i32>} : memref<8x16x1xf32, #tpu.memory_space<vmem>>, vector<8x16x1xf32>,
    return
  }
}

</mosaic_0001>

<llo_original>
// kernel: simple_rnn_forward.1
$region0: #{simple_rnn_forward.1}
  #allocation0 [shape = 'u32[]', space=smem, size = 0x4, offset = 0x4, fixed_abs, tag = 'smem constant byte address 0x4 - core index']
  #allocation1 [shape = 'u32[144,128]{1,0:T(1,128)}', space=vmem, size = 0x12000, scoped, tag = 'internal scratch']
  #allocation2 [shape = 'f32[8,16,512]{2,1,0:T(8,128)}', space=vmem, size = 0x40000, scoped, tag = 'scratch operand']
  #allocation3 [shape = 'f32[8,16,128]{2,1,0:T(8,128)}', space=vmem, size = 0x10000, scoped, tag = 'scratch operand']
  #allocation4 [shape = 'f32[1,1,1]{2,1,0:T(1,128)S(1)}', space=vmem, size = 0x200, scoped, tag = 'scoped memory for simple_rnn_forward.1']
  %s0 = inlined_call_operand.vmem [shape: f32[8,16,1], index: 0, kind: input, shape index: {}]
  %s1 = inlined_call_operand.vmem [shape: f32[16,128], index: 1, kind: input, shape index: {}]
  %s2 = inlined_call_operand.vmem [shape: f32[16,128], index: 2, kind: input, shape index: {}]
  %s3 = inlined_call_operand.vmem [shape: f32[1,1,512], index: 3, kind: input, shape index: {}]
  %s4 = inlined_call_operand.hbm [shape: f32[128,512], index: 4, kind: input, shape index: {}]
  %s5 = inlined_call_operand.vmem [shape: f32[1,1,512], index: 5, kind: input, shape index: {}]
  %s6 = inlined_call_operand.vmem [shape: f32[1,1,128], index: 6, kind: input, shape index: {}]
  %s7 = inlined_call_operand.<no memory space> [shape: f32[1,1,1], index: 7, kind: input, shape index: {}]
  %s8 = inlined_call_operand.vmem [shape: f32[8,16,1], index: 8, kind: output, shape index: {0}]
  %s9 = inlined_call_operand.vmem [shape: f32[16,128], index: 9, kind: output, shape index: {1}]
  %s10 = inlined_call_operand.vmem [shape: f32[16,128], index: 10, kind: output, shape index: {2}]
  %11 = xla_tuple %s8, %s9, %s10
  %s12 = sld [smem:[#allocation0]]
  $region62: #{simple_rnn_forward.1} parent=0
    _
  %s14 = ssub.s32 1, %s12
  %s15 = scalar_select 0, %s14, %s12
  %v16 = vstv %s7
  %17 = vst [vmem:[#allocation4] sm:$0x1] %v16
  $region1: #{simple_rnn_forward.1} parent=0
    #allocation5 [shape = 'u8[262144]{0}', space=vmem, size = 0x40000, scoped, tag = 'input window, operand 4, single buffered']
    #allocation6 [shape = 's32[1]{0}', space=sflag, size = 0x4, scoped, tag = 'scoped memory for simple_rnn_forward.1']
    %18 = vsyncpa [#allocation6], 0
    // Predicated region
    $region2: #{simple_rnn_forward.1} parent=1 // pred_check
      _
    $region3: #{simple_rnn_forward.1} parent=1 // pred_check_branch
      %20 = sbr.rel (0) target = $region5
    $region4: #{simple_rnn_forward.1} parent=1 // pred_region
      _
    $region5: #{simple_rnn_forward.1} parent=1 // pred_fallthru
      _
    // Predicated region
    $region6: #{simple_rnn_forward.1} parent=1 // pred_check
      _
    $region7: #{simple_rnn_forward.1} parent=1 // pred_check_branch
      %22 = sbr.rel (0) target = $region9
    $region8: #{simple_rnn_forward.1} parent=1 // pred_region
      _
    $region9: #{simple_rnn_forward.1} parent=1 // pred_fallthru
      _
    // Predicated region
    $region10: #{simple_rnn_forward.1} parent=1 // pred_check
      _
    $region11: #{simple_rnn_forward.1} parent=1 // pred_check_branch
      %24 = sbr.rel (0) target = $region13
    $region12: #{simple_rnn_forward.1} parent=1 // pred_region
      _
    $region13: #{simple_rnn_forward.1} parent=1 // pred_fallthru
      _
    // Predicated region
    $region14: #{simple_rnn_forward.1} parent=1 // pred_check
      _
    $region15: #{simple_rnn_forward.1} parent=1 // pred_check_branch
      %26 = sbr.rel (0) target = $region17
    $region16: #{simple_rnn_forward.1} parent=1 // pred_region
      _
    $region17: #{simple_rnn_forward.1} parent=1 // pred_fallthru
      _
    // Predicated region
    $region18: #{simple_rnn_forward.1} parent=1 // pred_check
      _
    $region19: #{simple_rnn_forward.1} parent=1 // pred_check_branch
      %28 = sbr.rel (0) target = $region21
    $region20: #{simple_rnn_forward.1} parent=1 // pred_region
      %s30 = ssub.s32 8192, 8192
      %31 = vsyncadd [#allocation6], %s30
      %s32 = sshll.u32 [#allocation5], 4
      %s33 = int_to_ptr.vmem [resolvable:$true] %s32
      %38 = dma.hbm_to_vmem [thread:$0]  %s4, 8192, %s33, [#allocation6], 512, 512, 32
    $region21: #{simple_rnn_forward.1} parent=1 // pred_fallthru
      _
    // Predicated region
    $region22: #{simple_rnn_forward.1} parent=1 // pred_check
      _
    $region23: #{simple_rnn_forward.1} parent=1 // pred_check_branch
      %40 = sbr.rel (0) target = $region25
    $region24: #{simple_rnn_forward.1} parent=1 // pred_region
      _
    $region25: #{simple_rnn_forward.1} parent=1 // pred_fallthru
      _
    // Predicated region
    $region26: #{simple_rnn_forward.1} parent=1 // pred_check
      _
    $region27: #{simple_rnn_forward.1} parent=1 // pred_check_branch
      %42 = sbr.rel (0) target = $region29
    $region28: #{simple_rnn_forward.1} parent=1 // pred_region
      _
    $region29: #{simple_rnn_forward.1} parent=1 // pred_fallthru
      _
    // Predicated region
    $region30: #{simple_rnn_forward.1} parent=1 // pred_check
      _
    $region31: #{simple_rnn_forward.1} parent=1 // pred_check_branch
      %44 = sbr.rel (0) target = $region33
    $region32: #{simple_rnn_forward.1} parent=1 // pred_region
      _
    $region33: #{simple_rnn_forward.1} parent=1 // pred_fallthru
      _
    // Predicated region
    $region34: #{simple_rnn_forward.1} parent=1 // pred_check
      _
    $region35: #{simple_rnn_forward.1} parent=1 // pred_check_branch
      %46 = sbr.rel (0) target = $region37
    $region36: #{simple_rnn_forward.1} parent=1 // pred_region
      %47 = dma.done [#allocation6], 8192
    $region37: #{simple_rnn_forward.1} parent=1 // pred_fallthru
      _
    %v48 = vld [vmem:[%s0] sm:$0xff]
    %v49 = vld [vmem:[%s0 + $0x8] sm:$0xff]
    %v50 = vld [vmem:[%s0 + $0x10] sm:$0xff]
    %v51 = vld [vmem:[%s0 + $0x18] sm:$0xff]
    %v52 = vld [vmem:[%s0 + $0x20] sm:$0xff]
    %v53 = vld [vmem:[%s0 + $0x28] sm:$0xff]
    %v54 = vld [vmem:[%s0 + $0x30] sm:$0xff]
    %v55 = vld [vmem:[%s0 + $0x38] sm:$0xff]
    %v56 = vld [vmem:[%s0 + $0x40] sm:$0xff]
    %v57 = vld [vmem:[%s0 + $0x48] sm:$0xff]
    %v58 = vld [vmem:[%s0 + $0x50] sm:$0xff]
    %v59 = vld [vmem:[%s0 + $0x58] sm:$0xff]
    %v60 = vld [vmem:[%s0 + $0x60] sm:$0xff]
    %v61 = vld [vmem:[%s0 + $0x68] sm:$0xff]
    %v62 = vld [vmem:[%s0 + $0x70] sm:$0xff]
    %v63 = vld [vmem:[%s0 + $0x78] sm:$0xff]
    %v64 = vld [vmem:[%s3] sm:$0xf]
    %66 = vset.pattern.permute.xlu0 0
    %67 = vperm.xlu0 %66, %v48
    %v68 = vpop.permute.xlu0 %67
    %71 = vset.pattern.permute.xlu0 0
    %72 = vperm.xlu0 %71, %v49
    %v73 = vpop.permute.xlu0 %72
    %76 = vset.pattern.permute.xlu0 0
    %77 = vperm.xlu0 %76, %v50
    %v78 = vpop.permute.xlu0 %77
    %81 = vset.pattern.permute.xlu0 0
    %82 = vperm.xlu0 %81, %v51
    %v83 = vpop.permute.xlu0 %82
    %86 = vset.pattern.permute.xlu0 0
    %87 = vperm.xlu0 %86, %v52
    %v88 = vpop.permute.xlu0 %87
    %91 = vset.pattern.permute.xlu0 0
    %92 = vperm.xlu0 %91, %v53
    %v93 = vpop.permute.xlu0 %92
    %96 = vset.pattern.permute.xlu0 0
    %97 = vperm.xlu0 %96, %v54
    %v98 = vpop.permute.xlu0 %97
    %101 = vset.pattern.permute.xlu0 0
    %102 = vperm.xlu0 %101, %v55
    %v103 = vpop.permute.xlu0 %102
    %106 = vset.pattern.permute.xlu0 0
    %107 = vperm.xlu0 %106, %v56
    %v108 = vpop.permute.xlu0 %107
    %111 = vset.pattern.permute.xlu0 0
    %112 = vperm.xlu0 %111, %v57
    %v113 = vpop.permute.xlu0 %112
    %116 = vset.pattern.permute.xlu0 0
    %117 = vperm.xlu0 %116, %v58
    %v118 = vpop.permute.xlu0 %117
    %121 = vset.pattern.permute.xlu0 0
    %122 = vperm.xlu0 %121, %v59
    %v123 = vpop.permute.xlu0 %122
    %126 = vset.pattern.permute.xlu0 0
    %127 = vperm.xlu0 %126, %v60
    %v128 = vpop.permute.xlu0 %127
    %131 = vset.pattern.permute.xlu0 0
    %132 = vperm.xlu0 %131, %v61
    %v133 = vpop.permute.xlu0 %132
    %136 = vset.pattern.permute.xlu0 0
    %137 = vperm.xlu0 %136, %v62
    %v138 = vpop.permute.xlu0 %137
    %141 = vset.pattern.permute.xlu0 0
    %142 = vperm.xlu0 %141, %v63
    %v143 = vpop.permute.xlu0 %142
    %v146 = vlaneseq
    %v147 = vshrl.u32 %v146, 7
    %v148 = vsub.s32 0, %v147
    %v149 = vrot.slane %v64, %v148
    %v150 = vlaneseq
    %v151 = vshrl.u32 %v150, 7
    %v152 = vsub.s32 1, %v151
    %v153 = vrot.slane %v64, %v152
    %v154 = vlaneseq
    %v155 = vshrl.u32 %v154, 7
    %v156 = vsub.s32 2, %v155
    %v157 = vrot.slane %v64, %v156
    %v158 = vlaneseq
    %v159 = vshrl.u32 %v158, 7
    %v160 = vsub.s32 3, %v159
    %v161 = vrot.slane %v64, %v160
    %v166 = vmul.f32 %v68, %v149
    %v167 = vmul.f32 %v68, %v153
    %v168 = vmul.f32 %v68, %v157
    %v169 = vmul.f32 %v68, %v161
    %v170 = vmul.f32 %v73, %v149
    %v171 = vmul.f32 %v73, %v153
    %v172 = vmul.f32 %v73, %v157
    %v173 = vmul.f32 %v73, %v161
    %v174 = vmul.f32 %v78, %v149
    %v175 = vmul.f32 %v78, %v153
    %v176 = vmul.f32 %v78, %v157
    %v177 = vmul.f32 %v78, %v161
    %v178 = vmul.f32 %v83, %v149
    %v179 = vmul.f32 %v83, %v153
    %v180 = vmul.f32 %v83, %v157
    %v181 = vmul.f32 %v83, %v161
    %v182 = vmul.f32 %v88, %v149
    %v183 = vmul.f32 %v88, %v153
    %v184 = vmul.f32 %v88, %v157
    %v185 = vmul.f32 %v88, %v161
    %v186 = vmul.f32 %v93, %v149
    %v187 = vmul.f32 %v93, %v153
    %v188 = vmul.f32 %v93, %v157
    %v189 = vmul.f32 %v93, %v161
    %v190 = vmul.f32 %v98, %v149
    %v191 = vmul.f32 %v98, %v153
    %v192 = vmul.f32 %v98, %v157
    %v193 = vmul.f32 %v98, %v161
    %v194 = vmul.f32 %v103, %v149
    %v195 = vmul.f32 %v103, %v153
    %v196 = vmul.f32 %v103, %v157
    %v197 = vmul.f32 %v103, %v161
    %v198 = vmul.f32 %v108, %v149
    %v199 = vmul.f32 %v108, %v153
    %v200 = vmul.f32 %v108, %v157
    %v201 = vmul.f32 %v108, %v161
    %v202 = vmul.f32 %v113, %v149
    %v203 = vmul.f32 %v113, %v153
    %v204 = vmul.f32 %v113, %v157
    %v205 = vmul.f32 %v113, %v161
    %v206 = vmul.f32 %v118, %v149
    %v207 = vmul.f32 %v118, %v153
    %v208 = vmul.f32 %v118, %v157
    %v209 = vmul.f32 %v118, %v161
    %v210 = vmul.f32 %v123, %v149
    %v211 = vmul.f32 %v123, %v153
    %v212 = vmul.f32 %v123, %v157
    %v213 = vmul.f32 %v123, %v161
    %v214 = vmul.f32 %v128, %v149
    %v215 = vmul.f32 %v128, %v153
    %v216 = vmul.f32 %v128, %v157
    %v217 = vmul.f32 %v128, %v161
    %v218 = vmul.f32 %v133, %v149
    %v219 = vmul.f32 %v133, %v153
    %v220 = vmul.f32 %v133, %v157
    %v221 = vmul.f32 %v133, %v161
    %v222 = vmul.f32 %v138, %v149
    %v223 = vmul.f32 %v138, %v153
    %v224 = vmul.f32 %v138, %v157
    %v225 = vmul.f32 %v138, %v161
    %v226 = vmul.f32 %v143, %v149
    %v227 = vmul.f32 %v143, %v153
    %v228 = vmul.f32 %v143, %v157
    %v229 = vmul.f32 %v143, %v161
    %v230 = vld [vmem:[%s5] sm:$0xf]
    %v232 = vlaneseq
    %v233 = vshrl.u32 %v232, 7
    %v234 = vsub.s32 0, %v233
    %v235 = vrot.slane %v230, %v234
    %v236 = vlaneseq
    %v237 = vshrl.u32 %v236, 7
    %v238 = vsub.s32 1, %v237
    %v239 = vrot.slane %v230, %v238
    %v240 = vlaneseq
    %v241 = vshrl.u32 %v240, 7
    %v242 = vsub.s32 2, %v241
    %v243 = vrot.slane %v230, %v242
    %v244 = vlaneseq
    %v245 = vshrl.u32 %v244, 7
    %v246 = vsub.s32 3, %v245
    %v247 = vrot.slane %v230, %v246
    %v252 = vadd.f32 %v166, %v235
    %v253 = vadd.f32 %v167, %v239
    %v254 = vadd.f32 %v168, %v243
    %v255 = vadd.f32 %v169, %v247
    %v256 = vadd.f32 %v170, %v235
    %v257 = vadd.f32 %v171, %v239
    %v258 = vadd.f32 %v172, %v243
    %v259 = vadd.f32 %v173, %v247
    %v260 = vadd.f32 %v174, %v235
    %v261 = vadd.f32 %v175, %v239
    %v262 = vadd.f32 %v176, %v243
    %v263 = vadd.f32 %v177, %v247
    %v264 = vadd.f32 %v178, %v235
    %v265 = vadd.f32 %v179, %v239
    %v266 = vadd.f32 %v180, %v243
    %v267 = vadd.f32 %v181, %v247
    %v268 = vadd.f32 %v182, %v235
    %v269 = vadd.f32 %v183, %v239
    %v270 = vadd.f32 %v184, %v243
    %v271 = vadd.f32 %v185, %v247
    %v272 = vadd.f32 %v186, %v235
    %v273 = vadd.f32 %v187, %v239
    %v274 = vadd.f32 %v188, %v243
    %v275 = vadd.f32 %v189, %v247
    %v276 = vadd.f32 %v190, %v235
    %v277 = vadd.f32 %v191, %v239
    %v278 = vadd.f32 %v192, %v243
    %v279 = vadd.f32 %v193, %v247
    %v280 = vadd.f32 %v194, %v235
    %v281 = vadd.f32 %v195, %v239
    %v282 = vadd.f32 %v196, %v243
    %v283 = vadd.f32 %v197, %v247
    %v284 = vadd.f32 %v198, %v235
    %v285 = vadd.f32 %v199, %v239
    %v286 = vadd.f32 %v200, %v243
    %v287 = vadd.f32 %v201, %v247
    %v288 = vadd.f32 %v202, %v235
    %v289 = vadd.f32 %v203, %v239
    %v290 = vadd.f32 %v204, %v243
    %v291 = vadd.f32 %v205, %v247
    %v292 = vadd.f32 %v206, %v235
    %v293 = vadd.f32 %v207, %v239
    %v294 = vadd.f32 %v208, %v243
    %v295 = vadd.f32 %v209, %v247
    %v296 = vadd.f32 %v210, %v235
    %v297 = vadd.f32 %v211, %v239
    %v298 = vadd.f32 %v212, %v243
    %v299 = vadd.f32 %v213, %v247
    %v300 = vadd.f32 %v214, %v235
    %v301 = vadd.f32 %v215, %v239
    %v302 = vadd.f32 %v216, %v243
    %v303 = vadd.f32 %v217, %v247
    %v304 = vadd.f32 %v218, %v235
    %v305 = vadd.f32 %v219, %v239
    %v306 = vadd.f32 %v220, %v243
    %v307 = vadd.f32 %v221, %v247
    %v308 = vadd.f32 %v222, %v235
    %v309 = vadd.f32 %v223, %v239
    %v310 = vadd.f32 %v224, %v243
    %v311 = vadd.f32 %v225, %v247
    %v312 = vadd.f32 %v226, %v235
    %v313 = vadd.f32 %v227, %v239
    %v314 = vadd.f32 %v228, %v243
    %v315 = vadd.f32 %v229, %v247
    %316 = vst [vmem:[#allocation2] sm:$0xff] %v252
    %317 = vst [vmem:[#allocation2 + $0x8] sm:$0xff] %v253
    %318 = vst [vmem:[#allocation2 + $0x10] sm:$0xff] %v254
    %319 = vst [vmem:[#allocation2 + $0x18] sm:$0xff] %v255
    %320 = vst [vmem:[#allocation2 + $0x20] sm:$0xff] %v256
    %321 = vst [vmem:[#allocation2 + $0x28] sm:$0xff] %v257
    %322 = vst [vmem:[#allocation2 + $0x30] sm:$0xff] %v258
    %323 = vst [vmem:[#allocation2 + $0x38] sm:$0xff] %v259
    %324 = vst [vmem:[#allocation2 + $0x40] sm:$0xff] %v260
    %325 = vst [vmem:[#allocation2 + $0x48] sm:$0xff] %v261
    %326 = vst [vmem:[#allocation2 + $0x50] sm:$0xff] %v262
    %327 = vst [vmem:[#allocation2 + $0x58] sm:$0xff] %v263
    %328 = vst [vmem:[#allocation2 + $0x60] sm:$0xff] %v264
    %329 = vst [vmem:[#allocation2 + $0x68] sm:$0xff] %v265
    %330 = vst [vmem:[#allocation2 + $0x70] sm:$0xff] %v266
    %331 = vst [vmem:[#allocation2 + $0x78] sm:$0xff] %v267
    %332 = vst [vmem:[#allocation2 + $0x80] sm:$0xff] %v268
    %333 = vst [vmem:[#allocation2 + $0x88] sm:$0xff] %v269
    %334 = vst [vmem:[#allocation2 + $0x90] sm:$0xff] %v270
    %335 = vst [vmem:[#allocation2 + $0x98] sm:$0xff] %v271
    %336 = vst [vmem:[#allocation2 + $0xa0] sm:$0xff] %v272
    %337 = vst [vmem:[#allocation2 + $0xa8] sm:$0xff] %v273
    %338 = vst [vmem:[#allocation2 + $0xb0] sm:$0xff] %v274
    %339 = vst [vmem:[#allocation2 + $0xb8] sm:$0xff] %v275
    %340 = vst [vmem:[#allocation2 + $0xc0] sm:$0xff] %v276
    %341 = vst [vmem:[#allocation2 + $0xc8] sm:$0xff] %v277
    %342 = vst [vmem:[#allocation2 + $0xd0] sm:$0xff] %v278
    %343 = vst [vmem:[#allocation2 + $0xd8] sm:$0xff] %v279
    %344 = vst [vmem:[#allocation2 + $0xe0] sm:$0xff] %v280
    %345 = vst [vmem:[#allocation2 + $0xe8] sm:$0xff] %v281
    %346 = vst [vmem:[#allocation2 + $0xf0] sm:$0xff] %v282
    %347 = vst [vmem:[#allocation2 + $0xf8] sm:$0xff] %v283
    %348 = vst [vmem:[#allocation2 + $0x100] sm:$0xff] %v284
    %349 = vst [vmem:[#allocation2 + $0x108] sm:$0xff] %v285
    %350 = vst [vmem:[#allocation2 + $0x110] sm:$0xff] %v286
    %351 = vst [vmem:[#allocation2 + $0x118] sm:$0xff] %v287
    %352 = vst [vmem:[#allocation2 + $0x120] sm:$0xff] %v288
    %353 = vst [vmem:[#allocation2 + $0x128] sm:$0xff] %v289
    %354 = vst [vmem:[#allocation2 + $0x130] sm:$0xff] %v290
    %355 = vst [vmem:[#allocation2 + $0x138] sm:$0xff] %v291
    %356 = vst [vmem:[#allocation2 + $0x140] sm:$0xff] %v292
    %357 = vst [vmem:[#allocation2 + $0x148] sm:$0xff] %v293
    %358 = vst [vmem:[#allocation2 + $0x150] sm:$0xff] %v294
    %359 = vst [vmem:[#allocation2 + $0x158] sm:$0xff] %v295
    %360 = vst [vmem:[#allocation2 + $0x160] sm:$0xff] %v296
    %361 = vst [vmem:[#allocation2 + $0x168] sm:$0xff] %v297
    %362 = vst [vmem:[#allocation2 + $0x170] sm:$0xff] %v298
    %363 = vst [vmem:[#allocation2 + $0x178] sm:$0xff] %v299
    %364 = vst [vmem:[#allocation2 + $0x180] sm:$0xff] %v300
    %365 = vst [vmem:[#allocation2 + $0x188] sm:$0xff] %v301
    %366 = vst [vmem:[#allocation2 + $0x190] sm:$0xff] %v302
    %367 = vst [vmem:[#allocation2 + $0x198] sm:$0xff] %v303
    %368 = vst [vmem:[#allocation2 + $0x1a0] sm:$0xff] %v304
    %369 = vst [vmem:[#allocation2 + $0x1a8] sm:$0xff] %v305
    %370 = vst [vmem:[#allocation2 + $0x1b0] sm:$0xff] %v306
    %371 = vst [vmem:[#allocation2 + $0x1b8] sm:$0xff] %v307
    %372 = vst [vmem:[#allocation2 + $0x1c0] sm:$0xff] %v308
    %373 = vst [vmem:[#allocation2 + $0x1c8] sm:$0xff] %v309
    %374 = vst [vmem:[#allocation2 + $0x1d0] sm:$0xff] %v310
    %375 = vst [vmem:[#allocation2 + $0x1d8] sm:$0xff] %v311
    %376 = vst [vmem:[#allocation2 + $0x1e0] sm:$0xff] %v312
    %377 = vst [vmem:[#allocation2 + $0x1e8] sm:$0xff] %v313
    %378 = vst [vmem:[#allocation2 + $0x1f0] sm:$0xff] %v314
    %379 = vst [vmem:[#allocation2 + $0x1f8] sm:$0xff] %v315
    %v380 = vld [vmem:[%s1] sm:$0xff]
    %v381 = vld [vmem:[%s1 + $0x8] sm:$0xff]
    %382 = vst [vmem:[%s9] sm:$0xff] %v380
    %383 = vst [vmem:[%s9 + $0x8] sm:$0xff] %v381
    %v384 = vld [vmem:[%s2] sm:$0xff]
    %v385 = vld [vmem:[%s2 + $0x8] sm:$0xff]
    %386 = vst [vmem:[%s10] sm:$0xff] %v384
    %387 = vst [vmem:[%s10 + $0x8] sm:$0xff] %v385
    %v388 = vld [vmem:[%s9] sm:$0xff]
    %v389 = vld [vmem:[%s9 + $0x8] sm:$0xff]
    %v390 = vld [vmem:[%s10] sm:$0xff]
    %v391 = vld [vmem:[%s10 + $0x8] sm:$0xff]
    %v392 = vld [vmem:[#allocation2] sm:$0xff]
    %v393 = vld [vmem:[#allocation2 + $0x8] sm:$0xff]
    %v394 = vld [vmem:[#allocation2 + $0x10] sm:$0xff]
    %v395 = vld [vmem:[#allocation2 + $0x18] sm:$0xff]
    %v396 = vld [vmem:[#allocation2 + $0x20] sm:$0xff]
    %v397 = vld [vmem:[#allocation2 + $0x28] sm:$0xff]
    %v398 = vld [vmem:[#allocation2 + $0x30] sm:$0xff]
    %v399 = vld [vmem:[#allocation2 + $0x38] sm:$0xff]
    %v400 = vld [vmem:[#allocation5] sm:$0xff]
    %v401 = vld [vmem:[#allocation5 + $0x8] sm:$0xff]
    %v402 = vld [vmem:[#allocation5 + $0x10] sm:$0xff]
    %v403 = vld [vmem:[#allocation5 + $0x18] sm:$0xff]
    %v404 = vld [vmem:[#allocation5 + $0x20] sm:$0xff]
    %v405 = vld [vmem:[#allocation5 + $0x28] sm:$0xff]
    %v406 = vld [vmem:[#allocation5 + $0x30] sm:$0xff]
    %v407 = vld [vmem:[#allocation5 + $0x38] sm:$0xff]
    %v408 = vld [vmem:[#allocation5 + $0x40] sm:$0xff]
    %v409 = vld [vmem:[#allocation5 + $0x48] sm:$0xff]
    %v410 = vld [vmem:[#allocation5 + $0x50] sm:$0xff]
    %v411 = vld [vmem:[#allocation5 + $0x58] sm:$0xff]
    %v412 = vld [vmem:[#allocation5 + $0x60] sm:$0xff]
    %v413 = vld [vmem:[#allocation5 + $0x68] sm:$0xff]
    %v414 = vld [vmem:[#allocation5 + $0x70] sm:$0xff]
    %v415 = vld [vmem:[#allocation5 + $0x78] sm:$0xff]
    %v416 = vld [vmem:[#allocation5 + $0x80] sm:$0xff]
    %v417 = vld [vmem:[#allocation5 + $0x88] sm:$0xff]
    %v418 = vld [vmem:[#allocation5 + $0x90] sm:$0xff]
    %v419 = vld [vmem:[#allocation5 + $0x98] sm:$0xff]
    %v420 = vld [vmem:[#allocation5 + $0xa0] sm:$0xff]
    %v421 = vld [vmem:[#allocation5 + $0xa8] sm:$0xff]
    %v422 = vld [vmem:[#allocation5 + $0xb0] sm:$0xff]
    %v423 = vld [vmem:[#allocation5 + $0xb8] sm:$0xff]
    %v424 = vld [vmem:[#allocation5 + $0xc0] sm:$0xff]
    %v425 = vld [vmem:[#allocation5 + $0xc8] sm:$0xff]
    %v426 = vld [vmem:[#allocation5 + $0xd0] sm:$0xff]
    %v427 = vld [vmem:[#allocation5 + $0xd8] sm:$0xff]
    %v428 = vld [vmem:[#allocation5 + $0xe0] sm:$0xff]
    %v429 = vld [vmem:[#allocation5 + $0xe8] sm:$0xff]
    %v430 = vld [vmem:[#allocation5 + $0xf0] sm:$0xff]
    %v431 = vld [vmem:[#allocation5 + $0xf8] sm:$0xff]
    %v432 = vld [vmem:[#allocation5 + $0x100] sm:$0xff]
    %v433 = vld [vmem:[#allocation5 + $0x108] sm:$0xff]
    %v434 = vld [vmem:[#allocation5 + $0x110] sm:$0xff]
    %v435 = vld [vmem:[#allocation5 + $0x118] sm:$0xff]
    %v436 = vld [vmem:[#allocation5 + $0x120] sm:$0xff]
    %v437 = vld [vmem:[#allocation5 + $0x128] sm:$0xff]
    %v438 = vld [vmem:[#allocation5 + $0x130] sm:$0xff]
    %v439 = vld [vmem:[#allocation5 + $0x138] sm:$0xff]
    %v440 = vld [vmem:[#allocation5 + $0x140] sm:$0xff]
    %v441 = vld [vmem:[#allocation5 + $0x148] sm:$0xff]
    %v442 = vld [vmem:[#allocation5 + $0x150] sm:$0xff]
    %v443 = vld [vmem:[#allocation5 + $0x158] sm:$0xff]
    %v444 = vld [vmem:[#allocation5 + $0x160] sm:$0xff]
    %v445 = vld [vmem:[#allocation5 + $0x168] sm:$0xff]
    %v446 = vld [vmem:[#allocation5 + $0x170] sm:$0xff]
    %v447 = vld [vmem:[#allocation5 + $0x178] sm:$0xff]
    %v448 = vld [vmem:[#allocation5 + $0x180] sm:$0xff]
    %v449 = vld [vmem:[#allocation5 + $0x188] sm:$0xff]
    %v450 = vld [vmem:[#allocation5 + $0x190] sm:$0xff]
    %v451 = vld [vmem:[#allocation5 + $0x198] sm:$0xff]
    %v452 = vld [vmem:[#allocation5 + $0x1a0] sm:$0xff]
    %v453 = vld [vmem:[#allocation5 + $0x1a8] sm:$0xff]
    %v454 = vld [vmem:[#allocation5 + $0x1b0] sm:$0xff]
    %v455 = vld [vmem:[#allocation5 + $0x1b8] sm:$0xff]
    %v456 = vld [vmem:[#allocation5 + $0x1c0] sm:$0xff]
    %v457 = vld [vmem:[#allocation5 + $0x1c8] sm:$0xff]
    %v458 = vld [vmem:[#allocation5 + $0x1d0] sm:$0xff]
    %v459 = vld [vmem:[#allocation5 + $0x1d8] sm:$0xff]
    %v460 = vld [vmem:[#allocation5 + $0x1e0] sm:$0xff]
    %v461 = vld [vmem:[#allocation5 + $0x1e8] sm:$0xff]
    %v462 = vld [vmem:[#allocation5 + $0x1f0] sm:$0xff]
    %v463 = vld [vmem:[#allocation5 + $0x1f8] sm:$0xff]
    %464 = vmatprep.subr.mxu0 %v401
    %465 = vmatpush1.msra.mxu0 %v400
    %466 = vmatprep.subr.mxu0 %v405
    %467 = vmatpush1.msra.mxu0 %v404
    %468 = vmatprep.subr.mxu0 %v409
    %469 = vmatpush1.msra.mxu0 %v408
    %470 = vmatprep.subr.mxu0 %v413
    %471 = vmatpush1.msra.mxu0 %v412
    %472 = vmatprep.subr.mxu0 %v417
    %473 = vmatpush1.msra.mxu0 %v416
    %474 = vmatprep.subr.mxu0 %v421
    %475 = vmatpush1.msra.mxu0 %v420
    %476 = vmatprep.subr.mxu0 %v425
    %477 = vmatpush1.msra.mxu0 %v424
    %478 = vmatprep.subr.mxu0 %v429
    %479 = vmatpush1.msra.mxu0 %v428
    %480 = vmatprep.subr.mxu0 %v433
    %481 = vmatpush1.msra.mxu0 %v432
    %482 = vmatprep.subr.mxu0 %v437
    %483 = vmatpush1.msra.mxu0 %v436
    %484 = vmatprep.subr.mxu0 %v441
    %485 = vmatpush1.msra.mxu0 %v440
    %486 = vmatprep.subr.mxu0 %v445
    %487 = vmatpush1.msra.mxu0 %v444
    %488 = vmatprep.subr.mxu0 %v449
    %489 = vmatpush1.msra.mxu0 %v448
    %490 = vmatprep.subr.mxu0 %v453
    %491 = vmatpush1.msra.mxu0 %v452
    %492 = vmatprep.subr.mxu0 %v457
    %493 = vmatpush1.msra.mxu0 %v456
    %494 = vmatprep.subr.mxu0 %v461
    %495 = vmatpush1.msra.mxu0 %v460
    %496 = vmatprep.subr.mxu0 0.0
    %497 = vmatpush1.msra.mxu0 0.0
    %498 = vmatprep.subr.mxu0 0.0
    %499 = vmatpush1.msra.mxu0 0.0
    %500 = vmatprep.subr.mxu0 0.0
    %501 = vmatpush1.msra.mxu0 0.0
    %502 = vmatprep.subr.mxu0 0.0
    %503 = vmatpush1.msra.mxu0 0.0
    %504 = vmatprep.subr.mxu0 0.0
    %505 = vmatpush1.msra.mxu0 0.0
    %506 = vmatprep.subr.mxu0 0.0
    %507 = vmatpush1.msra.mxu0 0.0
    %508 = vmatprep.subr.mxu0 0.0
    %509 = vmatpush1.msra.mxu0 0.0
    %510 = vmatprep.subr.mxu0 0.0
    %511 = vmatpush1.msra.mxu0 0.0
    %512 = vmatprep.subr.mxu0 0.0
    %513 = vmatpush1.msra.mxu0 0.0
    %514 = vmatprep.subr.mxu0 0.0
    %515 = vmatpush1.msra.mxu0 0.0
    %516 = vmatprep.subr.mxu0 0.0
    %517 = vmatpush1.msra.mxu0 0.0
    %518 = vmatprep.subr.mxu0 0.0
    %519 = vmatpush1.msra.mxu0 0.0
    %520 = vmatprep.subr.mxu0 0.0
    %521 = vmatpush1.msra.mxu0 0.0
    %522 = vmatprep.subr.mxu0 0.0
    %523 = vmatpush1.msra.mxu0 0.0
    %524 = vmatprep.subr.mxu0 0.0
    %525 = vmatpush1.msra.mxu0 0.0
    %526 = vmatprep.subr.mxu0 0.0
    %527 = vmatpush1.msra.mxu0 0.0
    %528 = vmatprep.mubr.f32.mxu0 0.0
    %529 = vmatmul.mubr.f32.gmra.mrb[0].mxu0 %v388
    %v530 = vpop.f32.mrb[0].mxu0
    %v531 = vadd.f32 0.0, %v530
    %v532 = vpop.f32.mrb[0].mxu0
    %v533 = vadd.f32 0.0, %v532
    %534 = vmatprep.mubr.f32.mxu0 0.0
    %535 = vmatmul.mubr.f32.gmra.mrb[0].mxu0 %v389
    %v536 = vpop.f32.mrb[0].mxu0
    %v537 = vadd.f32 0.0, %v536
    %v538 = vpop.f32.mrb[0].mxu0
    %v539 = vadd.f32 0.0, %v538
    %540 = vdwg.mxu0
    %541 = vmatprep.subr.mxu0 %v403
    %542 = vmatpush1.msra.mxu0 %v402
    %543 = vmatprep.subr.mxu0 %v407
    %544 = vmatpush1.msra.mxu0 %v406
    %545 = vmatprep.subr.mxu0 %v411
    %546 = vmatpush1.msra.mxu0 %v410
    %547 = vmatprep.subr.mxu0 %v415
    %548 = vmatpush1.msra.mxu0 %v414
    %549 = vmatprep.subr.mxu0 %v419
    %550 = vmatpush1.msra.mxu0 %v418
    %551 = vmatprep.subr.mxu0 %v423
    %552 = vmatpush1.msra.mxu0 %v422
    %553 = vmatprep.subr.mxu0 %v427
    %554 = vmatpush1.msra.mxu0 %v426
    %555 = vmatprep.subr.mxu0 %v431
    %556 = vmatpush1.msra.mxu0 %v430
    %557 = vmatprep.subr.mxu0 %v435
    %558 = vmatpush1.msra.mxu0 %v434
    %559 = vmatprep.subr.mxu0 %v439
    %560 = vmatpush1.msra.mxu0 %v438
    %561 = vmatprep.subr.mxu0 %v443
    %562 = vmatpush1.msra.mxu0 %v442
    %563 = vmatprep.subr.mxu0 %v447
    %564 = vmatpush1.msra.mxu0 %v446
    %565 = vmatprep.subr.mxu0 %v451
    %566 = vmatpush1.msra.mxu0 %v450
    %567 = vmatprep.subr.mxu0 %v455
    %568 = vmatpush1.msra.mxu0 %v454
    %569 = vmatprep.subr.mxu0 %v459
    %570 = vmatpush1.msra.mxu0 %v458
    %571 = vmatprep.subr.mxu0 %v463
    %572 = vmatpush1.msra.mxu0 %v462
    %573 = vmatprep.subr.mxu0 0.0
    %574 = vmatpush1.msra.mxu0 0.0
    %575 = vmatprep.subr.mxu0 0.0
    %576 = vmatpush1.msra.mxu0 0.0
    %577 = vmatprep.subr.mxu0 0.0
    %578 = vmatpush1.msra.mxu0 0.0
    %579 = vmatprep.subr.mxu0 0.0
    %580 = vmatpush1.msra.mxu0 0.0
    %581 = vmatprep.subr.mxu0 0.0
    %582 = vmatpush1.msra.mxu0 0.0
    %583 = vmatprep.subr.mxu0 0.0
    %584 = vmatpush1.msra.mxu0 0.0
    %585 = vmatprep.subr.mxu0 0.0
    %586 = vmatpush1.msra.mxu0 0.0
    %587 = vmatprep.subr.mxu0 0.0
    %588 = vmatpush1.msra.mxu0 0.0
    %589 = vmatprep.subr.mxu0 0.0
    %590 = vmatpush1.msra.mxu0 0.0
    %591 = vmatprep.subr.mxu0 0.0
    %592 = vmatpush1.msra.mxu0 0.0
    %593 = vmatprep.subr.mxu0 0.0
    %594 = vmatpush1.msra.mxu0 0.0
    %595 = vmatprep.subr.mxu0 0.0
    %596 = vmatpush1.msra.mxu0 0.0
    %597 = vmatprep.subr.mxu0 0.0
    %598 = vmatpush1.msra.mxu0 0.0
    %599 = vmatprep.subr.mxu0 0.0
    %600 = vmatpush1.msra.mxu0 0.0
    %601 = vmatprep.subr.mxu0 0.0
    %602 = vmatpush1.msra.mxu0 0.0
    %603 = vmatprep.subr.mxu0 0.0
    %604 = vmatpush1.msra.mxu0 0.0
    %605 = vmatprep.mubr.f32.mxu0 0.0
    %606 = vmatmul.mubr.f32.gmra.mrb[0].mxu0 %v388
    %v607 = vpop.f32.mrb[0].mxu0
    %v608 = vadd.f32 0.0, %v607
    %v609 = vpop.f32.mrb[0].mxu0
    %v610 = vadd.f32 0.0, %v609
    %611 = vmatprep.mubr.f32.mxu0 0.0
    %612 = vmatmul.mubr.f32.gmra.mrb[0].mxu0 %v389
    %v613 = vpop.f32.mrb[0].mxu0
    %v614 = vadd.f32 0.0, %v613
    %v615 = vpop.f32.mrb[0].mxu0
    %v616 = vadd.f32 0.0, %v615
    %617 = vdwg.mxu0
    %v618 = vadd.f32 %v392, %v531
    %v619 = vadd.f32 %v393, %v533
    %v620 = vadd.f32 %v394, %v608
    %v621 = vadd.f32 %v395, %v610
    %v622 = vadd.f32 %v396, %v537
    %v623 = vadd.f32 %v397, %v539
    %v624 = vadd.f32 %v398, %v614
    %v625 = vadd.f32 %v399, %v616
    %v626 = vxor.u32 %v618, 2147483648
    %v627 = vxor.u32 %v619, 2147483648
    %v628 = vxor.u32 %v620, 2147483648
    %v629 = vxor.u32 %v622, 2147483648
    %v630 = vxor.u32 %v623, 2147483648
    %v631 = vxor.u32 %v624, 2147483648
    %v632 = vmul.f32 %v626, 1.442695
    %v633 = vpow.pop %v632
    %v634 = vmul.f32 %v627, 1.442695
    %v635 = vpow.pop %v634
    %v636 = vmul.f32 %v628, 1.442695
    %v637 = vpow.pop %v636
    %v638 = vmul.f32 %v629, 1.442695
    %v639 = vpow.pop %v638
    %v640 = vmul.f32 %v630, 1.442695
    %v641 = vpow.pop %v640
    %v642 = vmul.f32 %v631, 1.442695
    %v643 = vpow.pop %v642
    %v644 = vadd.f32 %v633, 1.0
    %v645 = vadd.f32 %v635, 1.0
    %v646 = vadd.f32 %v637, 1.0
    %v647 = vadd.f32 %v639, 1.0
    %v648 = vadd.f32 %v641, 1.0
    %v649 = vadd.f32 %v643, 1.0
    %v650 = vrcp.pop %v644
    %v651 = vmul.f32 1.0, %v650
    %v652 = vrcp.pop %v645
    %v653 = vmul.f32 1.0, %v652
    %v654 = vrcp.pop %v646
    %v655 = vmul.f32 1.0, %v654
    %v656 = vrcp.pop %v647
    %v657 = vmul.f32 1.0, %v656
    %v658 = vrcp.pop %v648
    %v659 = vmul.f32 1.0, %v658
    %v660 = vrcp.pop %v649
    %v661 = vmul.f32 1.0, %v660
    %v662 = vtanh.pop %v621
    %v663 = vtanh.pop %v625
    %v664 = vmul.f32 %v653, %v390
    %v665 = vmul.f32 %v659, %v391
    %v666 = vmul.f32 %v651, %v662
    %v667 = vmul.f32 %v657, %v663
    %v668 = vadd.f32 %v664, %v666
    %v669 = vadd.f32 %v665, %v667
    %v670 = vtanh.pop %v668
    %v671 = vtanh.pop %v669
    %v672 = vmul.f32 %v655, %v670
    %v673 = vmul.f32 %v661, %v671
    %674 = vst [vmem:[%s10] sm:$0xff] %v668
    %675 = vst [vmem:[%s10 + $0x8] sm:$0xff] %v669
    %676 = vst [vmem:[%s9] sm:$0xff] %v672
    %677 = vst [vmem:[%s9 + $0x8] sm:$0xff] %v673
    %678 = vst [vmem:[#allocation3] sm:$0xff] %v672
    %679 = vst [vmem:[#allocation3 + $0x8] sm:$0xff] %v673
    %v680 = vld [vmem:[%s9] sm:$0xff]
    %v681 = vld [vmem:[%s9 + $0x8] sm:$0xff]
    %v682 = vld [vmem:[%s10] sm:$0xff]
    %v683 = vld [vmem:[%s10 + $0x8] sm:$0xff]
    %s684 = scalar_lea.vmem [#allocation2], 64
    %v685 = vld [vmem:[%s684] sm:$0xff]
    %v686 = vld [vmem:[%s684 + $0x8] sm:$0xff]
    %v687 = vld [vmem:[%s684 + $0x10] sm:$0xff]
    %v688 = vld [vmem:[%s684 + $0x18] sm:$0xff]
    %v689 = vld [vmem:[%s684 + $0x20] sm:$0xff]
    %v690 = vld [vmem:[%s684 + $0x28] sm:$0xff]
    %v691 = vld [vmem:[%s684 + $0x30] sm:$0xff]
    %v692 = vld [vmem:[%s684 + $0x38] sm:$0xff]
    %v693 = vld [vmem:[#allocation5] sm:$0xff]
    %v694 = vld [vmem:[#allocation5 + $0x8] sm:$0xff]
    %v695 = vld [vmem:[#allocation5 + $0x10] sm:$0xff]
    %v696 = vld [vmem:[#allocation5 + $0x18] sm:$0xff]
    %v697 = vld [vmem:[#allocation5 + $0x20] sm:$0xff]
    %v698 = vld [vmem:[#allocation5 + $0x28] sm:$0xff]
    %v699 = vld [vmem:[#allocation5 + $0x30] sm:$0xff]
    %v700 = vld [vmem:[#allocation5 + $0x38] sm:$0xff]
    %v701 = vld [vmem:[#allocation5 + $0x40] sm:$0xff]
    %v702 = vld [vmem:[#allocation5 + $0x48] sm:$0xff]
    %v703 = vld [vmem:[#allocation5 + $0x50] sm:$0xff]
    %v704 = vld [vmem:[#allocation5 + $0x58] sm:$0xff]
    %v705 = vld [vmem:[#allocation5 + $0x60] sm:$0xff]
    %v706 = vld [vmem:[#allocation5 + $0x68] sm:$0xff]
    %v707 = vld [vmem:[#allocation5 + $0x70] sm:$0xff]
    %v708 = vld [vmem:[#allocation5 + $0x78] sm:$0xff]
    %v709 = vld [vmem:[#allocation5 + $0x80] sm:$0xff]
    %v710 = vld [vmem:[#allocation5 + $0x88] sm:$0xff]
    %v711 = vld [vmem:[#allocation5 + $0x90] sm:$0xff]
    %v712 = vld [vmem:[#allocation5 + $0x98] sm:$0xff]
    %v713 = vld [vmem:[#allocation5 + $0xa0] sm:$0xff]
    %v714 = vld [vmem:[#allocation5 + $0xa8] sm:$0xff]
    %v715 = vld [vmem:[#allocation5 + $0xb0] sm:$0xff]
    %v716 = vld [vmem:[#allocation5 + $0xb8] sm:$0xff]
    %v717 = vld [vmem:[#allocation5 + $0xc0] sm:$0xff]
    %v718 = vld [vmem:[#allocation5 + $0xc8] sm:$0xff]
    %v719 = vld [vmem:[#allocation5 + $0xd0] sm:$0xff]
    %v720 = vld [vmem:[#allocation5 + $0xd8] sm:$0xff]
    %v721 = vld [vmem:[#allocation5 + $0xe0] sm:$0xff]
    %v722 = vld [vmem:[#allocation5 + $0xe8] sm:$0xff]
    %v723 = vld [vmem:[#allocation5 + $0xf0] sm:$0xff]
    %v724 = vld [vmem:[#allocation5 + $0xf8] sm:$0xff]
    %v725 = vld [vmem:[#allocation5 + $0x100] sm:$0xff]
    %v726 = vld [vmem:[#allocation5 + $0x108] sm:$0xff]
    %v727 = vld [vmem:[#allocation5 + $0x110] sm:$0xff]
    %v728 = vld [vmem:[#allocation5 + $0x118] sm:$0xff]
    %v729 = vld [vmem:[#allocation5 + $0x120] sm:$0xff]
    %v730 = vld [vmem:[#allocation5 + $0x128] sm:$0xff]
    %v731 = vld [vmem:[#allocation5 + $0x130] sm:$0xff]
    %v732 = vld [vmem:[#allocation5 + $0x138] sm:$0xff]
    %v733 = vld [vmem:[#allocation5 + $0x140] sm:$0xff]
    %v734 = vld [vmem:[#allocation5 + $0x148] sm:$0xff]
    %v735 = vld [vmem:[#allocation5 + $0x150] sm:$0xff]
    %v736 = vld [vmem:[#allocation5 + $0x158] sm:$0xff]
    %v737 = vld [vmem:[#allocation5 + $0x160] sm:$0xff]
    %v738 = vld [vmem:[#allocation5 + $0x168] sm:$0xff]
    %v739 = vld [vmem:[#allocation5 + $0x170] sm:$0xff]
    %v740 = vld [vmem:[#allocation5 + $0x178] sm:$0xff]
    %v741 = vld [vmem:[#allocation5 + $0x180] sm:$0xff]
    %v742 = vld [vmem:[#allocation5 + $0x188] sm:$0xff]
    %v743 = vld [vmem:[#allocation5 + $0x190] sm:$0xff]
    %v744 = vld [vmem:[#allocation5 + $0x198] sm:$0xff]
    %v745 = vld [vmem:[#allocation5 + $0x1a0] sm:$0xff]
    %v746 = vld [vmem:[#allocation5 + $0x1a8] sm:$0xff]
    %v747 = vld [vmem:[#allocation5 + $0x1b0] sm:$0xff]
    %v748 = vld [vmem:[#allocation5 + $0x1b8] sm:$0xff]
    %v749 = vld [vmem:[#allocation5 + $0x1c0] sm:$0xff]
    %v750 = vld [vmem:[#allocation5 + $0x1c8] sm:$0xff]
    %v751 = vld [vmem:[#allocation5 + $0x1d0] sm:$0xff]
    %v752 = vld [vmem:[#allocation5 + $0x1d8] sm:$0xff]
    %v753 = vld [vmem:[#allocation5 + $0x1e0] sm:$0xff]
    %v754 = vld [vmem:[#allocation5 + $0x1e8] sm:$0xff]
    %v755 = vld [vmem:[#allocation5 + $0x1f0] sm:$0xff]
    %v756 = vld [vmem:[#allocation5 + $0x1f8] sm:$0xff]
    %757 = vmatprep.subr.mxu0 %v694
    %758 = vmatpush1.msra.mxu0 %v693
    %759 = vmatprep.subr.mxu0 %v698
    %760 = vmatpush1.msra.mxu0 %v697
    %761 = vmatprep.subr.mxu0 %v702
    %762 = vmatpush1.msra.mxu0 %v701
    %763 = vmatprep.subr.mxu0 %v706
    %764 = vmatpush1.msra.mxu0 %v705
    %765 = vmatprep.subr.mxu0 %v710
    %766 = vmatpush1.msra.mxu0 %v709
    %767 = vmatprep.subr.mxu0 %v714
    %768 = vmatpush1.msra.mxu0 %v713
    %769 = vmatprep.subr.mxu0 %v718
    %770 = vmatpush1.msra.mxu0 %v717
    %771 = vmatprep.subr.mxu0 %v722
    %772 = vmatpush1.msra.mxu0 %v721
    %773 = vmatprep.subr.mxu0 %v726
    %774 = vmatpush1.msra.mxu0 %v725
    %775 = vmatprep.subr.mxu0 %v730
    %776 = vmatpush1.msra.mxu0 %v729
    %777 = vmatprep.subr.mxu0 %v734
    %778 = vmatpush1.msra.mxu0 %v733
    %779 = vmatprep.subr.mxu0 %v738
    %780 = vmatpush1.msra.mxu0 %v737
    %781 = vmatprep.subr.mxu0 %v742
    %782 = vmatpush1.msra.mxu0 %v741
    %783 = vmatprep.subr.mxu0 %v746
    %784 = vmatpush1.msra.mxu0 %v745
    %785 = vmatprep.subr.mxu0 %v750
    %786 = vmatpush1.msra.mxu0 %v749
    %787 = vmatprep.subr.mxu0 %v754
    %788 = vmatpush1.msra.mxu0 %v753
    %789 = vmatprep.subr.mxu0 0.0
    %790 = vmatpush1.msra.mxu0 0.0
    %791 = vmatprep.subr.mxu0 0.0
    %792 = vmatpush1.msra.mxu0 0.0
    %793 = vmatprep.subr.mxu0 0.0
    %794 = vmatpush1.msra.mxu0 0.0
    %795 = vmatprep.subr.mxu0 0.0
    %796 = vmatpush1.msra.mxu0 0.0
    %797 = vmatprep.subr.mxu0 0.0
    %798 = vmatpush1.msra.mxu0 0.0
    %799 = vmatprep.subr.mxu0 0.0
    %800 = vmatpush1.msra.mxu0 0.0
    %801 = vmatprep.subr.mxu0 0.0
    %802 = vmatpush1.msra.mxu0 0.0
    %803 = vmatprep.subr.mxu0 0.0
    %804 = vmatpush1.msra.mxu0 0.0
    %805 = vmatprep.subr.mxu0 0.0
    %806 = vmatpush1.msra.mxu0 0.0
    %807 = vmatprep.subr.mxu0 0.0
    %808 = vmatpush1.msra.mxu0 0.0
    %809 = vmatprep.subr.mxu0 0.0
    %810 = vmatpush1.msra.mxu0 0.0
    %811 = vmatprep.subr.mxu0 0.0
    %812 = vmatpush1.msra.mxu0 0.0
    %813 = vmatprep.subr.mxu0 0.0
    %814 = vmatpush1.msra.mxu0 0.0
    %815 = vmatprep.subr.mxu0 0.0
    %816 = vmatpush1.msra.mxu0 0.0
    %817 = vmatprep.subr.mxu0 0.0
    %818 = vmatpush1.msra.mxu0 0.0
    %819 = vmatprep.subr.mxu0 0.0
    %820 = vmatpush1.msra.mxu0 0.0
    %821 = vmatprep.mubr.f32.mxu0 0.0
    %822 = vmatmul.mubr.f32.gmra.mrb[0].mxu0 %v680
    %v823 = vpop.f32.mrb[0].mxu0
    %v824 = vadd.f32 0.0, %v823
    %v825 = vpop.f32.mrb[0].mxu0
    %v826 = vadd.f32 0.0, %v825
    %827 = vmatprep.mubr.f32.mxu0 0.0
    %828 = vmatmul.mubr.f32.gmra.mrb[0].mxu0 %v681
    %v829 = vpop.f32.mrb[0].mxu0
    %v830 = vadd.f32 0.0, %v829
    %v831 = vpop.f32.mrb[0].mxu0
    %v832 = vadd.f32 0.0, %v831
    %833 = vdwg.mxu0
    %834 = vmatprep.subr.mxu0 %v696
    %835 = vmatpush1.msra.mxu0 %v695
    %836 = vmatprep.subr.mxu0 %v700
    %837 = vmatpush1.msra.mxu0 %v699
    %838 = vmatprep.subr.mxu0 %v704
    %839 = vmatpush1.msra.mxu0 %v703
    %840 = vmatprep.subr.mxu0 %v708
    %841 = vmatpush1.msra.mxu0 %v707
    %842 = vmatprep.subr.mxu0 %v712
    %843 = vmatpush1.msra.mxu0 %v711
    %844 = vmatprep.subr.mxu0 %v716
    %845 = vmatpush1.msra.mxu0 %v715
    %846 = vmatprep.subr.mxu0 %v720
    %847 = vmatpush1.msra.mxu0 %v719
    %848 = vmatprep.subr.mxu0 %v724
    %849 = vmatpush1.msra.mxu0 %v723
    %850 = vmatprep.subr.mxu0 %v728
    %851 = vmatpush1.msra.mxu0 %v727
    %852 = vmatprep.subr.mxu0 %v732
    %853 = vmatpush1.msra.mxu0 %v731
    %854 = vmatprep.subr.mxu0 %v736
    %855 = vmatpush1.msra.mxu0 %v735
    %856 = vmatprep.subr.mxu0 %v740
    %857 = vmatpush1.msra.mxu0 %v739
    %858 = vmatprep.subr.mxu0 %v744
    %859 = vmatpush1.msra.mxu0 %v743
    %860 = vmatprep.subr.mxu0 %v748
    %861 = vmatpush1.msra.mxu0 %v747
    %862 = vmatprep.subr.mxu0 %v752
    %863 = vmatpush1.msra.mxu0 %v751
    %864 = vmatprep.subr.mxu0 %v756
    %865 = vmatpush1.msra.mxu0 %v755
    %866 = vmatprep.subr.mxu0 0.0
    %867 = vmatpush1.msra.mxu0 0.0
    %868 = vmatprep.subr.mxu0 0.0
    %869 = vmatpush1.msra.mxu0 0.0
    %870 = vmatprep.subr.mxu0 0.0
    %871 = vmatpush1.msra.mxu0 0.0
    %872 = vmatprep.subr.mxu0 0.0
    %873 = vmatpush1.msra.mxu0 0.0
    %874 = vmatprep.subr.mxu0 0.0
    %875 = vmatpush1.msra.mxu0 0.0
    %876 = vmatprep.subr.mxu0 0.0
    %877 = vmatpush1.msra.mxu0 0.0
    %878 = vmatprep.subr.mxu0 0.0
    %879 = vmatpush1.msra.mxu0 0.0
    %880 = vmatprep.subr.mxu0 0.0
    %881 = vmatpush1.msra.mxu0 0.0
    %882 = vmatprep.subr.mxu0 0.0
    %883 = vmatpush1.msra.mxu0 0.0
    %884 = vmatprep.subr.mxu0 0.0
    %885 = vmatpush1.msra.mxu0 0.0
    %886 = vmatprep.subr.mxu0 0.0
    %887 = vmatpush1.msra.mxu0 0.0
    %888 = vmatprep.subr.mxu0 0.0
    %889 = vmatpush1.msra.mxu0 0.0
    %890 = vmatprep.subr.mxu0 0.0
    %891 = vmatpush1.msra.mxu0 0.0
    %892 = vmatprep.subr.mxu0 0.0
    %893 = vmatpush1.msra.mxu0 0.0
    %894 = vmatprep.subr.mxu0 0.0
    %895 = vmatpush1.msra.mxu0 0.0
    %896 = vmatprep.subr.mxu0 0.0
    %897 = vmatpush1.msra.mxu0 0.0
    %898 = vmatprep.mubr.f32.mxu0 0.0
    %899 = vmatmul.mubr.f32.gmra.mrb[0].mxu0 %v680
    %v900 = vpop.f32.mrb[0].mxu0
    %v901 = vadd.f32 0.0, %v900
    %v902 = vpop.f32.mrb[0].mxu0
    %v903 = vadd.f32 0.0, %v902
    %904 = vmatprep.mubr.f32.mxu0 0.0
    %905 = vmatmul.mubr.f32.gmra.mrb[0].mxu0 %v681
    %v906 = vpop.f32.mrb[0].mxu0
    %v907 = vadd.f32 0.0, %v906
    %v908 = vpop.f32.mrb[0].mxu0
    %v909 = vadd.f32 0.0, %v908
    %910 = vdwg.mxu0
    %v911 = vadd.f32 %v685, %v824
    %v912 = vadd.f32 %v686, %v826
    %v913 = vadd.f32 %v687, %v901
    %v914 = vadd.f32 %v688, %v903
    %v915 = vadd.f32 %v689, %v830
    %v916 = vadd.f32 %v690, %v832
    %v917 = vadd.f32 %v691, %v907
    %v918 = vadd.f32 %v692, %v909
    %v919 = vxor.u32 %v911, 2147483648
    %v920 = vxor.u32 %v912, 2147483648
    %v921 = vxor.u32 %v913, 2147483648
    %v922 = vxor.u32 %v915, 2147483648
    %v923 = vxor.u32 %v916, 2147483648
    %v924 = vxor.u32 %v917, 2147483648
    %v925 = vmul.f32 %v919, 1.442695
    %v926 = vpow.pop %v925
    %v927 = vmul.f32 %v920, 1.442695
    %v928 = vpow.pop %v927
    %v929 = vmul.f32 %v921, 1.442695
    %v930 = vpow.pop %v929
    %v931 = vmul.f32 %v922, 1.442695
    %v932 = vpow.pop %v931
    %v933 = vmul.f32 %v923, 1.442695
    %v934 = vpow.pop %v933
    %v935 = vmul.f32 %v924, 1.442695
    %v936 = vpow.pop %v935
    %v937 = vadd.f32 %v926, 1.0
    %v938 = vadd.f32 %v928, 1.0
    %v939 = vadd.f32 %v930, 1.0
    %v940 = vadd.f32 %v932, 1.0
    %v941 = vadd.f32 %v934, 1.0
    %v942 = vadd.f32 %v936, 1.0
    %v943 = vrcp.pop %v937
    %v944 = vmul.f32 1.0, %v943
    %v945 = vrcp.pop %v938
    %v946 = vmul.f32 1.0, %v945
    %v947 = vrcp.pop %v939
    %v948 = vmul.f32 1.0, %v947
    %v949 = vrcp.pop %v940
    %v950 = vmul.f32 1.0, %v949
    %v951 = vrcp.pop %v941
    %v952 = vmul.f32 1.0, %v951
    %v953 = vrcp.pop %v942
    %v954 = vmul.f32 1.0, %v953
    %v955 = vtanh.pop %v914
    %v956 = vtanh.pop %v918
    %v957 = vmul.f32 %v946, %v682
    %v958 = vmul.f32 %v952, %v683
    %v959 = vmul.f32 %v944, %v955
    %v960 = vmul.f32 %v950, %v956
    %v961 = vadd.f32 %v957, %v959
    %v962 = vadd.f32 %v958, %v960
    %v963 = vtanh.pop %v961
    %v964 = vtanh.pop %v962
    %v965 = vmul.f32 %v948, %v963
    %v966 = vmul.f32 %v954, %v964
    %967 = vst [vmem:[%s10] sm:$0xff] %v961
    %968 = vst [vmem:[%s10 + $0x8] sm:$0xff] %v962
    %969 = vst [vmem:[%s9] sm:$0xff] %v965
    %970 = vst [vmem:[%s9 + $0x8] sm:$0xff] %v966
    %s971 = scalar_lea.vmem [#allocation3], 16
    %972 = vst [vmem:[%s971] sm:$0xff] %v965
    %973 = vst [vmem:[%s971 + $0x8] sm:$0xff] %v966
    %v974 = vld [vmem:[%s9] sm:$0xff]
    %v975 = vld [vmem:[%s9 + $0x8] sm:$0xff]
    %v976 = vld [vmem:[%s10] sm:$0xff]
    %v977 = vld [vmem:[%s10 + $0x8] sm:$0xff]
    %s978 = scalar_lea.vmem [#allocation2], 128
    %v979 = vld [vmem:[%s978] sm:$0xff]
    %v980 = vld [vmem:[%s978 + $0x8] sm:$0xff]
    %v981 = vld [vmem:[%s978 + $0x10] sm:$0xff]
    %v982 = vld [vmem:[%s978 + $0x18] sm:$0xff]
    %v983 = vld [vmem:[%s978 + $0x20] sm:$0xff]
    %v984 = vld [vmem:[%s978 + $0x28] sm:$0xff]
    %v985 = vld [vmem:[%s978 + $0x30] sm:$0xff]
    %v986 = vld [vmem:[%s978 + $0x38] sm:$0xff]
    %v987 = vld [vmem:[#allocation5] sm:$0xff]
    %v988 = vld [vmem:[#allocation5 + $0x8] sm:$0xff]
    %v989 = vld [vmem:[#allocation5 + $0x10] sm:$0xff]
    %v990 = vld [vmem:[#allocation5 + $0x18] sm:$0xff]
    %v991 = vld [vmem:[#allocation5 + $0x20] sm:$0xff]
    %v992 = vld [vmem:[#allocation5 + $0x28] sm:$0xff]
    %v993 = vld [vmem:[#allocation5 + $0x30] sm:$0xff]
    %v994 = vld [vmem:[#allocation5 + $0x38] sm:$0xff]
    %v995 = vld [vmem:[#allocation5 + $0x40] sm:$0xff]
    %v996 = vld [vmem:[#allocation5 + $0x48] sm:$0xff]
    %v997 = vld [vmem:[#allocation5 + $0x50] sm:$0xff]
    %v998 = vld [vmem:[#allocation5 + $0x58] sm:$0xff]
    %v999 = vld [vmem:[#allocation5 + $0x60] sm:$0xff]
    %v1000 = vld [vmem:[#allocation5 + $0x68] sm:$0xff]
    %v1001 = vld [vmem:[#allocation5 + $0x70] sm:$0xff]
    %v1002 = vld [vmem:[#allocation5 + $0x78] sm:$0xff]
    %v1003 = vld [vmem:[#allocation5 + $0x80] sm:$0xff]
    %v1004 = vld [vmem:[#allocation5 + $0x88] sm:$0xff]
    %v1005 = vld [vmem:[#allocation5 + $0x90] sm:$0xff]
    %v1006 = vld [vmem:[#allocation5 + $0x98] sm:$0xff]
    %v1007 = vld [vmem:[#allocation5 + $0xa0] sm:$0xff]
    %v1008 = vld [vmem:[#allocation5 + $0xa8] sm:$0xff]
    %v1009 = vld [vmem:[#allocation5 + $0xb0] sm:$0xff]
    %v1010 = vld [vmem:[#allocation5 + $0xb8] sm:$0xff]
    %v1011 = vld [vmem:[#allocation5 + $0xc0] sm:$0xff]
    %v1012 = vld [vmem:[#allocation5 + $0xc8] sm:$0xff]
    %v1013 = vld [vmem:[#allocation5 + $0xd0] sm:$0xff]
    %v1014 = vld [vmem:[#allocation5 + $0xd8] sm:$0xff]
    %v1015 = vld [vmem:[#allocation5 + $0xe0] sm:$0xff]
    %v1016 = vld [vmem:[#allocation5 + $0xe8] sm:$0xff]
    %v1017 = vld [vmem:[#allocation5 + $0xf0] sm:$0xff]
    %v1018 = vld [vmem:[#allocation5 + $0xf8] sm:$0xff]
    %v1019 = vld [vmem:[#allocation5 + $0x100] sm:$0xff]
    %v1020 = vld [vmem:[#allocation5 + $0x108] sm:$0xff]
    %v1021 = vld [vmem:[#allocation5 + $0x110] sm:$0xff]
    %v1022 = vld [vmem:[#allocation5 + $0x118] sm:$0xff]
    %v1023 = vld [vmem:[#allocation5 + $0x120] sm:$0xff]
    %v1024 = vld [vmem:[#allocation5 + $0x128] sm:$0xff]
    %v1025 = vld [vmem:[#allocation5 + $0x130] sm:$0xff]
    %v1026 = vld [vmem:[#allocation5 + $0x138] sm:$0xff]
    %v1027 = vld [vmem:[#allocation5 + $0x140] sm:$0xff]
    %v1028 = vld [vmem:[#allocation5 + $0x148] sm:$0xff]
    %v1029 = vld [vmem:[#allocation5 + $0x150] sm:$0xff]
    %v1030 = vld [vmem:[#allocation5 + $0x158] sm:$0xff]
    %v1031 = vld [vmem:[#allocation5 + $0x160] sm:$0xff]
    %v1032 = vld [vmem:[#allocation5 + $0x168] sm:$0xff]
    %v1033 = vld [vmem:[#allocation5 + $0x170] sm:$0xff]
    %v1034 = vld [vmem:[#allocation5 + $0x178] sm:$0xff]
    %v1035 = vld [vmem:[#allocation5 + $0x180] sm:$0xff]
    %v1036 = vld [vmem:[#allocation5 + $0x188] sm:$0xff]
    %v1037 = vld [vmem:[#allocation5 + $0x190] sm:$0xff]
    %v1038 = vld [vmem:[#allocation5 + $0x198] sm:$0xff]
    %v1039 = vld [vmem:[#allocation5 + $0x1a0] sm:$0xff]
    %v1040 = vld [vmem:[#allocation5 + $0x1a8] sm:$0xff]
    %v1041 = vld [vmem:[#allocation5 + $0x1b0] sm:$0xff]
    %v1042 = vld [vmem:[#allocation5 + $0x1b8] sm:$0xff]
    %v1043 = vld [vmem:[#allocation5 + $0x1c0] sm:$0xff]
    %v1044 = vld [vmem:[#allocation5 + $0x1c8] sm:$0xff]
    %v1045 = vld [vmem:[#allocation5 + $0x1d0] sm:$0xff]
    %v1046 = vld [vmem:[#allocation5 + $0x1d8] sm:$0xff]
    %v1047 = vld [vmem:[#allocation5 + $0x1e0] sm:$0xff]
    %v1048 = vld [vmem:[#allocation5 + $0x1e8] sm:$0xff]
    %v1049 = vld [vmem:[#allocation5 + $0x1f0] sm:$0xff]
    %v1050 = vld [vmem:[#allocation5 + $0x1f8] sm:$0xff]
    %1051 = vmatprep.subr.mxu0 %v988
    %1052 = vmatpush1.msra.mxu0 %v987
    %1053 = vmatprep.subr.mxu0 %v992
    %1054 = vmatpush1.msra.mxu0 %v991
    %1055 = vmatprep.subr.mxu0 %v996
    %1056 = vmatpush1.msra.mxu0 %v995
    %1057 = vmatprep.subr.mxu0 %v1000
    %1058 = vmatpush1.msra.mxu0 %v999
    %1059 = vmatprep.subr.mxu0 %v1004
    %1060 = vmatpush1.msra.mxu0 %v1003
    %1061 = vmatprep.subr.mxu0 %v1008
    %1062 = vmatpush1.msra.mxu0 %v1007
    %1063 = vmatprep.subr.mxu0 %v1012
    %1064 = vmatpush1.msra.mxu0 %v1011
    %1065 = vmatprep.subr.mxu0 %v1016
    %1066 = vmatpush1.msra.mxu0 %v1015
    %1067 = vmatprep.subr.mxu0 %v1020
    %1068 = vmatpush1.msra.mxu0 %v1019
    %1069 = vmatprep.subr.mxu0 %v1024
    %1070 = vmatpush1.msra.mxu0 %v1023
    %1071 = vmatprep.subr.mxu0 %v1028
    %1072 = vmatpush1.msra.mxu0 %v1027
    %1073 = vmatprep.subr.mxu0 %v1032
    %1074 = vmatpush1.msra.mxu0 %v1031
    %1075 = vmatprep.subr.mxu0 %v1036
    %1076 = vmatpush1.msra.mxu0 %v1035
    %1077 = vmatprep.subr.mxu0 %v1040
    %1078 = vmatpush1.msra.mxu0 %v1039
    %1079 = vmatprep.subr.mxu0 %v1044
    %1080 = vmatpush1.msra.mxu0 %v1043
    %1081 = vmatprep.subr.mxu0 %v1048
    %1082 = vmatpush1.msra.mxu0 %v1047
    %1083 = vmatprep.subr.mxu0 0.0
    %1084 = vmatpush1.msra.mxu0 0.0
    %1085 = vmatprep.subr.mxu0 0.0
    %1086 = vmatpush1.msra.mxu0 0.0
    %1087 = vmatprep.subr.mxu0 0.0
    %1088 = vmatpush1.msra.mxu0 0.0
    %1089 = vmatprep.subr.mxu0 0.0
    %1090 = vmatpush1.msra.mxu0 0.0
    %1091 = vmatprep.subr.mxu0 0.0
    %1092 = vmatpush1.msra.mxu0 0.0
    %1093 = vmatprep.subr.mxu0 0.0
    %1094 = vmatpush1.msra.mxu0 0.0
    %1095 = vmatprep.subr.mxu0 0.0
    %1096 = vmatpush1.msra.mxu0 0.0
    %1097 = vmatprep.subr.mxu0 0.0
    %1098 = vmatpush1.msra.mxu0 0.0
    %1099 = vmatprep.subr.mxu0 0.0
    %1100 = vmatpush1.msra.mxu0 0.0
    %1101 = vmatprep.subr.mxu0 0.0
    %1102 = vmatpush1.msra.mxu0 0.0
    %1103 = vmatprep.subr.mxu0 0.0
    %1104 = vmatpush1.msra.mxu0 0.0
    %1105 = vmatprep.subr.mxu0 0.0
    %1106 = vmatpush1.msra.mxu0 0.0
    %1107 = vmatprep.subr.mxu0 0.0
    %1108 = vmatpush1.msra.mxu0 0.0
    %1109 = vmatprep.subr.mxu0 0.0
    %1110 = vmatpush1.msra.mxu0 0.0
    %1111 = vmatprep.subr.mxu0 0.0
    %1112 = vmatpush1.msra.mxu0 0.0
    %1113 = vmatprep.subr.mxu0 0.0
    %1114 = vmatpush1.msra.mxu0 0.0
    %1115 = vmatprep.mubr.f32.mxu0 0.0
    %1116 = vmatmul.mubr.f32.gmra.mrb[0].mxu0 %v974
    %v1117 = vpop.f32.mrb[0].mxu0
    %v1118 = vadd.f32 0.0, %v1117
    %v1119 = vpop.f32.mrb[0].mxu0
    %v1120 = vadd.f32 0.0, %v1119
    %1121 = vmatprep.mubr.f32.mxu0 0.0
    %1122 = vmatmul.mubr.f32.gmra.mrb[0].mxu0 %v975
    %v1123 = vpop.f32.mrb[0].mxu0
    %v1124 = vadd.f32 0.0, %v1123
    %v1125 = vpop.f32.mrb[0].mxu0
    %v1126 = vadd.f32 0.0, %v1125
    %1127 = vdwg.mxu0
    %1128 = vmatprep.subr.mxu0 %v990
    %1129 = vmatpush1.msra.mxu0 %v989
    %1130 = vmatprep.subr.mxu0 %v994
    %1131 = vmatpush1.msra.mxu0 %v993
    %1132 = vmatprep.subr.mxu0 %v998
    %1133 = vmatpush1.msra.mxu0 %v997
    %1134 = vmatprep.subr.mxu0 %v1002
    %1135 = vmatpush1.msra.mxu0 %v1001
    %1136 = vmatprep.subr.mxu0 %v1006
    %1137 = vmatpush1.msra.mxu0 %v1005
    %1138 = vmatprep.subr.mxu0 %v1010
    %1139 = vmatpush1.msra.mxu0 %v1009
    %1140 = vmatprep.subr.mxu0 %v1014
    %1141 = vmatpush1.msra.mxu0 %v1013
    %1142 = vmatprep.subr.mxu0 %v1018
    %1143 = vmatpush1.msra.mxu0 %v1017
    %1144 = vmatprep.subr.mxu0 %v1022
    %1145 = vmatpush1.msra.mxu0 %v1021
    %1146 = vmatprep.subr.mxu0 %v1026
    %1147 = vmatpush1.msra.mxu0 %v1025
    %1148 = vmatprep.subr.mxu0 %v1030
    %1149 = vmatpush1.msra.mxu0 %v1029
    %1150 = vmatprep.subr.mxu0 %v1034
    %1151 = vmatpush1.msra.mxu0 %v1033
    %1152 = vmatprep.subr.mxu0 %v1038
    %1153 = vmatpush1.msra.mxu0 %v1037
    %1154 = vmatprep.subr.mxu0 %v1042
    %1155 = vmatpush1.msra.mxu0 %v1041
    %1156 = vmatprep.subr.mxu0 %v1046
    %1157 = vmatpush1.msra.mxu0 %v1045
    %1158 = vmatprep.subr.mxu0 %v1050
    %1159 = vmatpush1.msra.mxu0 %v1049
    %1160 = vmatprep.subr.mxu0 0.0
    %1161 = vmatpush1.msra.mxu0 0.0
    %1162 = vmatprep.subr.mxu0 0.0
    %1163 = vmatpush1.msra.mxu0 0.0
    %1164 = vmatprep.subr.mxu0 0.0
    %1165 = vmatpush1.msra.mxu0 0.0
    %1166 = vmatprep.subr.mxu0 0.0
    %1167 = vmatpush1.msra.mxu0 0.0
    %1168 = vmatprep.subr.mxu0 0.0
    %1169 = vmatpush1.msra.mxu0 0.0
    %1170 = vmatprep.subr.mxu0 0.0
    %1171 = vmatpush1.msra.mxu0 0.0
    %1172 = vmatprep.subr.mxu0 0.0
    %1173 = vmatpush1.msra.mxu0 0.0
    %1174 = vmatprep.subr.mxu0 0.0
    %1175 = vmatpush1.msra.mxu0 0.0
    %1176 = vmatprep.subr.mxu0 0.0
    %1177 = vmatpush1.msra.mxu0 0.0
    %1178 = vmatprep.subr.mxu0 0.0
    %1179 = vmatpush1.msra.mxu0 0.0
    %1180 = vmatprep.subr.mxu0 0.0
    %1181 = vmatpush1.msra.mxu0 0.0
    %1182 = vmatprep.subr.mxu0 0.0
    %1183 = vmatpush1.msra.mxu0 0.0
    %1184 = vmatprep.subr.mxu0 0.0
    %1185 = vmatpush1.msra.mxu0 0.0
    %1186 = vmatprep.subr.mxu0 0.0
    %1187 = vmatpush1.msra.mxu0 0.0
    %1188 = vmatprep.subr.mxu0 0.0
    %1189 = vmatpush1.msra.mxu0 0.0
    %1190 = vmatprep.subr.mxu0 0.0
    %1191 = vmatpush1.msra.mxu0 0.0
    %1192 = vmatprep.mubr.f32.mxu0 0.0
    %1193 = vmatmul.mubr.f32.gmra.mrb[0].mxu0 %v974
    %v1194 = vpop.f32.mrb[0].mxu0
    %v1195 = vadd.f32 0.0, %v1194
    %v1196 = vpop.f32.mrb[0].mxu0
    %v1197 = vadd.f32 0.0, %v1196
    %1198 = vmatprep.mubr.f32.mxu0 0.0
    %1199 = vmatmul.mubr.f32.gmra.mrb[0].mxu0 %v975
    %v1200 = vpop.f32.mrb[0].mxu0
    %v1201 = vadd.f32 0.0, %v1200
    %v1202 = vpop.f32.mrb[0].mxu0
    %v1203 = vadd.f32 0.0, %v1202
    %1204 = vdwg.mxu0
    %v1205 = vadd.f32 %v979, %v1118
    %v1206 = vadd.f32 %v980, %v1120
    %v1207 = vadd.f32 %v981, %v1195
    %v1208 = vadd.f32 %v982, %v1197
    %v1209 = vadd.f32 %v983, %v1124
    %v1210 = vadd.f32 %v984, %v1126
    %v1211 = vadd.f32 %v985, %v1201
    %v1212 = vadd.f32 %v986, %v1203
    %v1213 = vxor.u32 %v1205, 2147483648
    %v1214 = vxor.u32 %v1206, 2147483648
    %v1215 = vxor.u32 %v1207, 2147483648
    %v1216 = vxor.u32 %v1209, 2147483648
    %v1217 = vxor.u32 %v1210, 2147483648
    %v1218 = vxor.u32 %v1211, 2147483648
    %v1219 = vmul.f32 %v1213, 1.442695
    %v1220 = vpow.pop %v1219
    %v1221 = vmul.f32 %v1214, 1.442695
    %v1222 = vpow.pop %v1221
    %v1223 = vmul.f32 %v1215, 1.442695
    %v1224 = vpow.pop %v1223
    %v1225 = vmul.f32 %v1216, 1.442695
    %v1226 = vpow.pop %v1225
    %v1227 = vmul.f32 %v1217, 1.442695
    %v1228 = vpow.pop %v1227
    %v1229 = vmul.f32 %v1218, 1.442695
    %v1230 = vpow.pop %v1229
    %v1231 = vadd.f32 %v1220, 1.0
    %v1232 = vadd.f32 %v1222, 1.0
    %v1233 = vadd.f32 %v1224, 1.0
    %v1234 = vadd.f32 %v1226, 1.0
    %v1235 = vadd.f32 %v1228, 1.0
    %v1236 = vadd.f32 %v1230, 1.0
    %v1237 = vrcp.pop %v1231
    %v1238 = vmul.f32 1.0, %v1237
    %v1239 = vrcp.pop %v1232
    %v1240 = vmul.f32 1.0, %v1239
    %v1241 = vrcp.pop %v1233
    %v1242 = vmul.f32 1.0, %v1241
    %v1243 = vrcp.pop %v1234
    %v1244 = vmul.f32 1.0, %v1243
    %v1245 = vrcp.pop %v1235
    %v1246 = vmul.f32 1.0, %v1245
    %v1247 = vrcp.pop %v1236
    %v1248 = vmul.f32 1.0, %v1247
    %v1249 = vtanh.pop %v1208
    %v1250 = vtanh.pop %v1212
    %v1251 = vmul.f32 %v1240, %v976
    %v1252 = vmul.f32 %v1246, %v977
    %v1253 = vmul.f32 %v1238, %v1249
    %v1254 = vmul.f32 %v1244, %v1250
    %v1255 = vadd.f32 %v1251, %v1253
    %v1256 = vadd.f32 %v1252, %v1254
    %v1257 = vtanh.pop %v1255
    %v1258 = vtanh.pop %v1256
    %v1259 = vmul.f32 %v1242, %v1257
    %v1260 = vmul.f32 %v1248, %v1258
    %1261 = vst [vmem:[%s10] sm:$0xff] %v1255
    %1262 = vst [vmem:[%s10 + $0x8] sm:$0xff] %v1256
    %1263 = vst [vmem:[%s9] sm:$0xff] %v1259
    %1264 = vst [vmem:[%s9 + $0x8] sm:$0xff] %v1260
    %s1265 = scalar_lea.vmem [#allocation3], 32
    %1266 = vst [vmem:[%s1265] sm:$0xff] %v1259
    %1267 = vst [vmem:[%s1265 + $0x8] sm:$0xff] %v1260
    %v1268 = vld [vmem:[%s9] sm:$0xff]
    %v1269 = vld [vmem:[%s9 + $0x8] sm:$0xff]
    %v1270 = vld [vmem:[%s10] sm:$0xff]
    %v1271 = vld [vmem:[%s10 + $0x8] sm:$0xff]
    %s1272 = scalar_lea.vmem [#allocation2], 192
    %v1273 = vld [vmem:[%s1272] sm:$0xff]
    %v1274 = vld [vmem:[%s1272 + $0x8] sm:$0xff]
    %v1275 = vld [vmem:[%s1272 + $0x10] sm:$0xff]
    %v1276 = vld [vmem:[%s1272 + $0x18] sm:$0xff]
    %v1277 = vld [vmem:[%s1272 + $0x20] sm:$0xff]
    %v1278 = vld [vmem:[%s1272 + $0x28] sm:$0xff]
    %v1279 = vld [vmem:[%s1272 + $0x30] sm:$0xff]
    %v1280 = vld [vmem:[%s1272 + $0x38] sm:$0xff]
    %v1281 = vld [vmem:[#allocation5] sm:$0xff]
    %v1282 = vld [vmem:[#allocation5 + $0x8] sm:$0xff]
    %v1283 = vld [vmem:[#allocation5 + $0x10] sm:$0xff]
    %v1284 = vld [vmem:[#allocation5 + $0x18] sm:$0xff]
    %v1285 = vld [vmem:[#allocation5 + $0x20] sm:$0xff]
    %v1286 = vld [vmem:[#allocation5 + $0x28] sm:$0xff]
    %v1287 = vld [vmem:[#allocation5 + $0x30] sm:$0xff]
    %v1288 = vld [vmem:[#allocation5 + $0x38] sm:$0xff]
    %v1289 = vld [vmem:[#allocation5 + $0x40] sm:$0xff]
    %v1290 = vld [vmem:[#allocation5 + $0x48] sm:$0xff]
    %v1291 = vld [vmem:[#allocation5 + $0x50] sm:$0xff]
    %v1292 = vld [vmem:[#allocation5 + $0x58] sm:$0xff]
    %v1293 = vld [vmem:[#allocation5 + $0x60] sm:$0xff]
    %v1294 = vld [vmem:[#allocation5 + $0x68] sm:$0xff]
    %v1295 = vld [vmem:[#allocation5 + $0x70] sm:$0xff]
    %v1296 = vld [vmem:[#allocation5 + $0x78] sm:$0xff]
    %v1297 = vld [vmem:[#allocation5 + $0x80] sm:$0xff]
    %v1298 = vld [vmem:[#allocation5 + $0x88] sm:$0xff]
    %v1299 = vld [vmem:[#allocation5 + $0x90] sm:$0xff]
    %v1300 = vld [vmem:[#allocation5 + $0x98] sm:$0xff]
    %v1301 = vld [vmem:[#allocation5 + $0xa0] sm:$0xff]
    %v1302 = vld [vmem:[#allocation5 + $0xa8] sm:$0xff]
    %v1303 = vld [vmem:[#allocation5 + $0xb0] sm:$0xff]
    %v1304 = vld [vmem:[#allocation5 + $0xb8] sm:$0xff]
    %v1305 = vld [vmem:[#allocation5 + $0xc0] sm:$0xff]
    %v1306 = vld [vmem:[#allocation5 + $0xc8] sm:$0xff]
    %v1307 = vld [vmem:[#allocation5 + $0xd0] sm:$0xff]
    %v1308 = vld [vmem:[#allocation5 + $0xd8] sm:$0xff]
    %v1309 = vld [vmem:[#allocation5 + $0xe0] sm:$0xff]
    %v1310 = vld [vmem:[#allocation5 + $0xe8] sm:$0xff]
    %v1311 = vld [vmem:[#allocation5 + $0xf0] sm:$0xff]
    %v1312 = vld [vmem:[#allocation5 + $0xf8] sm:$0xff]
    %v1313 = vld [vmem:[#allocation5 + $0x100] sm:$0xff]
    %v1314 = vld [vmem:[#allocation5 + $0x108] sm:$0xff]
    %v1315 = vld [vmem:[#allocation5 + $0x110] sm:$0xff]
    %v1316 = vld [vmem:[#allocation5 + $0x118] sm:$0xff]
    %v1317 = vld [vmem:[#allocation5 + $0x120] sm:$0xff]
    %v1318 = vld [vmem:[#allocation5 + $0x128] sm:$0xff]
    %v1319 = vld [vmem:[#allocation5 + $0x130] sm:$0xff]
    %v1320 = vld [vmem:[#allocation5 + $0x138] sm:$0xff]
    %v1321 = vld [vmem:[#allocation5 + $0x140] sm:$0xff]
    %v1322 = vld [vmem:[#allocation5 + $0x148] sm:$0xff]
    %v1323 = vld [vmem:[#allocation5 + $0x150] sm:$0xff]
    %v1324 = vld [vmem:[#allocation5 + $0x158] sm:$0xff]
    %v1325 = vld [vmem:[#allocation5 + $0x160] sm:$0xff]
    %v1326 = vld [vmem:[#allocation5 + $0x168] sm:$0xff]
    %v1327 = vld [vmem:[#allocation5 + $0x170] sm:$0xff]
    %v1328 = vld [vmem:[#allocation5 + $0x178] sm:$0xff]
    %v1329 = vld [vmem:[#allocation5 + $0x180] sm:$0xff]
    %v1330 = vld [vmem:[#allocation5 + $0x188] sm:$0xff]
    %v1331 = vld [vmem:[#allocation5 + $0x190] sm:$0xff]
    %v1332 = vld [vmem:[#allocation5 + $0x198] sm:$0xff]
    %v1333 = vld [vmem:[#allocation5 + $0x1a0] sm:$0xff]
    %v1334 = vld [vmem:[#allocation5 + $0x1a8] sm:$0xff]
    %v1335 = vld [vmem:[#allocation5 + $0x1b0] sm:$0xff]
    %v1336 = vld [vmem:[#allocation5 + $0x1b8] sm:$0xff]
    %v1337 = vld [vmem:[#allocation5 + $0x1c0] sm:$0xff]
    %v1338 = vld [vmem:[#allocation5 + $0x1c8] sm:$0xff]
    %v1339 = vld [vmem:[#allocation5 + $0x1d0] sm:$0xff]
    %v1340 = vld [vmem:[#allocation5 + $0x1d8] sm:$0xff]
    %v1341 = vld [vmem:[#allocation5 + $0x1e0] sm:$0xff]
    %v1342 = vld [vmem:[#allocation5 + $0x1e8] sm:$0xff]
    %v1343 = vld [vmem:[#allocation5 + $0x1f0] sm:$0xff]
    %v1344 = vld [vmem:[#allocation5 + $0x1f8] sm:$0xff]
    %1345 = vmatprep.subr.mxu0 %v1282
    %1346 = vmatpush1.msra.mxu0 %v1281
    %1347 = vmatprep.subr.mxu0 %v1286
    %1348 = vmatpush1.msra.mxu0 %v1285
    %1349 = vmatprep.subr.mxu0 %v1290
    %1350 = vmatpush1.msra.mxu0 %v1289
    %1351 = vmatprep.subr.mxu0 %v1294
    %1352 = vmatpush1.msra.mxu0 %v1293
    %1353 = vmatprep.subr.mxu0 %v1298
    %1354 = vmatpush1.msra.mxu0 %v1297
    %1355 = vmatprep.subr.mxu0 %v1302
    %1356 = vmatpush1.msra.mxu0 %v1301
    %1357 = vmatprep.subr.mxu0 %v1306
    %1358 = vmatpush1.msra.mxu0 %v1305
    %1359 = vmatprep.subr.mxu0 %v1310
    %1360 = vmatpush1.msra.mxu0 %v1309
    %1361 = vmatprep.subr.mxu0 %v1314
    %1362 = vmatpush1.msra.mxu0 %v1313
    %1363 = vmatprep.subr.mxu0 %v1318
    %1364 = vmatpush1.msra.mxu0 %v1317
    %1365 = vmatprep.subr.mxu0 %v1322
    %1366 = vmatpush1.msra.mxu0 %v1321
    %1367 = vmatprep.subr.mxu0 %v1326
    %1368 = vmatpush1.msra.mxu0 %v1325
    %1369 = vmatprep.subr.mxu0 %v1330
    %1370 = vmatpush1.msra.mxu0 %v1329
    %1371 = vmatprep.subr.mxu0 %v1334
    %1372 = vmatpush1.msra.mxu0 %v1333
    %1373 = vmatprep.subr.mxu0 %v1338
    %1374 = vmatpush1.msra.mxu0 %v1337
    %1375 = vmatprep.subr.mxu0 %v1342
    %1376 = vmatpush1.msra.mxu0 %v1341
    %1377 = vmatprep.subr.mxu0 0.0
    %1378 = vmatpush1.msra.mxu0 0.0
    %1379 = vmatprep.subr.mxu0 0.0
    %1380 = vmatpush1.msra.mxu0 0.0
    %1381 = vmatprep.subr.mxu0 0.0
    %1382 = vmatpush1.msra.mxu0 0.0
    %1383 = vmatprep.subr.mxu0 0.0
    %1384 = vmatpush1.msra.mxu0 0.0
    %1385 = vmatprep.subr.mxu0 0.0
    %1386 = vmatpush1.msra.mxu0 0.0
    %1387 = vmatprep.subr.mxu0 0.0
    %1388 = vmatpush1.msra.mxu0 0.0
    %1389 = vmatprep.subr.mxu0 0.0
    %1390 = vmatpush1.msra.mxu0 0.0
    %1391 = vmatprep.subr.mxu0 0.0
    %1392 = vmatpush1.msra.mxu0 0.0
    %1393 = vmatprep.subr.mxu0 0.0
    %1394 = vmatpush1.msra.mxu0 0.0
    %1395 = vmatprep.subr.mxu0 0.0
    %1396 = vmatpush1.msra.mxu0 0.0
    %1397 = vmatprep.subr.mxu0 0.0
    %1398 = vmatpush1.msra.mxu0 0.0
    %1399 = vmatprep.subr.mxu0 0.0
    %1400 = vmatpush1.msra.mxu0 0.0
    %1401 = vmatprep.subr.mxu0 0.0
    %1402 = vmatpush1.msra.mxu0 0.0
    %1403 = vmatprep.subr.mxu0 0.0
    %1404 = vmatpush1.msra.mxu0 0.0
    %1405 = vmatprep.subr.mxu0 0.0
    %1406 = vmatpush1.msra.mxu0 0.0
    %1407 = vmatprep.subr.mxu0 0.0
    %1408 = vmatpush1.msra.mxu0 0.0
    %1409 = vmatprep.mubr.f32.mxu0 0.0
    %1410 = vmatmul.mubr.f32.gmra.mrb[0].mxu0 %v1268
    %v1411 = vpop.f32.mrb[0].mxu0
    %v1412 = vadd.f32 0.0, %v1411
    %v1413 = vpop.f32.mrb[0].mxu0
    %v1414 = vadd.f32 0.0, %v1413
    %1415 = vmatprep.mubr.f32.mxu0 0.0
    %1416 = vmatmul.mubr.f32.gmra.mrb[0].mxu0 %v1269
    %v1417 = vpop.f32.mrb[0].mxu0
    %v1418 = vadd.f32 0.0, %v1417
    %v1419 = vpop.f32.mrb[0].mxu0
    %v1420 = vadd.f32 0.0, %v1419
    %1421 = vdwg.mxu0
    %1422 = vmatprep.subr.mxu0 %v1284
    %1423 = vmatpush1.msra.mxu0 %v1283
    %1424 = vmatprep.subr.mxu0 %v1288
    %1425 = vmatpush1.msra.mxu0 %v1287
    %1426 = vmatprep.subr.mxu0 %v1292
    %1427 = vmatpush1.msra.mxu0 %v1291
    %1428 = vmatprep.subr.mxu0 %v1296
    %1429 = vmatpush1.msra.mxu0 %v1295
    %1430 = vmatprep.subr.mxu0 %v1300
    %1431 = vmatpush1.msra.mxu0 %v1299
    %1432 = vmatprep.subr.mxu0 %v1304
    %1433 = vmatpush1.msra.mxu0 %v1303
    %1434 = vmatprep.subr.mxu0 %v1308
    %1435 = vmatpush1.msra.mxu0 %v1307
    %1436 = vmatprep.subr.mxu0 %v1312
    %1437 = vmatpush1.msra.mxu0 %v1311
    %1438 = vmatprep.subr.mxu0 %v1316
    %1439 = vmatpush1.msra.mxu0 %v1315
    %1440 = vmatprep.subr.mxu0 %v1320
    %1441 = vmatpush1.msra.mxu0 %v1319
    %1442 = vmatprep.subr.mxu0 %v1324
    %1443 = vmatpush1.msra.mxu0 %v1323
    %1444 = vmatprep.subr.mxu0 %v1328
    %1445 = vmatpush1.msra.mxu0 %v1327
    %1446 = vmatprep.subr.mxu0 %v1332
    %1447 = vmatpush1.msra.mxu0 %v1331
    %1448 = vmatprep.subr.mxu0 %v1336
    %1449 = vmatpush1.msra.mxu0 %v1335
    %1450 = vmatprep.subr.mxu0 %v1340
    %1451 = vmatpush1.msra.mxu0 %v1339
    %1452 = vmatprep.subr.mxu0 %v1344
    %1453 = vmatpush1.msra.mxu0 %v1343
    %1454 = vmatprep.subr.mxu0 0.0
    %1455 = vmatpush1.msra.mxu0 0.0
    %1456 = vmatprep.subr.mxu0 0.0
    %1457 = vmatpush1.msra.mxu0 0.0
    %1458 = vmatprep.subr.mxu0 0.0
    %1459 = vmatpush1.msra.mxu0 0.0
    %1460 = vmatprep.subr.mxu0 0.0
    %1461 = vmatpush1.msra.mxu0 0.0
    %1462 = vmatprep.subr.mxu0 0.0
    %1463 = vmatpush1.msra.mxu0 0.0
    %1464 = vmatprep.subr.mxu0 0.0
    %1465 = vmatpush1.msra.mxu0 0.0
    %1466 = vmatprep.subr.mxu0 0.0
    %1467 = vmatpush1.msra.mxu0 0.0
    %1468 = vmatprep.subr.mxu0 0.0
    %1469 = vmatpush1.msra.mxu0 0.0
    %1470 = vmatprep.subr.mxu0 0.0
    %1471 = vmatpush1.msra.mxu0 0.0
    %1472 = vmatprep.subr.mxu0 0.0
    %1473 = vmatpush1.msra.mxu0 0.0
    %1474 = vmatprep.subr.mxu0 0.0
    %1475 = vmatpush1.msra.mxu0 0.0
    %1476 = vmatprep.subr.mxu0 0.0
    %1477 = vmatpush1.msra.mxu0 0.0
    %1478 = vmatprep.subr.mxu0 0.0
    %1479 = vmatpush1.msra.mxu0 0.0
    %1480 = vmatprep.subr.mxu0 0.0
    %1481 = vmatpush1.msra.mxu0 0.0
    %1482 = vmatprep.subr.mxu0 0.0
    %1483 = vmatpush1.msra.mxu0 0.0
    %1484 = vmatprep.subr.mxu0 0.0
    %1485 = vmatpush1.msra.mxu0 0.0
    %1486 = vmatprep.mubr.f32.mxu0 0.0
    %1487 = vmatmul.mubr.f32.gmra.mrb[0].mxu0 %v1268
    %v1488 = vpop.f32.mrb[0].mxu0
    %v1489 = vadd.f32 0.0, %v1488
    %v1490 = vpop.f32.mrb[0].mxu0
    %v1491 = vadd.f32 0.0, %v1490
    %1492 = vmatprep.mubr.f32.mxu0 0.0
    %1493 = vmatmul.mubr.f32.gmra.mrb[0].mxu0 %v1269
    %v1494 = vpop.f32.mrb[0].mxu0
    %v1495 = vadd.f32 0.0, %v1494
    %v1496 = vpop.f32.mrb[0].mxu0
    %v1497 = vadd.f32 0.0, %v1496
    %1498 = vdwg.mxu0
    %v1499 = vadd.f32 %v1273, %v1412
    %v1500 = vadd.f32 %v1274, %v1414
    %v1501 = vadd.f32 %v1275, %v1489
    %v1502 = vadd.f32 %v1276, %v1491
    %v1503 = vadd.f32 %v1277, %v1418
    %v1504 = vadd.f32 %v1278, %v1420
    %v1505 = vadd.f32 %v1279, %v1495
    %v1506 = vadd.f32 %v1280, %v1497
    %v1507 = vxor.u32 %v1499, 2147483648
    %v1508 = vxor.u32 %v1500, 2147483648
    %v1509 = vxor.u32 %v1501, 2147483648
    %v1510 = vxor.u32 %v1503, 2147483648
    %v1511 = vxor.u32 %v1504, 2147483648
    %v1512 = vxor.u32 %v1505, 2147483648
    %v1513 = vmul.f32 %v1507, 1.442695
    %v1514 = vpow.pop %v1513
    %v1515 = vmul.f32 %v1508, 1.442695
    %v1516 = vpow.pop %v1515
    %v1517 = vmul.f32 %v1509, 1.442695
    %v1518 = vpow.pop %v1517
    %v1519 = vmul.f32 %v1510, 1.442695
    %v1520 = vpow.pop %v1519
    %v1521 = vmul.f32 %v1511, 1.442695
    %v1522 = vpow.pop %v1521
    %v1523 = vmul.f32 %v1512, 1.442695
    %v1524 = vpow.pop %v1523
    %v1525 = vadd.f32 %v1514, 1.0
    %v1526 = vadd.f32 %v1516, 1.0
    %v1527 = vadd.f32 %v1518, 1.0
    %v1528 = vadd.f32 %v1520, 1.0
    %v1529 = vadd.f32 %v1522, 1.0
    %v1530 = vadd.f32 %v1524, 1.0
    %v1531 = vrcp.pop %v1525
    %v1532 = vmul.f32 1.0, %v1531
    %v1533 = vrcp.pop %v1526
    %v1534 = vmul.f32 1.0, %v1533
    %v1535 = vrcp.pop %v1527
    %v1536 = vmul.f32 1.0, %v1535
    %v1537 = vrcp.pop %v1528
    %v1538 = vmul.f32 1.0, %v1537
    %v1539 = vrcp.pop %v1529
    %v1540 = vmul.f32 1.0, %v1539
    %v1541 = vrcp.pop %v1530
    %v1542 = vmul.f32 1.0, %v1541
    %v1543 = vtanh.pop %v1502
    %v1544 = vtanh.pop %v1506
    %v1545 = vmul.f32 %v1534, %v1270
    %v1546 = vmul.f32 %v1540, %v1271
    %v1547 = vmul.f32 %v1532, %v1543
    %v1548 = vmul.f32 %v1538, %v1544
    %v1549 = vadd.f32 %v1545, %v1547
    %v1550 = vadd.f32 %v1546, %v1548
    %v1551 = vtanh.pop %v1549
    %v1552 = vtanh.pop %v1550
    %v1553 = vmul.f32 %v1536, %v1551
    %v1554 = vmul.f32 %v1542, %v1552
    %1555 = vst [vmem:[%s10] sm:$0xff] %v1549
    %1556 = vst [vmem:[%s10 + $0x8] sm:$0xff] %v1550
    %1557 = vst [vmem:[%s9] sm:$0xff] %v1553
    %1558 = vst [vmem:[%s9 + $0x8] sm:$0xff] %v1554
    %s1559 = scalar_lea.vmem [#allocation3], 48
    %1560 = vst [vmem:[%s1559] sm:$0xff] %v1553
    %1561 = vst [vmem:[%s1559 + $0x8] sm:$0xff] %v1554
    %v1562 = vld [vmem:[%s9] sm:$0xff]
    %v1563 = vld [vmem:[%s9 + $0x8] sm:$0xff]
    %v1564 = vld [vmem:[%s10] sm:$0xff]
    %v1565 = vld [vmem:[%s10 + $0x8] sm:$0xff]
    %s1566 = scalar_lea.vmem [#allocation2], 256
    %v1567 = vld [vmem:[%s1566] sm:$0xff]
    %v1568 = vld [vmem:[%s1566 + $0x8] sm:$0xff]
    %v1569 = vld [vmem:[%s1566 + $0x10] sm:$0xff]
    %v1570 = vld [vmem:[%s1566 + $0x18] sm:$0xff]
    %v1571 = vld [vmem:[%s1566 + $0x20] sm:$0xff]
    %v1572 = vld [vmem:[%s1566 + $0x28] sm:$0xff]
    %v1573 = vld [vmem:[%s1566 + $0x30] sm:$0xff]
    %v1574 = vld [vmem:[%s1566 + $0x38] sm:$0xff]
    %v1575 = vld [vmem:[#allocation5] sm:$0xff]
    %v1576 = vld [vmem:[#allocation5 + $0x8] sm:$0xff]
    %v1577 = vld [vmem:[#allocation5 + $0x10] sm:$0xff]
    %v1578 = vld [vmem:[#allocation5 + $0x18] sm:$0xff]
    %v1579 = vld [vmem:[#allocation5 + $0x20] sm:$0xff]
    %v1580 = vld [vmem:[#allocation5 + $0x28] sm:$0xff]
    %v1581 = vld [vmem:[#allocation5 + $0x30] sm:$0xff]
    %v1582 = vld [vmem:[#allocation5 + $0x38] sm:$0xff]
    %v1583 = vld [vmem:[#allocation5 + $0x40] sm:$0xff]
    %v1584 = vld [vmem:[#allocation5 + $0x48] sm:$0xff]
    %v1585 = vld [vmem:[#allocation5 + $0x50] sm:$0xff]
    %v1586 = vld [vmem:[#allocation5 + $0x58] sm:$0xff]
    %v1587 = vld [vmem:[#allocation5 + $0x60] sm:$0xff]
    %v1588 = vld [vmem:[#allocation5 + $0x68] sm:$0xff]
    %v1589 = vld [vmem:[#allocation5 + $0x70] sm:$0xff]
    %v1590 = vld [vmem:[#allocation5 + $0x78] sm:$0xff]
    %v1591 = vld [vmem:[#allocation5 + $0x80] sm:$0xff]
    %v1592 = vld [vmem:[#allocation5 + $0x88] sm:$0xff]
    %v1593 = vld [vmem:[#allocation5 + $0x90] sm:$0xff]
    %v1594 = vld [vmem:[#allocation5 + $0x98] sm:$0xff]
    %v1595 = vld [vmem:[#allocation5 + $0xa0] sm:$0xff]
    %v1596 = vld [vmem:[#allocation5 + $0xa8] sm:$0xff]
    %v1597 = vld [vmem:[#allocation5 + $0xb0] sm:$0xff]
    %v1598 = vld [vmem:[#allocation5 + $0xb8] sm:$0xff]
    %v1599 = vld [vmem:[#allocation5 + $0xc0] sm:$0xff]
    %v1600 = vld [vmem:[#allocation5 + $0xc8] sm:$0xff]
    %v1601 = vld [vmem:[#allocation5 + $0xd0] sm:$0xff]
    %v1602 = vld [vmem:[#allocation5 + $0xd8] sm:$0xff]
    %v1603 = vld [vmem:[#allocation5 + $0xe0] sm:$0xff]
    %v1604 = vld [vmem:[#allocation5 + $0xe8] sm:$0xff]
    %v1605 = vld [vmem:[#allocation5 + $0xf0] sm:$0xff]
    %v1606 = vld [vmem:[#allocation5 + $0xf8] sm:$0xff]
    %v1607 = vld [vmem:[#allocation5 + $0x100] sm:$0xff]
    %v1608 = vld [vmem:[#allocation5 + $0x108] sm:$0xff]
    %v1609 = vld [vmem:[#allocation5 + $0x110] sm:$0xff]
    %v1610 = vld [vmem:[#allocation5 + $0x118] sm:$0xff]
    %v1611 = vld [vmem:[#allocation5 + $0x120] sm:$0xff]
    %v1612 = vld [vmem:[#allocation5 + $0x128] sm:$0xff]
    %v1613 = vld [vmem:[#allocation5 + $0x130] sm:$0xff]
    %v1614 = vld [vmem:[#allocation5 + $0x138] sm:$0xff]
    %v1615 = vld [vmem:[#allocation5 + $0x140] sm:$0xff]
    %v1616 = vld [vmem:[#allocation5 + $0x148] sm:$0xff]
    %v1617 = vld [vmem:[#allocation5 + $0x150] sm:$0xff]
    %v1618 = vld [vmem:[#allocation5 + $0x158] sm:$0xff]
    %v1619 = vld [vmem:[#allocation5 + $0x160] sm:$0xff]
    %v1620 = vld [vmem:[#allocation5 + $0x168] sm:$0xff]
    %v1621 = vld [vmem:[#allocation5 + $0x170] sm:$0xff]
    %v1622 = vld [vmem:[#allocation5 + $0x178] sm:$0xff]
    %v1623 = vld [vmem:[#allocation5 + $0x180] sm:$0xff]
    %v1624 = vld [vmem:[#allocation5 + $0x188] sm:$0xff]
    %v1625 = vld [vmem:[#allocation5 + $0x190] sm:$0xff]
    %v1626 = vld [vmem:[#allocation5 + $0x198] sm:$0xff]
    %v1627 = vld [vmem:[#allocation5 + $0x1a0] sm:$0xff]
    %v1628 = vld [vmem:[#allocation5 + $0x1a8] sm:$0xff]
    %v1629 = vld [vmem:[#allocation5 + $0x1b0] sm:$0xff]
    %v1630 = vld [vmem:[#allocation5 + $0x1b8] sm:$0xff]
    %v1631 = vld [vmem:[#allocation5 + $0x1c0] sm:$0xff]
    %v1632 = vld [vmem:[#allocation5 + $0x1c8] sm:$0xff]
    %v1633 = vld [vmem:[#allocation5 + $0x1d0] sm:$0xff]
    %v1634 = vld [vmem:[#allocation5 + $0x1d8] sm:$0xff]
    %v1635 = vld [vmem:[#allocation5 + $0x1e0] sm:$0xff]
    %v1636 = vld [vmem:[#allocation5 + $0x1e8] sm:$0xff]
    %v1637 = vld [vmem:[#allocation5 + $0x1f0] sm:$0xff]
    %v1638 = vld [vmem:[#allocation5 + $0x1f8] sm:$0xff]
    %1639 = vmatprep.subr.mxu0 %v1576
    %1640 = vmatpush1.msra.mxu0 %v1575
    %1641 = vmatprep.subr.mxu0 %v1580
    %1642 = vmatpush1.msra.mxu0 %v1579
    %1643 = vmatprep.subr.mxu0 %v1584
    %1644 = vmatpush1.msra.mxu0 %v1583
    %1645 = vmatprep.subr.mxu0 %v1588
    %1646 = vmatpush1.msra.mxu0 %v1587
    %1647 = vmatprep.subr.mxu0 %v1592
    %1648 = vmatpush1.msra.mxu0 %v1591
    %1649 = vmatprep.subr.mxu0 %v1596
    %1650 = vmatpush1.msra.mxu0 %v1595
    %1651 = vmatprep.subr.mxu0 %v1600
    %1652 = vmatpush1.msra.mxu0 %v1599
    %1653 = vmatprep.subr.mxu0 %v1604
    %1654 = vmatpush1.msra.mxu0 %v1603
    %1655 = vmatprep.subr.mxu0 %v1608
    %1656 = vmatpush1.msra.mxu0 %v1607
    %1657 = vmatprep.subr.mxu0 %v1612
    %1658 = vmatpush1.msra.mxu0 %v1611
    %1659 = vmatprep.subr.mxu0 %v1616
    %1660 = vmatpush1.msra.mxu0 %v1615
    %1661 = vmatprep.subr.mxu0 %v1620
    %1662 = vmatpush1.msra.mxu0 %v1619
    %1663 = vmatprep.subr.mxu0 %v1624
    %1664 = vmatpush1.msra.mxu0 %v1623
    %1665 = vmatprep.subr.mxu0 %v1628
    %1666 = vmatpush1.msra.mxu0 %v1627
    %1667 = vmatprep.subr.mxu0 %v1632
    %1668 = vmatpush1.msra.mxu0 %v1631
    %1669 = vmatprep.subr.mxu0 %v1636
    %1670 = vmatpush1.msra.mxu0 %v1635
    %1671 = vmatprep.subr.mxu0 0.0
    %1672 = vmatpush1.msra.mxu0 0.0
    %1673 = vmatprep.subr.mxu0 0.0
    %1674 = vmatpush1.msra.mxu0 0.0
    %1675 = vmatprep.subr.mxu0 0.0
    %1676 = vmatpush1.msra.mxu0 0.0
    %1677 = vmatprep.subr.mxu0 0.0
    %1678 = vmatpush1.msra.mxu0 0.0
    %1679 = vmatprep.subr.mxu0 0.0
    %1680 = vmatpush1.msra.mxu0 0.0
    %1681 = vmatprep.subr.mxu0 0.0
    %1682 = vmatpush1.msra.mxu0 0.0
    %1683 = vmatprep.subr.mxu0 0.0
    %1684 = vmatpush1.msra.mxu0 0.0
    %1685 = vmatprep.subr.mxu0 0.0
    %1686 = vmatpush1.msra.mxu0 0.0
    %1687 = vmatprep.subr.mxu0 0.0
    %1688 = vmatpush1.msra.mxu0 0.0
    %1689 = vmatprep.subr.mxu0 0.0
    %1690 = vmatpush1.msra.mxu0 0.0
    %1691 = vmatprep.subr.mxu0 0.0
    %1692 = vmatpush1.msra.mxu0 0.0
    %1693 = vmatprep.subr.mxu0 0.0
    %1694 = vmatpush1.msra.mxu0 0.0
    %1695 = vmatprep.subr.mxu0 0.0
    %1696 = vmatpush1.msra.mxu0 0.0
    %1697 = vmatprep.subr.mxu0 0.0
    %1698 = vmatpush1.msra.mxu0 0.0
    %1699 = vmatprep.subr.mxu0 0.0
    %1700 = vmatpush1.msra.mxu0 0.0
    %1701 = vmatprep.subr.mxu0 0.0
    %1702 = vmatpush1.msra.mxu0 0.0
    %1703 = vmatprep.mubr.f32.mxu0 0.0
    %1704 = vmatmul.mubr.f32.gmra.mrb[0].mxu0 %v1562
    %v1705 = vpop.f32.mrb[0].mxu0
    %v1706 = vadd.f32 0.0, %v1705
    %v1707 = vpop.f32.mrb[0].mxu0
    %v1708 = vadd.f32 0.0, %v1707
    %1709 = vmatprep.mubr.f32.mxu0 0.0
    %1710 = vmatmul.mubr.f32.gmra.mrb[0].mxu0 %v1563
    %v1711 = vpop.f32.mrb[0].mxu0
    %v1712 = vadd.f32 0.0, %v1711
    %v1713 = vpop.f32.mrb[0].mxu0
    %v1714 = vadd.f32 0.0, %v1713
    %1715 = vdwg.mxu0
    %1716 = vmatprep.subr.mxu0 %v1578
    %1717 = vmatpush1.msra.mxu0 %v1577
    %1718 = vmatprep.subr.mxu0 %v1582
    %1719 = vmatpush1.msra.mxu0 %v1581
    %1720 = vmatprep.subr.mxu0 %v1586
    %1721 = vmatpush1.msra.mxu0 %v1585
    %1722 = vmatprep.subr.mxu0 %v1590
    %1723 = vmatpush1.msra.mxu0 %v1589
    %1724 = vmatprep.subr.mxu0 %v1594
    %1725 = vmatpush1.msra.mxu0 %v1593
    %1726 = vmatprep.subr.mxu0 %v1598
    %1727 = vmatpush1.msra.mxu0 %v1597
    %1728 = vmatprep.subr.mxu0 %v1602
    %1729 = vmatpush1.msra.mxu0 %v1601
    %1730 = vmatprep.subr.mxu0 %v1606
    %1731 = vmatpush1.msra.mxu0 %v1605
    %1732 = vmatprep.subr.mxu0 %v1610
    %1733 = vmatpush1.msra.mxu0 %v1609
    %1734 = vmatprep.subr.mxu0 %v1614
    %1735 = vmatpush1.msra.mxu0 %v1613
    %1736 = vmatprep.subr.mxu0 %v1618
    %1737 = vmatpush1.msra.mxu0 %v1617
    %1738 = vmatprep.subr.mxu0 %v1622
    %1739 = vmatpush1.msra.mxu0 %v1621
    %1740 = vmatprep.subr.mxu0 %v1626
    %1741 = vmatpush1.msra.mxu0 %v1625
    %1742 = vmatprep.subr.mxu0 %v1630
    %1743 = vmatpush1.msra.mxu0 %v1629
    %1744 = vmatprep.subr.mxu0 %v1634
    %1745 = vmatpush1.msra.mxu0 %v1633
    %1746 = vmatprep.subr.mxu0 %v1638
    %1747 = vmatpush1.msra.mxu0 %v1637
    %1748 = vmatprep.subr.mxu0 0.0
    %1749 = vmatpush1.msra.mxu0 0.0
    %1750 = vmatprep.subr.mxu0 0.0
    %1751 = vmatpush1.msra.mxu0 0.0
    %1752 = vmatprep.subr.mxu0 0.0
    %1753 = vmatpush1.msra.mxu0 0.0
    %1754 = vmatprep.subr.mxu0 0.0
    %1755 = vmatpush1.msra.mxu0 0.0
    %1756 = vmatprep.subr.mxu0 0.0
    %1757 = vmatpush1.msra.mxu0 0.0
    %1758 = vmatprep.subr.mxu0 0.0
    %1759 = vmatpush1.msra.mxu0 0.0
    %1760 = vmatprep.subr.mxu0 0.0
    %1761 = vmatpush1.msra.mxu0 0.0
    %1762 = vmatprep.subr.mxu0 0.0
    %1763 = vmatpush1.msra.mxu0 0.0
    %1764 = vmatprep.subr.mxu0 0.0
    %1765 = vmatpush1.msra.mxu0 0.0
    %1766 = vmatprep.subr.mxu0 0.0
    %1767 = vmatpush1.msra.mxu0 0.0
    %1768 = vmatprep.subr.mxu0 0.0
    %1769 = vmatpush1.msra.mxu0 0.0
    %1770 = vmatprep.subr.mxu0 0.0
    %1771 = vmatpush1.msra.mxu0 0.0
    %1772 = vmatprep.subr.mxu0 0.0
    %1773 = vmatpush1.msra.mxu0 0.0
    %1774 = vmatprep.subr.mxu0 0.0
    %1775 = vmatpush1.msra.mxu0 0.0
    %1776 = vmatprep.subr.mxu0 0.0
    %1777 = vmatpush1.msra.mxu0 0.0
    %1778 = vmatprep.subr.mxu0 0.0
    %1779 = vmatpush1.msra.mxu0 0.0
    %1780 = vmatprep.mubr.f32.mxu0 0.0
    %1781 = vmatmul.mubr.f32.gmra.mrb[0].mxu0 %v1562
    %v1782 = vpop.f32.mrb[0].mxu0
    %v1783 = vadd.f32 0.0, %v1782
    %v1784 = vpop.f32.mrb[0].mxu0
    %v1785 = vadd.f32 0.0, %v1784
    %1786 = vmatprep.mubr.f32.mxu0 0.0
    %1787 = vmatmul.mubr.f32.gmra.mrb[0].mxu0 %v1563
    %v1788 = vpop.f32.mrb[0].mxu0
    %v1789 = vadd.f32 0.0, %v1788
    %v1790 = vpop.f32.mrb[0].mxu0
    %v1791 = vadd.f32 0.0, %v1790
    %1792 = vdwg.mxu0
    %v1793 = vadd.f32 %v1567, %v1706
    %v1794 = vadd.f32 %v1568, %v1708
    %v1795 = vadd.f32 %v1569, %v1783
    %v1796 = vadd.f32 %v1570, %v1785
    %v1797 = vadd.f32 %v1571, %v1712
    %v1798 = vadd.f32 %v1572, %v1714
    %v1799 = vadd.f32 %v1573, %v1789
    %v1800 = vadd.f32 %v1574, %v1791
    %v1801 = vxor.u32 %v1793, 2147483648
    %v1802 = vxor.u32 %v1794, 2147483648
    %v1803 = vxor.u32 %v1795, 2147483648
    %v1804 = vxor.u32 %v1797, 2147483648
    %v1805 = vxor.u32 %v1798, 2147483648
    %v1806 = vxor.u32 %v1799, 2147483648
    %v1807 = vmul.f32 %v1801, 1.442695
    %v1808 = vpow.pop %v1807
    %v1809 = vmul.f32 %v1802, 1.442695
    %v1810 = vpow.pop %v1809
    %v1811 = vmul.f32 %v1803, 1.442695
    %v1812 = vpow.pop %v1811
    %v1813 = vmul.f32 %v1804, 1.442695
    %v1814 = vpow.pop %v1813
    %v1815 = vmul.f32 %v1805, 1.442695
    %v1816 = vpow.pop %v1815
    %v1817 = vmul.f32 %v1806, 1.442695
    %v1818 = vpow.pop %v1817
    %v1819 = vadd.f32 %v1808, 1.0
    %v1820 = vadd.f32 %v1810, 1.0
    %v1821 = vadd.f32 %v1812, 1.0
    %v1822 = vadd.f32 %v1814, 1.0
    %v1823 = vadd.f32 %v1816, 1.0
    %v1824 = vadd.f32 %v1818, 1.0
    %v1825 = vrcp.pop %v1819
    %v1826 = vmul.f32 1.0, %v1825
    %v1827 = vrcp.pop %v1820
    %v1828 = vmul.f32 1.0, %v1827
    %v1829 = vrcp.pop %v1821
    %v1830 = vmul.f32 1.0, %v1829
    %v1831 = vrcp.pop %v1822
    %v1832 = vmul.f32 1.0, %v1831
    %v1833 = vrcp.pop %v1823
    %v1834 = vmul.f32 1.0, %v1833
    %v1835 = vrcp.pop %v1824
    %v1836 = vmul.f32 1.0, %v1835
    %v1837 = vtanh.pop %v1796
    %v1838 = vtanh.pop %v1800
    %v1839 = vmul.f32 %v1828, %v1564
    %v1840 = vmul.f32 %v1834, %v1565
    %v1841 = vmul.f32 %v1826, %v1837
    %v1842 = vmul.f32 %v1832, %v1838
    %v1843 = vadd.f32 %v1839, %v1841
    %v1844 = vadd.f32 %v1840, %v1842
    %v1845 = vtanh.pop %v1843
    %v1846 = vtanh.pop %v1844
    %v1847 = vmul.f32 %v1830, %v1845
    %v1848 = vmul.f32 %v1836, %v1846
    %1849 = vst [vmem:[%s10] sm:$0xff] %v1843
    %1850 = vst [vmem:[%s10 + $0x8] sm:$0xff] %v1844
    %1851 = vst [vmem:[%s9] sm:$0xff] %v1847
    %1852 = vst [vmem:[%s9 + $0x8] sm:$0xff] %v1848
    %s1853 = scalar_lea.vmem [#allocation3], 64
    %1854 = vst [vmem:[%s1853] sm:$0xff] %v1847
    %1855 = vst [vmem:[%s1853 + $0x8] sm:$0xff] %v1848
    %v1856 = vld [vmem:[%s9] sm:$0xff]
    %v1857 = vld [vmem:[%s9 + $0x8] sm:$0xff]
    %v1858 = vld [vmem:[%s10] sm:$0xff]
    %v1859 = vld [vmem:[%s10 + $0x8] sm:$0xff]
    %s1860 = scalar_lea.vmem [#allocation2], 320
    %v1861 = vld [vmem:[%s1860] sm:$0xff]
    %v1862 = vld [vmem:[%s1860 + $0x8] sm:$0xff]
    %v1863 = vld [vmem:[%s1860 + $0x10] sm:$0xff]
    %v1864 = vld [vmem:[%s1860 + $0x18] sm:$0xff]
    %v1865 = vld [vmem:[%s1860 + $0x20] sm:$0xff]
    %v1866 = vld [vmem:[%s1860 + $0x28] sm:$0xff]
    %v1867 = vld [vmem:[%s1860 + $0x30] sm:$0xff]
    %v1868 = vld [vmem:[%s1860 + $0x38] sm:$0xff]
    %v1869 = vld [vmem:[#allocation5] sm:$0xff]
    %v1870 = vld [vmem:[#allocation5 + $0x8] sm:$0xff]
    %v1871 = vld [vmem:[#allocation5 + $0x10] sm:$0xff]
    %v1872 = vld [vmem:[#allocation5 + $0x18] sm:$0xff]
    %v1873 = vld [vmem:[#allocation5 + $0x20] sm:$0xff]
    %v1874 = vld [vmem:[#allocation5 + $0x28] sm:$0xff]
    %v1875 = vld [vmem:[#allocation5 + $0x30] sm:$0xff]
    %v1876 = vld [vmem:[#allocation5 + $0x38] sm:$0xff]
    %v1877 = vld [vmem:[#allocation5 + $0x40] sm:$0xff]
    %v1878 = vld [vmem:[#allocation5 + $0x48] sm:$0xff]
    %v1879 = vld [vmem:[#allocation5 + $0x50] sm:$0xff]
    %v1880 = vld [vmem:[#allocation5 + $0x58] sm:$0xff]
    %v1881 = vld [vmem:[#allocation5 + $0x60] sm:$0xff]
    %v1882 = vld [vmem:[#allocation5 + $0x68] sm:$0xff]
    %v1883 = vld [vmem:[#allocation5 + $0x70] sm:$0xff]
    %v1884 = vld [vmem:[#allocation5 + $0x78] sm:$0xff]
    %v1885 = vld [vmem:[#allocation5 + $0x80] sm:$0xff]
    %v1886 = vld [vmem:[#allocation5 + $0x88] sm:$0xff]
    %v1887 = vld [vmem:[#allocation5 + $0x90] sm:$0xff]
    %v1888 = vld [vmem:[#allocation5 + $0x98] sm:$0xff]
    %v1889 = vld [vmem:[#allocation5 + $0xa0] sm:$0xff]
    %v1890 = vld [vmem:[#allocation5 + $0xa8] sm:$0xff]
    %v1891 = vld [vmem:[#allocation5 + $0xb0] sm:$0xff]
    %v1892 = vld [vmem:[#allocation5 + $0xb8] sm:$0xff]
    %v1893 = vld [vmem:[#allocation5 + $0xc0] sm:$0xff]
    %v1894 = vld [vmem:[#allocation5 + $0xc8] sm:$0xff]
    %v1895 = vld [vmem:[#allocation5 + $0xd0] sm:$0xff]
    %v1896 = vld [vmem:[#allocation5 + $0xd8] sm:$0xff]
    %v1897 = vld [vmem:[#allocation5 + $0xe0] sm:$0xff]
    %v1898 = vld [vmem:[#allocation5 + $0xe8] sm:$0xff]
    %v1899 = vld [vmem:[#allocation5 + $0xf0] sm:$0xff]
    %v1900 = vld [vmem:[#allocation5 + $0xf8] sm:$0xff]
    %v1901 = vld [vmem:[#allocation5 + $0x100] sm:$0xff]
    %v1902 = vld [vmem:[#allocation5 + $0x108] sm:$0xff]
    %v1903 = vld [vmem:[#allocation5 + $0x110] sm:$0xff]
    %v1904 = vld [vmem:[#allocation5 + $0x118] sm:$0xff]
    %v1905 = vld [vmem:[#allocation5 + $0x120] sm:$0xff]
    %v1906 = vld [vmem:[#allocation5 + $0x128] sm:$0xff]
    %v1907 = vld [vmem:[#allocation5 + $0x130] sm:$0xff]
    %v1908 = vld [vmem:[#allocation5 + $0x138] sm:$0xff]
    %v1909 = vld [vmem:[#allocation5 + $0x140] sm:$0xff]
    %v1910 = vld [vmem:[#allocation5 + $0x148] sm:$0xff]
    %v1911 = vld [vmem:[#allocation5 + $0x150] sm:$0xff]
    %v1912 = vld [vmem:[#allocation5 + $0x158] sm:$0xff]
    %v1913 = vld [vmem:[#allocation5 + $0x160] sm:$0xff]
    %v1914 = vld [vmem:[#allocation5 + $0x168] sm:$0xff]
    %v1915 = vld [vmem:[#allocation5 + $0x170] sm:$0xff]
    %v1916 = vld [vmem:[#allocation5 + $0x178] sm:$0xff]
    %v1917 = vld [vmem:[#allocation5 + $0x180] sm:$0xff]
    %v1918 = vld [vmem:[#allocation5 + $0x188] sm:$0xff]
    %v1919 = vld [vmem:[#allocation5 + $0x190] sm:$0xff]
    %v1920 = vld [vmem:[#allocation5 + $0x198] sm:$0xff]
    %v1921 = vld [vmem:[#allocation5 + $0x1a0] sm:$0xff]
    %v1922 = vld [vmem:[#allocation5 + $0x1a8] sm:$0xff]
    %v1923 = vld [vmem:[#allocation5 + $0x1b0] sm:$0xff]
    %v1924 = vld [vmem:[#allocation5 + $0x1b8] sm:$0xff]
    %v1925 = vld [vmem:[#allocation5 + $0x1c0] sm:$0xff]
    %v1926 = vld [vmem:[#allocation5 + $0x1c8] sm:$0xff]
    %v1927 = vld [vmem:[#allocation5 + $0x1d0] sm:$0xff]
    %v1928 = vld [vmem:[#allocation5 + $0x1d8] sm:$0xff]
    %v1929 = vld [vmem:[#allocation5 + $0x1e0] sm:$0xff]
    %v1930 = vld [vmem:[#allocation5 + $0x1e8] sm:$0xff]
    %v1931 = vld [vmem:[#allocation5 + $0x1f0] sm:$0xff]
    %v1932 = vld [vmem:[#allocation5 + $0x1f8] sm:$0xff]
    %1933 = vmatprep.subr.mxu0 %v1870
    %1934 = vmatpush1.msra.mxu0 %v1869
    %1935 = vmatprep.subr.mxu0 %v1874
    %1936 = vmatpush1.msra.mxu0 %v1873
    %1937 = vmatprep.subr.mxu0 %v1878
    %1938 = vmatpush1.msra.mxu0 %v1877
    %1939 = vmatprep.subr.mxu0 %v1882
    %1940 = vmatpush1.msra.mxu0 %v1881
    %1941 = vmatprep.subr.mxu0 %v1886
    %1942 = vmatpush1.msra.mxu0 %v1885
    %1943 = vmatprep.subr.mxu0 %v1890
    %1944 = vmatpush1.msra.mxu0 %v1889
    %1945 = vmatprep.subr.mxu0 %v1894
    %1946 = vmatpush1.msra.mxu0 %v1893
    %1947 = vmatprep.subr.mxu0 %v1898
    %1948 = vmatpush1.msra.mxu0 %v1897
    %1949 = vmatprep.subr.mxu0 %v1902
    %1950 = vmatpush1.msra.mxu0 %v1901
    %1951 = vmatprep.subr.mxu0 %v1906
    %1952 = vmatpush1.msra.mxu0 %v1905
    %1953 = vmatprep.subr.mxu0 %v1910
    %1954 = vmatpush1.msra.mxu0 %v1909
    %1955 = vmatprep.subr.mxu0 %v1914
    %1956 = vmatpush1.msra.mxu0 %v1913
    %1957 = vmatprep.subr.mxu0 %v1918
    %1958 = vmatpush1.msra.mxu0 %v1917
    %1959 = vmatprep.subr.mxu0 %v1922
    %1960 = vmatpush1.msra.mxu0 %v1921
    %1961 = vmatprep.subr.mxu0 %v1926
    %1962 = vmatpush1.msra.mxu0 %v1925
    %1963 = vmatprep.subr.mxu0 %v1930
    %1964 = vmatpush1.msra.mxu0 %v1929
    %1965 = vmatprep.subr.mxu0 0.0
    %1966 = vmatpush1.msra.mxu0 0.0
    %1967 = vmatprep.subr.mxu0 0.0
    %1968 = vmatpush1.msra.mxu0 0.0
    %1969 = vmatprep.subr.mxu0 0.0
    %1970 = vmatpush1.msra.mxu0 0.0
    %1971 = vmatprep.subr.mxu0 0.0
    %1972 = vmatpush1.msra.mxu0 0.0
    %1973 = vmatprep.subr.mxu0 0.0
    %1974 = vmatpush1.msra.mxu0 0.0
    %1975 = vmatprep.subr.mxu0 0.0
    %1976 = vmatpush1.msra.mxu0 0.0
    %1977 = vmatprep.subr.mxu0 0.0
    %1978 = vmatpush1.msra.mxu0 0.0
    %1979 = vmatprep.subr.mxu0 0.0
    %1980 = vmatpush1.msra.mxu0 0.0
    %1981 = vmatprep.subr.mxu0 0.0
    %1982 = vmatpush1.msra.mxu0 0.0
    %1983 = vmatprep.subr.mxu0 0.0
    %1984 = vmatpush1.msra.mxu0 0.0
    %1985 = vmatprep.subr.mxu0 0.0
    %1986 = vmatpush1.msra.mxu0 0.0
    %1987 = vmatprep.subr.mxu0 0.0
    %1988 = vmatpush1.msra.mxu0 0.0
    %1989 = vmatprep.subr.mxu0 0.0
    %1990 = vmatpush1.msra.mxu0 0.0
    %1991 = vmatprep.subr.mxu0 0.0
    %1992 = vmatpush1.msra.mxu0 0.0
    %1993 = vmatprep.subr.mxu0 0.0
    %1994 = vmatpush1.msra.mxu0 0.0
    %1995 = vmatprep.subr.mxu0 0.0
    %1996 = vmatpush1.msra.mxu0 0.0
    %1997 = vmatprep.mubr.f32.mxu0 0.0
    %1998 = vmatmul.mubr.f32.gmra.mrb[0].mxu0 %v1856
    %v1999 = vpop.f32.mrb[0].mxu0
    %v2000 = vadd.f32 0.0, %v1999
    %v2001 = vpop.f32.mrb[0].mxu0
    %v2002 = vadd.f32 0.0, %v2001
    %2003 = vmatprep.mubr.f32.mxu0 0.0
    %2004 = vmatmul.mubr.f32.gmra.mrb[0].mxu0 %v1857
    %v2005 = vpop.f32.mrb[0].mxu0
    %v2006 = vadd.f32 0.0, %v2005
    %v2007 = vpop.f32.mrb[0].mxu0
    %v2008 = vadd.f32 0.0, %v2007
    %2009 = vdwg.mxu0
    %2010 = vmatprep.subr.mxu0 %v1872
    %2011 = vmatpush1.msra.mxu0 %v1871
    %2012 = vmatprep.subr.mxu0 %v1876
    %2013 = vmatpush1.msra.mxu0 %v1875
    %2014 = vmatprep.subr.mxu0 %v1880
    %2015 = vmatpush1.msra.mxu0 %v1879
    %2016 = vmatprep.subr.mxu0 %v1884
    %2017 = vmatpush1.msra.mxu0 %v1883
    %2018 = vmatprep.subr.mxu0 %v1888
    %2019 = vmatpush1.msra.mxu0 %v1887
    %2020 = vmatprep.subr.mxu0 %v1892
    %2021 = vmatpush1.msra.mxu0 %v1891
    %2022 = vmatprep.subr.mxu0 %v1896
    %2023 = vmatpush1.msra.mxu0 %v1895
    %2024 = vmatprep.subr.mxu0 %v1900
    %2025 = vmatpush1.msra.mxu0 %v1899
    %2026 = vmatprep.subr.mxu0 %v1904
    %2027 = vmatpush1.msra.mxu0 %v1903
    %2028 = vmatprep.subr.mxu0 %v1908
    %2029 = vmatpush1.msra.mxu0 %v1907
    %2030 = vmatprep.subr.mxu0 %v1912
    %2031 = vmatpush1.msra.mxu0 %v1911
    %2032 = vmatprep.subr.mxu0 %v1916
    %2033 = vmatpush1.msra.mxu0 %v1915
    %2034 = vmatprep.subr.mxu0 %v1920
    %2035 = vmatpush1.msra.mxu0 %v1919
    %2036 = vmatprep.subr.mxu0 %v1924
    %2037 = vmatpush1.msra.mxu0 %v1923
    %2038 = vmatprep.subr.mxu0 %v1928
    %2039 = vmatpush1.msra.mxu0 %v1927
    %2040 = vmatprep.subr.mxu0 %v1932
    %2041 = vmatpush1.msra.mxu0 %v1931
    %2042 = vmatprep.subr.mxu0 0.0
    %2043 = vmatpush1.msra.mxu0 0.0
    %2044 = vmatprep.subr.mxu0 0.0
    %2045 = vmatpush1.msra.mxu0 0.0
    %2046 = vmatprep.subr.mxu0 0.0
    %2047 = vmatpush1.msra.mxu0 0.0
    %2048 = vmatprep.subr.mxu0 0.0
    %2049 = vmatpush1.msra.mxu0 0.0
    %2050 = vmatprep.subr.mxu0 0.0
    %2051 = vmatpush1.msra.mxu0 0.0
    %2052 = vmatprep.subr.mxu0 0.0
    %2053 = vmatpush1.msra.mxu0 0.0
    %2054 = vmatprep.subr.mxu0 0.0
    %2055 = vmatpush1.msra.mxu0 0.0
    %2056 = vmatprep.subr.mxu0 0.0
    %2057 = vmatpush1.msra.mxu0 0.0
    %2058 = vmatprep.subr.mxu0 0.0
    %2059 = vmatpush1.msra.mxu0 0.0
    %2060 = vmatprep.subr.mxu0 0.0
    %2061 = vmatpush1.msra.mxu0 0.0
    %2062 = vmatprep.subr.mxu0 0.0
    %2063 = vmatpush1.msra.mxu0 0.0
    %2064 = vmatprep.subr.mxu0 0.0
    %2065 = vmatpush1.msra.mxu0 0.0
    %2066 = vmatprep.subr.mxu0 0.0
    %2067 = vmatpush1.msra.mxu0 0.0
    %2068 = vmatprep.subr.mxu0 0.0
    %2069 = vmatpush1.msra.mxu0 0.0
    %2070 = vmatprep.subr.mxu0 0.0
    %2071 = vmatpush1.msra.mxu0 0.0
    %2072 = vmatprep.subr.mxu0 0.0
    %2073 = vmatpush1.msra.mxu0 0.0
    %2074 = vmatprep.mubr.f32.mxu0 0.0
    %2075 = vmatmul.mubr.f32.gmra.mrb[0].mxu0 %v1856
    %v2076 = vpop.f32.mrb[0].mxu0
    %v2077 = vadd.f32 0.0, %v2076
    %v2078 = vpop.f32.mrb[0].mxu0
    %v2079 = vadd.f32 0.0, %v2078
    %2080 = vmatprep.mubr.f32.mxu0 0.0
    %2081 = vmatmul.mubr.f32.gmra.mrb[0].mxu0 %v1857
    %v2082 = vpop.f32.mrb[0].mxu0
    %v2083 = vadd.f32 0.0, %v2082
    %v2084 = vpop.f32.mrb[0].mxu0
    %v2085 = vadd.f32 0.0, %v2084
    %2086 = vdwg.mxu0
    %v2087 = vadd.f32 %v1861, %v2000
    %v2088 = vadd.f32 %v1862, %v2002
    %v2089 = vadd.f32 %v1863, %v2077
    %v2090 = vadd.f32 %v1864, %v2079
    %v2091 = vadd.f32 %v1865, %v2006
    %v2092 = vadd.f32 %v1866, %v2008
    %v2093 = vadd.f32 %v1867, %v2083
    %v2094 = vadd.f32 %v1868, %v2085
    %v2095 = vxor.u32 %v2087, 2147483648
    %v2096 = vxor.u32 %v2088, 2147483648
    %v2097 = vxor.u32 %v2089, 2147483648
    %v2098 = vxor.u32 %v2091, 2147483648
    %v2099 = vxor.u32 %v2092, 2147483648
    %v2100 = vxor.u32 %v2093, 2147483648
    %v2101 = vmul.f32 %v2095, 1.442695
    %v2102 = vpow.pop %v2101
    %v2103 = vmul.f32 %v2096, 1.442695
    %v2104 = vpow.pop %v2103
    %v2105 = vmul.f32 %v2097, 1.442695
    %v2106 = vpow.pop %v2105
    %v2107 = vmul.f32 %v2098, 1.442695
    %v2108 = vpow.pop %v2107
    %v2109 = vmul.f32 %v2099, 1.442695
    %v2110 = vpow.pop %v2109
    %v2111 = vmul.f32 %v2100, 1.442695
    %v2112 = vpow.pop %v2111
    %v2113 = vadd.f32 %v2102, 1.0
    %v2114 = vadd.f32 %v2104, 1.0
    %v2115 = vadd.f32 %v2106, 1.0
    %v2116 = vadd.f32 %v2108, 1.0
    %v2117 = vadd.f32 %v2110, 1.0
    %v2118 = vadd.f32 %v2112, 1.0
    %v2119 = vrcp.pop %v2113
    %v2120 = vmul.f32 1.0, %v2119
    %v2121 = vrcp.pop %v2114
    %v2122 = vmul.f32 1.0, %v2121
    %v2123 = vrcp.pop %v2115
    %v2124 = vmul.f32 1.0, %v2123
    %v2125 = vrcp.pop %v2116
    %v2126 = vmul.f32 1.0, %v2125
    %v2127 = vrcp.pop %v2117
    %v2128 = vmul.f32 1.0, %v2127
    %v2129 = vrcp.pop %v2118
    %v2130 = vmul.f32 1.0, %v2129
    %v2131 = vtanh.pop %v2090
    %v2132 = vtanh.pop %v2094
    %v2133 = vmul.f32 %v2122, %v1858
    %v2134 = vmul.f32 %v2128, %v1859
    %v2135 = vmul.f32 %v2120, %v2131
    %v2136 = vmul.f32 %v2126, %v2132
    %v2137 = vadd.f32 %v2133, %v2135
    %v2138 = vadd.f32 %v2134, %v2136
    %v2139 = vtanh.pop %v2137
    %v2140 = vtanh.pop %v2138
    %v2141 = vmul.f32 %v2124, %v2139
    %v2142 = vmul.f32 %v2130, %v2140
    %2143 = vst [vmem:[%s10] sm:$0xff] %v2137
    %2144 = vst [vmem:[%s10 + $0x8] sm:$0xff] %v2138
    %2145 = vst [vmem:[%s9] sm:$0xff] %v2141
    %2146 = vst [vmem:[%s9 + $0x8] sm:$0xff] %v2142
    %s2147 = scalar_lea.vmem [#allocation3], 80
    %2148 = vst [vmem:[%s2147] sm:$0xff] %v2141
    %2149 = vst [vmem:[%s2147 + $0x8] sm:$0xff] %v2142
    %v2150 = vld [vmem:[%s9] sm:$0xff]
    %v2151 = vld [vmem:[%s9 + $0x8] sm:$0xff]
    %v2152 = vld [vmem:[%s10] sm:$0xff]
    %v2153 = vld [vmem:[%s10 + $0x8] sm:$0xff]
    %s2154 = scalar_lea.vmem [#allocation2], 384
    %v2155 = vld [vmem:[%s2154] sm:$0xff]
    %v2156 = vld [vmem:[%s2154 + $0x8] sm:$0xff]
    %v2157 = vld [vmem:[%s2154 + $0x10] sm:$0xff]
    %v2158 = vld [vmem:[%s2154 + $0x18] sm:$0xff]
    %v2159 = vld [vmem:[%s2154 + $0x20] sm:$0xff]
    %v2160 = vld [vmem:[%s2154 + $0x28] sm:$0xff]
    %v2161 = vld [vmem:[%s2154 + $0x30] sm:$0xff]
    %v2162 = vld [vmem:[%s2154 + $0x38] sm:$0xff]
    %v2163 = vld [vmem:[#allocation5] sm:$0xff]
    %v2164 = vld [vmem:[#allocation5 + $0x8] sm:$0xff]
    %v2165 = vld [vmem:[#allocation5 + $0x10] sm:$0xff]
    %v2166 = vld [vmem:[#allocation5 + $0x18] sm:$0xff]
    %v2167 = vld [vmem:[#allocation5 + $0x20] sm:$0xff]
    %v2168 = vld [vmem:[#allocation5 + $0x28] sm:$0xff]
    %v2169 = vld [vmem:[#allocation5 + $0x30] sm:$0xff]
    %v2170 = vld [vmem:[#allocation5 + $0x38] sm:$0xff]
    %v2171 = vld [vmem:[#allocation5 + $0x40] sm:$0xff]
    %v2172 = vld [vmem:[#allocation5 + $0x48] sm:$0xff]
    %v2173 = vld [vmem:[#allocation5 + $0x50] sm:$0xff]
    %v2174 = vld [vmem:[#allocation5 + $0x58] sm:$0xff]
    %v2175 = vld [vmem:[#allocation5 + $0x60] sm:$0xff]
    %v2176 = vld [vmem:[#allocation5 + $0x68] sm:$0xff]
    %v2177 = vld [vmem:[#allocation5 + $0x70] sm:$0xff]
    %v2178 = vld [vmem:[#allocation5 + $0x78] sm:$0xff]
    %v2179 = vld [vmem:[#allocation5 + $0x80] sm:$0xff]
    %v2180 = vld [vmem:[#allocation5 + $0x88] sm:$0xff]
    %v2181 = vld [vmem:[#allocation5 + $0x90] sm:$0xff]
    %v2182 = vld [vmem:[#allocation5 + $0x98] sm:$0xff]
    %v2183 = vld [vmem:[#allocation5 + $0xa0] sm:$0xff]
    %v2184 = vld [vmem:[#allocation5 + $0xa8] sm:$0xff]
    %v2185 = vld [vmem:[#allocation5 + $0xb0] sm:$0xff]
    %v2186 = vld [vmem:[#allocation5 + $0xb8] sm:$0xff]
    %v2187 = vld [vmem:[#allocation5 + $0xc0] sm:$0xff]
    %v2188 = vld [vmem:[#allocation5 + $0xc8] sm:$0xff]
    %v2189 = vld [vmem:[#allocation5 + $0xd0] sm:$0xff]
    %v2190 = vld [vmem:[#allocation5 + $0xd8] sm:$0xff]
    %v2191 = vld [vmem:[#allocation5 + $0xe0] sm:$0xff]
    %v2192 = vld [vmem:[#allocation5 + $0xe8] sm:$0xff]
    %v2193 = vld [vmem:[#allocation5 + $0xf0] sm:$0xff]
    %v2194 = vld [vmem:[#allocation5 + $0xf8] sm:$0xff]
    %v2195 = vld [vmem:[#allocation5 + $0x100] sm:$0xff]
    %v2196 = vld [vmem:[#allocation5 + $0x108] sm:$0xff]
    %v2197 = vld [vmem:[#allocation5 + $0x110] sm:$0xff]
    %v2198 = vld [vmem:[#allocation5 + $0x118] sm:$0xff]
    %v2199 = vld [vmem:[#allocation5 + $0x120] sm:$0xff]
    %v2200 = vld [vmem:[#allocation5 + $0x128] sm:$0xff]
    %v2201 = vld [vmem:[#allocation5 + $0x130] sm:$0xff]
    %v2202 = vld [vmem:[#allocation5 + $0x138] sm:$0xff]
    %v2203 = vld [vmem:[#allocation5 + $0x140] sm:$0xff]
    %v2204 = vld [vmem:[#allocation5 + $0x148] sm:$0xff]
    %v2205 = vld [vmem:[#allocation5 + $0x150] sm:$0xff]
    %v2206 = vld [vmem:[#allocation5 + $0x158] sm:$0xff]
    %v2207 = vld [vmem:[#allocation5 + $0x160] sm:$0xff]
    %v2208 = vld [vmem:[#allocation5 + $0x168] sm:$0xff]
    %v2209 = vld [vmem:[#allocation5 + $0x170] sm:$0xff]
    %v2210 = vld [vmem:[#allocation5 + $0x178] sm:$0xff]
    %v2211 = vld [vmem:[#allocation5 + $0x180] sm:$0xff]
    %v2212 = vld [vmem:[#allocation5 + $0x188] sm:$0xff]
    %v2213 = vld [vmem:[#allocation5 + $0x190] sm:$0xff]
    %v2214 = vld [vmem:[#allocation5 + $0x198] sm:$0xff]
    %v2215 = vld [vmem:[#allocation5 + $0x1a0] sm:$0xff]
    %v2216 = vld [vmem:[#allocation5 + $0x1a8] sm:$0xff]
    %v2217 = vld [vmem:[#allocation5 + $0x1b0] sm:$0xff]
    %v2218 = vld [vmem:[#allocation5 + $0x1b8] sm:$0xff]
    %v2219 = vld [vmem:[#allocation5 + $0x1c0] sm:$0xff]
    %v2220 = vld [vmem:[#allocation5 + $0x1c8] sm:$0xff]
    %v2221 = vld [vmem:[#allocation5 + $0x1d0] sm:$0xff]
    %v2222 = vld [vmem:[#allocation5 + $0x1d8] sm:$0xff]
    %v2223 = vld [vmem:[#allocation5 + $0x1e0] sm:$0xff]
    %v2224 = vld [vmem:[#allocation5 + $0x1e8] sm:$0xff]
    %v2225 = vld [vmem:[#allocation5 + $0x1f0] sm:$0xff]
    %v2226 = vld [vmem:[#allocation5 + $0x1f8] sm:$0xff]
    %2227 = vmatprep.subr.mxu0 %v2164
    %2228 = vmatpush1.msra.mxu0 %v2163
    %2229 = vmatprep.subr.mxu0 %v2168
    %2230 = vmatpush1.msra.mxu0 %v2167
    %2231 = vmatprep.subr.mxu0 %v2172
    %2232 = vmatpush1.msra.mxu0 %v2171
    %2233 = vmatprep.subr.mxu0 %v2176
    %2234 = vmatpush1.msra.mxu0 %v2175
    %2235 = vmatprep.subr.mxu0 %v2180
    %2236 = vmatpush1.msra.mxu0 %v2179
    %2237 = vmatprep.subr.mxu0 %v2184
    %2238 = vmatpush1.msra.mxu0 %v2183
    %2239 = vmatprep.subr.mxu0 %v2188
    %2240 = vmatpush1.msra.mxu0 %v2187
    %2241 = vmatprep.subr.mxu0 %v2192
    %2242 = vmatpush1.msra.mxu0 %v2191
    %2243 = vmatprep.subr.mxu0 %v2196
    %2244 = vmatpush1.msra.mxu0 %v2195
    %2245 = vmatprep.subr.mxu0 %v2200
    %2246 = vmatpush1.msra.mxu0 %v2199
    %2247 = vmatprep.subr.mxu0 %v2204
    %2248 = vmatpush1.msra.mxu0 %v2203
    %2249 = vmatprep.subr.mxu0 %v2208
    %2250 = vmatpush1.msra.mxu0 %v2207
    %2251 = vmatprep.subr.mxu0 %v2212
    %2252 = vmatpush1.msra.mxu0 %v2211
    %2253 = vmatprep.subr.mxu0 %v2216
    %2254 = vmatpush1.msra.mxu0 %v2215
    %2255 = vmatprep.subr.mxu0 %v2220
    %2256 = vmatpush1.msra.mxu0 %v2219
    %2257 = vmatprep.subr.mxu0 %v2224
    %2258 = vmatpush1.msra.mxu0 %v2223
    %2259 = vmatprep.subr.mxu0 0.0
    %2260 = vmatpush1.msra.mxu0 0.0
    %2261 = vmatprep.subr.mxu0 0.0
    %2262 = vmatpush1.msra.mxu0 0.0
    %2263 = vmatprep.subr.mxu0 0.0
    %2264 = vmatpush1.msra.mxu0 0.0
    %2265 = vmatprep.subr.mxu0 0.0
    %2266 = vmatpush1.msra.mxu0 0.0
    %2267 = vmatprep.subr.mxu0 0.0
    %2268 = vmatpush1.msra.mxu0 0.0
    %2269 = vmatprep.subr.mxu0 0.0
    %2270 = vmatpush1.msra.mxu0 0.0
    %2271 = vmatprep.subr.mxu0 0.0
    %2272 = vmatpush1.msra.mxu0 0.0
    %2273 = vmatprep.subr.mxu0 0.0
    %2274 = vmatpush1.msra.mxu0 0.0
    %2275 = vmatprep.subr.mxu0 0.0
    %2276 = vmatpush1.msra.mxu0 0.0
    %2277 = vmatprep.subr.mxu0 0.0
    %2278 = vmatpush1.msra.mxu0 0.0
    %2279 = vmatprep.subr.mxu0 0.0
    %2280 = vmatpush1.msra.mxu0 0.0
    %2281 = vmatprep.subr.mxu0 0.0
    %2282 = vmatpush1.msra.mxu0 0.0
    %2283 = vmatprep.subr.mxu0 0.0
    %2284 = vmatpush1.msra.mxu0 0.0
    %2285 = vmatprep.subr.mxu0 0.0
    %2286 = vmatpush1.msra.mxu0 0.0
    %2287 = vmatprep.subr.mxu0 0.0
    %2288 = vmatpush1.msra.mxu0 0.0
    %2289 = vmatprep.subr.mxu0 0.0
    %2290 = vmatpush1.msra.mxu0 0.0
    %2291 = vmatprep.mubr.f32.mxu0 0.0
    %2292 = vmatmul.mubr.f32.gmra.mrb[0].mxu0 %v2150
    %v2293 = vpop.f32.mrb[0].mxu0
    %v2294 = vadd.f32 0.0, %v2293
    %v2295 = vpop.f32.mrb[0].mxu0
    %v2296 = vadd.f32 0.0, %v2295
    %2297 = vmatprep.mubr.f32.mxu0 0.0
    %2298 = vmatmul.mubr.f32.gmra.mrb[0].mxu0 %v2151
    %v2299 = vpop.f32.mrb[0].mxu0
    %v2300 = vadd.f32 0.0, %v2299
    %v2301 = vpop.f32.mrb[0].mxu0
    %v2302 = vadd.f32 0.0, %v2301
    %2303 = vdwg.mxu0
    %2304 = vmatprep.subr.mxu0 %v2166
    %2305 = vmatpush1.msra.mxu0 %v2165
    %2306 = vmatprep.subr.mxu0 %v2170
    %2307 = vmatpush1.msra.mxu0 %v2169
    %2308 = vmatprep.subr.mxu0 %v2174
    %2309 = vmatpush1.msra.mxu0 %v2173
    %2310 = vmatprep.subr.mxu0 %v2178
    %2311 = vmatpush1.msra.mxu0 %v2177
    %2312 = vmatprep.subr.mxu0 %v2182
    %2313 = vmatpush1.msra.mxu0 %v2181
    %2314 = vmatprep.subr.mxu0 %v2186
    %2315 = vmatpush1.msra.mxu0 %v2185
    %2316 = vmatprep.subr.mxu0 %v2190
    %2317 = vmatpush1.msra.mxu0 %v2189
    %2318 = vmatprep.subr.mxu0 %v2194
    %2319 = vmatpush1.msra.mxu0 %v2193
    %2320 = vmatprep.subr.mxu0 %v2198
    %2321 = vmatpush1.msra.mxu0 %v2197
    %2322 = vmatprep.subr.mxu0 %v2202
    %2323 = vmatpush1.msra.mxu0 %v2201
    %2324 = vmatprep.subr.mxu0 %v2206
    %2325 = vmatpush1.msra.mxu0 %v2205
    %2326 = vmatprep.subr.mxu0 %v2210
    %2327 = vmatpush1.msra.mxu0 %v2209
    %2328 = vmatprep.subr.mxu0 %v2214
    %2329 = vmatpush1.msra.mxu0 %v2213
    %2330 = vmatprep.subr.mxu0 %v2218
    %2331 = vmatpush1.msra.mxu0 %v2217
    %2332 = vmatprep.subr.mxu0 %v2222
    %2333 = vmatpush1.msra.mxu0 %v2221
    %2334 = vmatprep.subr.mxu0 %v2226
    %2335 = vmatpush1.msra.mxu0 %v2225
    %2336 = vmatprep.subr.mxu0 0.0
    %2337 = vmatpush1.msra.mxu0 0.0
    %2338 = vmatprep.subr.mxu0 0.0
    %2339 = vmatpush1.msra.mxu0 0.0
    %2340 = vmatprep.subr.mxu0 0.0
    %2341 = vmatpush1.msra.mxu0 0.0
    %2342 = vmatprep.subr.mxu0 0.0
    %2343 = vmatpush1.msra.mxu0 0.0
    %2344 = vmatprep.subr.mxu0 0.0
    %2345 = vmatpush1.msra.mxu0 0.0
    %2346 = vmatprep.subr.mxu0 0.0
    %2347 = vmatpush1.msra.mxu0 0.0
    %2348 = vmatprep.subr.mxu0 0.0
    %2349 = vmatpush1.msra.mxu0 0.0
    %2350 = vmatprep.subr.mxu0 0.0
    %2351 = vmatpush1.msra.mxu0 0.0
    %2352 = vmatprep.subr.mxu0 0.0
    %2353 = vmatpush1.msra.mxu0 0.0
    %2354 = vmatprep.subr.mxu0 0.0
    %2355 = vmatpush1.msra.mxu0 0.0
    %2356 = vmatprep.subr.mxu0 0.0
    %2357 = vmatpush1.msra.mxu0 0.0
    %2358 = vmatprep.subr.mxu0 0.0
    %2359 = vmatpush1.msra.mxu0 0.0
    %2360 = vmatprep.subr.mxu0 0.0
    %2361 = vmatpush1.msra.mxu0 0.0
    %2362 = vmatprep.subr.mxu0 0.0
    %2363 = vmatpush1.msra.mxu0 0.0
    %2364 = vmatprep.subr.mxu0 0.0
    %2365 = vmatpush1.msra.mxu0 0.0
    %2366 = vmatprep.subr.mxu0 0.0
    %2367 = vmatpush1.msra.mxu0 0.0
    %2368 = vmatprep.mubr.f32.mxu0 0.0
    %2369 = vmatmul.mubr.f32.gmra.mrb[0].mxu0 %v2150
    %v2370 = vpop.f32.mrb[0].mxu0
    %v2371 = vadd.f32 0.0, %v2370
    %v2372 = vpop.f32.mrb[0].mxu0
    %v2373 = vadd.f32 0.0, %v2372
    %2374 = vmatprep.mubr.f32.mxu0 0.0
    %2375 = vmatmul.mubr.f32.gmra.mrb[0].mxu0 %v2151
    %v2376 = vpop.f32.mrb[0].mxu0
    %v2377 = vadd.f32 0.0, %v2376
    %v2378 = vpop.f32.mrb[0].mxu0
    %v2379 = vadd.f32 0.0, %v2378
    %2380 = vdwg.mxu0
    %v2381 = vadd.f32 %v2155, %v2294
    %v2382 = vadd.f32 %v2156, %v2296
    %v2383 = vadd.f32 %v2157, %v2371
    %v2384 = vadd.f32 %v2158, %v2373
    %v2385 = vadd.f32 %v2159, %v2300
    %v2386 = vadd.f32 %v2160, %v2302
    %v2387 = vadd.f32 %v2161, %v2377
    %v2388 = vadd.f32 %v2162, %v2379
    %v2389 = vxor.u32 %v2381, 2147483648
    %v2390 = vxor.u32 %v2382, 2147483648
    %v2391 = vxor.u32 %v2383, 2147483648
    %v2392 = vxor.u32 %v2385, 2147483648
    %v2393 = vxor.u32 %v2386, 2147483648
    %v2394 = vxor.u32 %v2387, 2147483648
    %v2395 = vmul.f32 %v2389, 1.442695
    %v2396 = vpow.pop %v2395
    %v2397 = vmul.f32 %v2390, 1.442695
    %v2398 = vpow.pop %v2397
    %v2399 = vmul.f32 %v2391, 1.442695
    %v2400 = vpow.pop %v2399
    %v2401 = vmul.f32 %v2392, 1.442695
    %v2402 = vpow.pop %v2401
    %v2403 = vmul.f32 %v2393, 1.442695
    %v2404 = vpow.pop %v2403
    %v2405 = vmul.f32 %v2394, 1.442695
    %v2406 = vpow.pop %v2405
    %v2407 = vadd.f32 %v2396, 1.0
    %v2408 = vadd.f32 %v2398, 1.0
    %v2409 = vadd.f32 %v2400, 1.0
    %v2410 = vadd.f32 %v2402, 1.0
    %v2411 = vadd.f32 %v2404, 1.0
    %v2412 = vadd.f32 %v2406, 1.0
    %v2413 = vrcp.pop %v2407
    %v2414 = vmul.f32 1.0, %v2413
    %v2415 = vrcp.pop %v2408
    %v2416 = vmul.f32 1.0, %v2415
    %v2417 = vrcp.pop %v2409
    %v2418 = vmul.f32 1.0, %v2417
    %v2419 = vrcp.pop %v2410
    %v2420 = vmul.f32 1.0, %v2419
    %v2421 = vrcp.pop %v2411
    %v2422 = vmul.f32 1.0, %v2421
    %v2423 = vrcp.pop %v2412
    %v2424 = vmul.f32 1.0, %v2423
    %v2425 = vtanh.pop %v2384
    %v2426 = vtanh.pop %v2388
    %v2427 = vmul.f32 %v2416, %v2152
    %v2428 = vmul.f32 %v2422, %v2153
    %v2429 = vmul.f32 %v2414, %v2425
    %v2430 = vmul.f32 %v2420, %v2426
    %v2431 = vadd.f32 %v2427, %v2429
    %v2432 = vadd.f32 %v2428, %v2430
    %v2433 = vtanh.pop %v2431
    %v2434 = vtanh.pop %v2432
    %v2435 = vmul.f32 %v2418, %v2433
    %v2436 = vmul.f32 %v2424, %v2434
    %2437 = vst [vmem:[%s10] sm:$0xff] %v2431
    %2438 = vst [vmem:[%s10 + $0x8] sm:$0xff] %v2432
    %2439 = vst [vmem:[%s9] sm:$0xff] %v2435
    %2440 = vst [vmem:[%s9 + $0x8] sm:$0xff] %v2436
    %s2441 = scalar_lea.vmem [#allocation3], 96
    %2442 = vst [vmem:[%s2441] sm:$0xff] %v2435
    %2443 = vst [vmem:[%s2441 + $0x8] sm:$0xff] %v2436
    %v2444 = vld [vmem:[%s9] sm:$0xff]
    %v2445 = vld [vmem:[%s9 + $0x8] sm:$0xff]
    %v2446 = vld [vmem:[%s10] sm:$0xff]
    %v2447 = vld [vmem:[%s10 + $0x8] sm:$0xff]
    %s2448 = scalar_lea.vmem [#allocation2], 448
    %v2449 = vld [vmem:[%s2448] sm:$0xff]
    %v2450 = vld [vmem:[%s2448 + $0x8] sm:$0xff]
    %v2451 = vld [vmem:[%s2448 + $0x10] sm:$0xff]
    %v2452 = vld [vmem:[%s2448 + $0x18] sm:$0xff]
    %v2453 = vld [vmem:[%s2448 + $0x20] sm:$0xff]
    %v2454 = vld [vmem:[%s2448 + $0x28] sm:$0xff]
    %v2455 = vld [vmem:[%s2448 + $0x30] sm:$0xff]
    %v2456 = vld [vmem:[%s2448 + $0x38] sm:$0xff]
    %v2457 = vld [vmem:[#allocation5] sm:$0xff]
    %v2458 = vld [vmem:[#allocation5 + $0x8] sm:$0xff]
    %v2459 = vld [vmem:[#allocation5 + $0x10] sm:$0xff]
    %v2460 = vld [vmem:[#allocation5 + $0x18] sm:$0xff]
    %v2461 = vld [vmem:[#allocation5 + $0x20] sm:$0xff]
    %v2462 = vld [vmem:[#allocation5 + $0x28] sm:$0xff]
    %v2463 = vld [vmem:[#allocation5 + $0x30] sm:$0xff]
    %v2464 = vld [vmem:[#allocation5 + $0x38] sm:$0xff]
    %v2465 = vld [vmem:[#allocation5 + $0x40] sm:$0xff]
    %v2466 = vld [vmem:[#allocation5 + $0x48] sm:$0xff]
    %v2467 = vld [vmem:[#allocation5 + $0x50] sm:$0xff]
    %v2468 = vld [vmem:[#allocation5 + $0x58] sm:$0xff]
    %v2469 = vld [vmem:[#allocation5 + $0x60] sm:$0xff]
    %v2470 = vld [vmem:[#allocation5 + $0x68] sm:$0xff]
    %v2471 = vld [vmem:[#allocation5 + $0x70] sm:$0xff]
    %v2472 = vld [vmem:[#allocation5 + $0x78] sm:$0xff]
    %v2473 = vld [vmem:[#allocation5 + $0x80] sm:$0xff]
    %v2474 = vld [vmem:[#allocation5 + $0x88] sm:$0xff]
    %v2475 = vld [vmem:[#allocation5 + $0x90] sm:$0xff]
    %v2476 = vld [vmem:[#allocation5 + $0x98] sm:$0xff]
    %v2477 = vld [vmem:[#allocation5 + $0xa0] sm:$0xff]
    %v2478 = vld [vmem:[#allocation5 + $0xa8] sm:$0xff]
    %v2479 = vld [vmem:[#allocation5 + $0xb0] sm:$0xff]
    %v2480 = vld [vmem:[#allocation5 + $0xb8] sm:$0xff]
    %v2481 = vld [vmem:[#allocation5 + $0xc0] sm:$0xff]
    %v2482 = vld [vmem:[#allocation5 + $0xc8] sm:$0xff]
    %v2483 = vld [vmem:[#allocation5 + $0xd0] sm:$0xff]
    %v2484 = vld [vmem:[#allocation5 + $0xd8] sm:$0xff]
    %v2485 = vld [vmem:[#allocation5 + $0xe0] sm:$0xff]
    %v2486 = vld [vmem:[#allocation5 + $0xe8] sm:$0xff]
    %v2487 = vld [vmem:[#allocation5 + $0xf0] sm:$0xff]
    %v2488 = vld [vmem:[#allocation5 + $0xf8] sm:$0xff]
    %v2489 = vld [vmem:[#allocation5 + $0x100] sm:$0xff]
    %v2490 = vld [vmem:[#allocation5 + $0x108] sm:$0xff]
    %v2491 = vld [vmem:[#allocation5 + $0x110] sm:$0xff]
    %v2492 = vld [vmem:[#allocation5 + $0x118] sm:$0xff]
    %v2493 = vld [vmem:[#allocation5 + $0x120] sm:$0xff]
    %v2494 = vld [vmem:[#allocation5 + $0x128] sm:$0xff]
    %v2495 = vld [vmem:[#allocation5 + $0x130] sm:$0xff]
    %v2496 = vld [vmem:[#allocation5 + $0x138] sm:$0xff]
    %v2497 = vld [vmem:[#allocation5 + $0x140] sm:$0xff]
    %v2498 = vld [vmem:[#allocation5 + $0x148] sm:$0xff]
    %v2499 = vld [vmem:[#allocation5 + $0x150] sm:$0xff]
    %v2500 = vld [vmem:[#allocation5 + $0x158] sm:$0xff]
    %v2501 = vld [vmem:[#allocation5 + $0x160] sm:$0xff]
    %v2502 = vld [vmem:[#allocation5 + $0x168] sm:$0xff]
    %v2503 = vld [vmem:[#allocation5 + $0x170] sm:$0xff]
    %v2504 = vld [vmem:[#allocation5 + $0x178] sm:$0xff]
    %v2505 = vld [vmem:[#allocation5 + $0x180] sm:$0xff]
    %v2506 = vld [vmem:[#allocation5 + $0x188] sm:$0xff]
    %v2507 = vld [vmem:[#allocation5 + $0x190] sm:$0xff]
    %v2508 = vld [vmem:[#allocation5 + $0x198] sm:$0xff]
    %v2509 = vld [vmem:[#allocation5 + $0x1a0] sm:$0xff]
    %v2510 = vld [vmem:[#allocation5 + $0x1a8] sm:$0xff]
    %v2511 = vld [vmem:[#allocation5 + $0x1b0] sm:$0xff]
    %v2512 = vld [vmem:[#allocation5 + $0x1b8] sm:$0xff]
    %v2513 = vld [vmem:[#allocation5 + $0x1c0] sm:$0xff]
    %v2514 = vld [vmem:[#allocation5 + $0x1c8] sm:$0xff]
    %v2515 = vld [vmem:[#allocation5 + $0x1d0] sm:$0xff]
    %v2516 = vld [vmem:[#allocation5 + $0x1d8] sm:$0xff]
    %v2517 = vld [vmem:[#allocation5 + $0x1e0] sm:$0xff]
    %v2518 = vld [vmem:[#allocation5 + $0x1e8] sm:$0xff]
    %v2519 = vld [vmem:[#allocation5 + $0x1f0] sm:$0xff]
    %v2520 = vld [vmem:[#allocation5 + $0x1f8] sm:$0xff]
    %2521 = vmatprep.subr.mxu0 %v2458
    %2522 = vmatpush1.msra.mxu0 %v2457
    %2523 = vmatprep.subr.mxu0 %v2462
    %2524 = vmatpush1.msra.mxu0 %v2461
    %2525 = vmatprep.subr.mxu0 %v2466
    %2526 = vmatpush1.msra.mxu0 %v2465
    %2527 = vmatprep.subr.mxu0 %v2470
    %2528 = vmatpush1.msra.mxu0 %v2469
    %2529 = vmatprep.subr.mxu0 %v2474
    %2530 = vmatpush1.msra.mxu0 %v2473
    %2531 = vmatprep.subr.mxu0 %v2478
    %2532 = vmatpush1.msra.mxu0 %v2477
    %2533 = vmatprep.subr.mxu0 %v2482
    %2534 = vmatpush1.msra.mxu0 %v2481
    %2535 = vmatprep.subr.mxu0 %v2486
    %2536 = vmatpush1.msra.mxu0 %v2485
    %2537 = vmatprep.subr.mxu0 %v2490
    %2538 = vmatpush1.msra.mxu0 %v2489
    %2539 = vmatprep.subr.mxu0 %v2494
    %2540 = vmatpush1.msra.mxu0 %v2493
    %2541 = vmatprep.subr.mxu0 %v2498
    %2542 = vmatpush1.msra.mxu0 %v2497
    %2543 = vmatprep.subr.mxu0 %v2502
    %2544 = vmatpush1.msra.mxu0 %v2501
    %2545 = vmatprep.subr.mxu0 %v2506
    %2546 = vmatpush1.msra.mxu0 %v2505
    %2547 = vmatprep.subr.mxu0 %v2510
    %2548 = vmatpush1.msra.mxu0 %v2509
    %2549 = vmatprep.subr.mxu0 %v2514
    %2550 = vmatpush1.msra.mxu0 %v2513
    %2551 = vmatprep.subr.mxu0 %v2518
    %2552 = vmatpush1.msra.mxu0 %v2517
    %2553 = vmatprep.subr.mxu0 0.0
    %2554 = vmatpush1.msra.mxu0 0.0
    %2555 = vmatprep.subr.mxu0 0.0
    %2556 = vmatpush1.msra.mxu0 0.0
    %2557 = vmatprep.subr.mxu0 0.0
    %2558 = vmatpush1.msra.mxu0 0.0
    %2559 = vmatprep.subr.mxu0 0.0
    %2560 = vmatpush1.msra.mxu0 0.0
    %2561 = vmatprep.subr.mxu0 0.0
    %2562 = vmatpush1.msra.mxu0 0.0
    %2563 = vmatprep.subr.mxu0 0.0
    %2564 = vmatpush1.msra.mxu0 0.0
    %2565 = vmatprep.subr.mxu0 0.0
    %2566 = vmatpush1.msra.mxu0 0.0
    %2567 = vmatprep.subr.mxu0 0.0
    %2568 = vmatpush1.msra.mxu0 0.0
    %2569 = vmatprep.subr.mxu0 0.0
    %2570 = vmatpush1.msra.mxu0 0.0
    %2571 = vmatprep.subr.mxu0 0.0
    %2572 = vmatpush1.msra.mxu0 0.0
    %2573 = vmatprep.subr.mxu0 0.0
    %2574 = vmatpush1.msra.mxu0 0.0
    %2575 = vmatprep.subr.mxu0 0.0
    %2576 = vmatpush1.msra.mxu0 0.0
    %2577 = vmatprep.subr.mxu0 0.0
    %2578 = vmatpush1.msra.mxu0 0.0
    %2579 = vmatprep.subr.mxu0 0.0
    %2580 = vmatpush1.msra.mxu0 0.0
    %2581 = vmatprep.subr.mxu0 0.0
    %2582 = vmatpush1.msra.mxu0 0.0
    %2583 = vmatprep.subr.mxu0 0.0
    %2584 = vmatpush1.msra.mxu0 0.0
    %2585 = vmatprep.mubr.f32.mxu0 0.0
    %2586 = vmatmul.mubr.f32.gmra.mrb[0].mxu0 %v2444
    %v2587 = vpop.f32.mrb[0].mxu0
    %v2588 = vadd.f32 0.0, %v2587
    %v2589 = vpop.f32.mrb[0].mxu0
    %v2590 = vadd.f32 0.0, %v2589
    %2591 = vmatprep.mubr.f32.mxu0 0.0
    %2592 = vmatmul.mubr.f32.gmra.mrb[0].mxu0 %v2445
    %v2593 = vpop.f32.mrb[0].mxu0
    %v2594 = vadd.f32 0.0, %v2593
    %v2595 = vpop.f32.mrb[0].mxu0
    %v2596 = vadd.f32 0.0, %v2595
    %2597 = vdwg.mxu0
    %2598 = vmatprep.subr.mxu0 %v2460
    %2599 = vmatpush1.msra.mxu0 %v2459
    %2600 = vmatprep.subr.mxu0 %v2464
    %2601 = vmatpush1.msra.mxu0 %v2463
    %2602 = vmatprep.subr.mxu0 %v2468
    %2603 = vmatpush1.msra.mxu0 %v2467
    %2604 = vmatprep.subr.mxu0 %v2472
    %2605 = vmatpush1.msra.mxu0 %v2471
    %2606 = vmatprep.subr.mxu0 %v2476
    %2607 = vmatpush1.msra.mxu0 %v2475
    %2608 = vmatprep.subr.mxu0 %v2480
    %2609 = vmatpush1.msra.mxu0 %v2479
    %2610 = vmatprep.subr.mxu0 %v2484
    %2611 = vmatpush1.msra.mxu0 %v2483
    %2612 = vmatprep.subr.mxu0 %v2488
    %2613 = vmatpush1.msra.mxu0 %v2487
    %2614 = vmatprep.subr.mxu0 %v2492
    %2615 = vmatpush1.msra.mxu0 %v2491
    %2616 = vmatprep.subr.mxu0 %v2496
    %2617 = vmatpush1.msra.mxu0 %v2495
    %2618 = vmatprep.subr.mxu0 %v2500
    %2619 = vmatpush1.msra.mxu0 %v2499
    %2620 = vmatprep.subr.mxu0 %v2504
    %2621 = vmatpush1.msra.mxu0 %v2503
    %2622 = vmatprep.subr.mxu0 %v2508
    %2623 = vmatpush1.msra.mxu0 %v2507
    %2624 = vmatprep.subr.mxu0 %v2512
    %2625 = vmatpush1.msra.mxu0 %v2511
    %2626 = vmatprep.subr.mxu0 %v2516
    %2627 = vmatpush1.msra.mxu0 %v2515
    %2628 = vmatprep.subr.mxu0 %v2520
    %2629 = vmatpush1.msra.mxu0 %v2519
    %2630 = vmatprep.subr.mxu0 0.0
    %2631 = vmatpush1.msra.mxu0 0.0
    %2632 = vmatprep.subr.mxu0 0.0
    %2633 = vmatpush1.msra.mxu0 0.0
    %2634 = vmatprep.subr.mxu0 0.0
    %2635 = vmatpush1.msra.mxu0 0.0
    %2636 = vmatprep.subr.mxu0 0.0
    %2637 = vmatpush1.msra.mxu0 0.0
    %2638 = vmatprep.subr.mxu0 0.0
    %2639 = vmatpush1.msra.mxu0 0.0
    %2640 = vmatprep.subr.mxu0 0.0
    %2641 = vmatpush1.msra.mxu0 0.0
    %2642 = vmatprep.subr.mxu0 0.0
    %2643 = vmatpush1.msra.mxu0 0.0
    %2644 = vmatprep.subr.mxu0 0.0
    %2645 = vmatpush1.msra.mxu0 0.0
    %2646 = vmatprep.subr.mxu0 0.0
    %2647 = vmatpush1.msra.mxu0 0.0
    %2648 = vmatprep.subr.mxu0 0.0
    %2649 = vmatpush1.msra.mxu0 0.0
    %2650 = vmatprep.subr.mxu0 0.0
    %2651 = vmatpush1.msra.mxu0 0.0
    %2652 = vmatprep.subr.mxu0 0.0
    %2653 = vmatpush1.msra.mxu0 0.0
    %2654 = vmatprep.subr.mxu0 0.0
    %2655 = vmatpush1.msra.mxu0 0.0
    %2656 = vmatprep.subr.mxu0 0.0
    %2657 = vmatpush1.msra.mxu0 0.0
    %2658 = vmatprep.subr.mxu0 0.0
    %2659 = vmatpush1.msra.mxu0 0.0
    %2660 = vmatprep.subr.mxu0 0.0
    %2661 = vmatpush1.msra.mxu0 0.0
    %2662 = vmatprep.mubr.f32.mxu0 0.0
    %2663 = vmatmul.mubr.f32.gmra.mrb[0].mxu0 %v2444
    %v2664 = vpop.f32.mrb[0].mxu0
    %v2665 = vadd.f32 0.0, %v2664
    %v2666 = vpop.f32.mrb[0].mxu0
    %v2667 = vadd.f32 0.0, %v2666
    %2668 = vmatprep.mubr.f32.mxu0 0.0
    %2669 = vmatmul.mubr.f32.gmra.mrb[0].mxu0 %v2445
    %v2670 = vpop.f32.mrb[0].mxu0
    %v2671 = vadd.f32 0.0, %v2670
    %v2672 = vpop.f32.mrb[0].mxu0
    %v2673 = vadd.f32 0.0, %v2672
    %2674 = vdwg.mxu0
    %v2675 = vadd.f32 %v2449, %v2588
    %v2676 = vadd.f32 %v2450, %v2590
    %v2677 = vadd.f32 %v2451, %v2665
    %v2678 = vadd.f32 %v2452, %v2667
    %v2679 = vadd.f32 %v2453, %v2594
    %v2680 = vadd.f32 %v2454, %v2596
    %v2681 = vadd.f32 %v2455, %v2671
    %v2682 = vadd.f32 %v2456, %v2673
    %v2683 = vxor.u32 %v2675, 2147483648
    %v2684 = vxor.u32 %v2676, 2147483648
    %v2685 = vxor.u32 %v2677, 2147483648
    %v2686 = vxor.u32 %v2679, 2147483648
    %v2687 = vxor.u32 %v2680, 2147483648
    %v2688 = vxor.u32 %v2681, 2147483648
    %v2689 = vmul.f32 %v2683, 1.442695
    %v2690 = vpow.pop %v2689
    %v2691 = vmul.f32 %v2684, 1.442695
    %v2692 = vpow.pop %v2691
    %v2693 = vmul.f32 %v2685, 1.442695
    %v2694 = vpow.pop %v2693
    %v2695 = vmul.f32 %v2686, 1.442695
    %v2696 = vpow.pop %v2695
    %v2697 = vmul.f32 %v2687, 1.442695
    %v2698 = vpow.pop %v2697
    %v2699 = vmul.f32 %v2688, 1.442695
    %v2700 = vpow.pop %v2699
    %v2701 = vadd.f32 %v2690, 1.0
    %v2702 = vadd.f32 %v2692, 1.0
    %v2703 = vadd.f32 %v2694, 1.0
    %v2704 = vadd.f32 %v2696, 1.0
    %v2705 = vadd.f32 %v2698, 1.0
    %v2706 = vadd.f32 %v2700, 1.0
    %v2707 = vrcp.pop %v2701
    %v2708 = vmul.f32 1.0, %v2707
    %v2709 = vrcp.pop %v2702
    %v2710 = vmul.f32 1.0, %v2709
    %v2711 = vrcp.pop %v2703
    %v2712 = vmul.f32 1.0, %v2711
    %v2713 = vrcp.pop %v2704
    %v2714 = vmul.f32 1.0, %v2713
    %v2715 = vrcp.pop %v2705
    %v2716 = vmul.f32 1.0, %v2715
    %v2717 = vrcp.pop %v2706
    %v2718 = vmul.f32 1.0, %v2717
    %v2719 = vtanh.pop %v2678
    %v2720 = vtanh.pop %v2682
    %v2721 = vmul.f32 %v2710, %v2446
    %v2722 = vmul.f32 %v2716, %v2447
    %v2723 = vmul.f32 %v2708, %v2719
    %v2724 = vmul.f32 %v2714, %v2720
    %v2725 = vadd.f32 %v2721, %v2723
    %v2726 = vadd.f32 %v2722, %v2724
    %v2727 = vtanh.pop %v2725
    %v2728 = vtanh.pop %v2726
    %v2729 = vmul.f32 %v2712, %v2727
    %v2730 = vmul.f32 %v2718, %v2728
    %2731 = vst [vmem:[%s10] sm:$0xff] %v2725
    %2732 = vst [vmem:[%s10 + $0x8] sm:$0xff] %v2726
    %2733 = vst [vmem:[%s9] sm:$0xff] %v2729
    %2734 = vst [vmem:[%s9 + $0x8] sm:$0xff] %v2730
    %s2735 = scalar_lea.vmem [#allocation3], 112
    %2736 = vst [vmem:[%s2735] sm:$0xff] %v2729
    %2737 = vst [vmem:[%s2735 + $0x8] sm:$0xff] %v2730
    %v2738 = vld [vmem:[#allocation3] sm:$0xff]
    %v2739 = vld [vmem:[#allocation3 + $0x8] sm:$0xff]
    %v2740 = vld [vmem:[#allocation3 + $0x10] sm:$0xff]
    %v2741 = vld [vmem:[#allocation3 + $0x18] sm:$0xff]
    %v2742 = vld [vmem:[#allocation3 + $0x20] sm:$0xff]
    %v2743 = vld [vmem:[#allocation3 + $0x28] sm:$0xff]
    %v2744 = vld [vmem:[#allocation3 + $0x30] sm:$0xff]
    %v2745 = vld [vmem:[#allocation3 + $0x38] sm:$0xff]
    %v2746 = vld [vmem:[#allocation3 + $0x40] sm:$0xff]
    %v2747 = vld [vmem:[#allocation3 + $0x48] sm:$0xff]
    %v2748 = vld [vmem:[#allocation3 + $0x50] sm:$0xff]
    %v2749 = vld [vmem:[#allocation3 + $0x58] sm:$0xff]
    %v2750 = vld [vmem:[#allocation3 + $0x60] sm:$0xff]
    %v2751 = vld [vmem:[#allocation3 + $0x68] sm:$0xff]
    %v2752 = vld [vmem:[#allocation3 + $0x70] sm:$0xff]
    %v2753 = vld [vmem:[#allocation3 + $0x78] sm:$0xff]
    %v2754 = vld [vmem:[%s6] sm:$0x1]
    %v2756 = vlaneseq
    %v2757 = vshrl.u32 %v2756, 7
    %v2758 = vsub.s32 0, %v2757
    %v2759 = vrot.slane %v2754, %v2758
    %v2761 = vmul.f32 %v2738, %v2759
    %v2762 = vmul.f32 %v2739, %v2759
    %v2763 = vmul.f32 %v2740, %v2759
    %v2764 = vmul.f32 %v2741, %v2759
    %v2765 = vmul.f32 %v2742, %v2759
    %v2766 = vmul.f32 %v2743, %v2759
    %v2767 = vmul.f32 %v2744, %v2759
    %v2768 = vmul.f32 %v2745, %v2759
    %v2769 = vmul.f32 %v2746, %v2759
    %v2770 = vmul.f32 %v2747, %v2759
    %v2771 = vmul.f32 %v2748, %v2759
    %v2772 = vmul.f32 %v2749, %v2759
    %v2773 = vmul.f32 %v2750, %v2759
    %v2774 = vmul.f32 %v2751, %v2759
    %v2775 = vmul.f32 %v2752, %v2759
    %v2776 = vmul.f32 %v2753, %v2759
    %2777 = vadd.xlane.f32.xlu0 %v2761
    %v2778 = vpop.xlane.xlu0 %2777
    %2779 = vadd.xlane.f32.xlu0 %v2762
    %v2780 = vpop.xlane.xlu0 %2779
    %2781 = vadd.xlane.f32.xlu0 %v2763
    %v2782 = vpop.xlane.xlu0 %2781
    %2783 = vadd.xlane.f32.xlu0 %v2764
    %v2784 = vpop.xlane.xlu0 %2783
    %2785 = vadd.xlane.f32.xlu0 %v2765
    %v2786 = vpop.xlane.xlu0 %2785
    %2787 = vadd.xlane.f32.xlu0 %v2766
    %v2788 = vpop.xlane.xlu0 %2787
    %2789 = vadd.xlane.f32.xlu0 %v2767
    %v2790 = vpop.xlane.xlu0 %2789
    %2791 = vadd.xlane.f32.xlu0 %v2768
    %v2792 = vpop.xlane.xlu0 %2791
    %2793 = vadd.xlane.f32.xlu0 %v2769
    %v2794 = vpop.xlane.xlu0 %2793
    %2795 = vadd.xlane.f32.xlu0 %v2770
    %v2796 = vpop.xlane.xlu0 %2795
    %2797 = vadd.xlane.f32.xlu0 %v2771
    %v2798 = vpop.xlane.xlu0 %2797
    %2799 = vadd.xlane.f32.xlu0 %v2772
    %v2800 = vpop.xlane.xlu0 %2799
    %2801 = vadd.xlane.f32.xlu0 %v2773
    %v2802 = vpop.xlane.xlu0 %2801
    %2803 = vadd.xlane.f32.xlu0 %v2774
    %v2804 = vpop.xlane.xlu0 %2803
    %2805 = vadd.xlane.f32.xlu0 %v2775
    %v2806 = vpop.xlane.xlu0 %2805
    %2807 = vadd.xlane.f32.xlu0 %v2776
    %v2808 = vpop.xlane.xlu0 %2807
    %v2809 = vld [vmem:[#allocation4] sm:$0x1]
    %v2811 = vlaneseq
    %v2812 = vshrl.u32 %v2811, 7
    %v2813 = vsub.s32 0, %v2812
    %v2814 = vrot.slane %v2809, %v2813
    %v2816 = vadd.f32 %v2778, %v2814
    %v2817 = vadd.f32 %v2780, %v2814
    %v2818 = vadd.f32 %v2782, %v2814
    %v2819 = vadd.f32 %v2784, %v2814
    %v2820 = vadd.f32 %v2786, %v2814
    %v2821 = vadd.f32 %v2788, %v2814
    %v2822 = vadd.f32 %v2790, %v2814
    %v2823 = vadd.f32 %v2792, %v2814
    %v2824 = vadd.f32 %v2794, %v2814
    %v2825 = vadd.f32 %v2796, %v2814
    %v2826 = vadd.f32 %v2798, %v2814
    %v2827 = vadd.f32 %v2800, %v2814
    %v2828 = vadd.f32 %v2802, %v2814
    %v2829 = vadd.f32 %v2804, %v2814
    %v2830 = vadd.f32 %v2806, %v2814
    %v2831 = vadd.f32 %v2808, %v2814
    %v2832 = vtanh.pop %v2816
    %v2833 = vtanh.pop %v2817
    %v2834 = vtanh.pop %v2818
    %v2835 = vtanh.pop %v2819
    %v2836 = vtanh.pop %v2820
    %v2837 = vtanh.pop %v2821
    %v2838 = vtanh.pop %v2822
    %v2839 = vtanh.pop %v2823
    %v2840 = vtanh.pop %v2824
    %v2841 = vtanh.pop %v2825
    %v2842 = vtanh.pop %v2826
    %v2843 = vtanh.pop %v2827
    %v2844 = vtanh.pop %v2828
    %v2845 = vtanh.pop %v2829
    %v2846 = vtanh.pop %v2830
    %v2847 = vtanh.pop %v2831
    %vm2848 = vcmask 7168
    %2849 = vst.msk [vmem:[%s8] sm:$0xff] %vm2848, %v2832
    %2850 = vst.msk [vmem:[%s8 + $0x8] sm:$0xff] %vm2848, %v2833
    %2851 = vst.msk [vmem:[%s8 + $0x10] sm:$0xff] %vm2848, %v2834
    %2852 = vst.msk [vmem:[%s8 + $0x18] sm:$0xff] %vm2848, %v2835
    %2853 = vst.msk [vmem:[%s8 + $0x20] sm:$0xff] %vm2848, %v2836
    %2854 = vst.msk [vmem:[%s8 + $0x28] sm:$0xff] %vm2848, %v2837
    %2855 = vst.msk [vmem:[%s8 + $0x30] sm:$0xff] %vm2848, %v2838
    %2856 = vst.msk [vmem:[%s8 + $0x38] sm:$0xff] %vm2848, %v2839
    %2857 = vst.msk [vmem:[%s8 + $0x40] sm:$0xff] %vm2848, %v2840
    %2858 = vst.msk [vmem:[%s8 + $0x48] sm:$0xff] %vm2848, %v2841
    %2859 = vst.msk [vmem:[%s8 + $0x50] sm:$0xff] %vm2848, %v2842
    %2860 = vst.msk [vmem:[%s8 + $0x58] sm:$0xff] %vm2848, %v2843
    %2861 = vst.msk [vmem:[%s8 + $0x60] sm:$0xff] %vm2848, %v2844
    %2862 = vst.msk [vmem:[%s8 + $0x68] sm:$0xff] %vm2848, %v2845
    %2863 = vst.msk [vmem:[%s8 + $0x70] sm:$0xff] %vm2848, %v2846
    %2864 = vst.msk [vmem:[%s8 + $0x78] sm:$0xff] %vm2848, %v2847
    // Predicated region
    $region38: #{simple_rnn_forward.1} parent=1 // pred_check
      _
    $region39: #{simple_rnn_forward.1} parent=1 // pred_check_branch
      %2866 = sbr.rel (0) target = $region41
    $region40: #{simple_rnn_forward.1} parent=1 // pred_region
      _
    $region41: #{simple_rnn_forward.1} parent=1 // pred_fallthru
      _
    // Predicated region
    $region42: #{simple_rnn_forward.1} parent=1 // pred_check
      _
    $region43: #{simple_rnn_forward.1} parent=1 // pred_check_branch
      %2868 = sbr.rel (0) target = $region45
    $region44: #{simple_rnn_forward.1} parent=1 // pred_region
      _
    $region45: #{simple_rnn_forward.1} parent=1 // pred_fallthru
      _
    // Predicated region
    $region46: #{simple_rnn_forward.1} parent=1 // pred_check
      _
    $region47: #{simple_rnn_forward.1} parent=1 // pred_check_branch
      %2870 = sbr.rel (0) target = $region49
    $region48: #{simple_rnn_forward.1} parent=1 // pred_region
      _
    $region49: #{simple_rnn_forward.1} parent=1 // pred_fallthru
      _
    // Predicated region
    $region50: #{simple_rnn_forward.1} parent=1 // pred_check
      _
    $region51: #{simple_rnn_forward.1} parent=1 // pred_check_branch
      %2872 = sbr.rel (0) target = $region53
    $region52: #{simple_rnn_forward.1} parent=1 // pred_region
      _
    $region53: #{simple_rnn_forward.1} parent=1 // pred_fallthru
      _
    // Predicated region
    $region54: #{simple_rnn_forward.1} parent=1 // pred_check
      _
    $region55: #{simple_rnn_forward.1} parent=1 // pred_check_branch
      %2874 = sbr.rel (0) target = $region57
    $region56: #{simple_rnn_forward.1} parent=1 // pred_region
      _
    $region57: #{simple_rnn_forward.1} parent=1 // pred_fallthru
      _
    // Predicated region
    $region58: #{simple_rnn_forward.1} parent=1 // pred_check
      _
    $region59: #{simple_rnn_forward.1} parent=1 // pred_check_branch
      %2876 = sbr.rel (0) target = $region61
    $region60: #{simple_rnn_forward.1} parent=1 // pred_region
      _
    $region61: #{simple_rnn_forward.1} parent=1 // pred_fallthru
      _
    %2877 = vsyncpa [#allocation6], 1

</llo_original>
